<compile_context>
chip_gen: v5e
topology: v5e:2x2
jax: 0.10.0
libtpu: 0.0.40
codegen_flags: <defaults>
</compile_context>

<pallas_src>
import jax
import jax.numpy as jnp
import numpy as np
from jax import lax
from jax.experimental import pallas as pl
from jax.experimental.pallas import tpu as pltpu

L = 100      # input_size == hidden_size == 100 (fixed by the module)
HP = 128     # padded hidden / lane width
G = 4 * HP   # fused gate width (i | f | g | o), each HP wide


# ----------------------------------------------------------------------------
# Kernel: both LSTM directions, interleaved, with fused pairwise softmax.
# ----------------------------------------------------------------------------
def lstm_kernel(xproj_ref, whh_ref, y_ref):
    """xproj_ref: (2, T, B, 4*HP)  hoisted x @ W_ih^T + b, gate-major, HP-padded
       whh_ref:   (2, HP, 4*HP)    transposed / zero-padded recurrent weights
       y_ref:     (2, T, B, HP)    per-direction pairwise-softmax output"""
    _, T, B, _ = xproj_ref.shape

    # Loop-invariant pairing mask, hoisted out of the time loop.
    lane = lax.broadcasted_iota(jnp.int32, (B, HP), 1)
    is_even = (lane % 2) == 0

    # Static ref views of the per-direction recurrent weights; the actual VMEM
    # loads happen inside each step, feeding the MXU directly (low vreg
    # pressure in the fully-unrolled body).
    whh_f = whh_ref.at[0]
    whh_b = whh_ref.at[1]

    def gate_step(xg, h_prev, c_prev, whh_view):
        # One fused (B, HP) @ (HP, 4*HP) MXU dot for all four gates [i|f|g|o].
        gates = xg + jnp.dot(h_prev, whh_view[...],
                             preferred_element_type=jnp.float32)
        i_g = jax.nn.sigmoid(gates[:, 0 * HP:1 * HP])
        f_g = jax.nn.sigmoid(gates[:, 1 * HP:2 * HP])
        g_g = jnp.tanh(gates[:, 2 * HP:3 * HP])
        o_g = jax.nn.sigmoid(gates[:, 3 * HP:4 * HP])
        c_new = f_g * c_prev + i_g * g_g
        h_new = o_g * jnp.tanh(c_new)
        return h_new, c_new

    def pair_softmax(h):
        # softmax([a, b]) = [sigmoid(a-b), sigmoid(b-a)]; pairs are adjacent
        # lanes (2p, 2p+1).  Padded lanes 100..127 stay exactly 0 through the
        # recurrence (zero-padded gate pre-activations => c = h = 0 there), so
        # the roll wraparound never contaminates real lanes; padding is sliced
        # off in the wrapper.  NOTE: relies on pltpu.roll(h, HP-1, 1) meaning
        # "lane i <- h[i+1]" (validated against the pure-JAX reference).
        nxt = pltpu.roll(h, HP - 1, 1)   # lane i <- h[i+1]
        prv = pltpu.roll(h, 1, 1)        # lane i <- h[i-1]
        partner = jnp.where(is_even, nxt, prv)
        return jax.nn.sigmoid(h - partner)

    def step(t, carry):
        h_f, c_f, h_b, c_b = carry
        tb = T - 1 - t
        # Forward and backward steps are independent -> interleaved so one
        # direction's MXU/EUP latency bubbles are filled by the other.
        h_f, c_f = gate_step(xproj_ref[0, t], h_f, c_f, whh_f)
        h_b, c_b = gate_step(xproj_ref[1, tb], h_b, c_b, whh_b)
        y_ref[0, pl.ds(t, 1)] = pair_softmax(h_f)[None]
        y_ref[1, pl.ds(tb, 1)] = pair_softmax(h_b)[None]
        return (h_f, c_f, h_b, c_b)

    z = jnp.zeros((B, HP), jnp.float32)
    # Fully unrolled: small fixed T -> no loop overhead, full LLO visibility.
    lax.fori_loop(0, T, step, (z, z, z, z), unroll=True)


# ----------------------------------------------------------------------------
# Wrapper: fused prologue GEMM + weight fusion/padding + single pallas_call.
# ----------------------------------------------------------------------------
@jax.jit
def mask_rnn_forward(x, w_ih, w_hh, b):
    """x: (T, B, L); w_ih: (2,4,H,L); w_hh: (2,4,H,H); b = b_ih + b_hh: (2,4,H)."""
    T, B, _ = x.shape
    H = w_hh.shape[-1]
    f32 = jnp.float32
    hi = jax.lax.Precision.HIGHEST

    # Hoisted input projection: ONE fused GEMM for both directions and all four
    # gates (bias folded in), then each H-wide gate slot zero-padded to HP.
    # TODO(synk): for inference-style use, precompute the weight prep once
    # outside the per-call jit and pass the fused arrays in.
    w_ih_flat = w_ih.reshape(2, 4 * H, w_ih.shape[-1])             # (2, 4H, L)
    xg = jnp.einsum("tbl,dgl->dtbg", x, w_ih_flat, precision=hi)   # (2, T, B, 4H)
    xg = xg + b.reshape(2, 1, 1, 4 * H)
    xproj = jnp.pad(xg.reshape(2, T, B, 4, H),
                    ((0, 0), (0, 0), (0, 0), (0, 0), (0, HP - H)))
    xproj = xproj.reshape(2, T, B, G).astype(f32)                  # (2, T, B, 4*HP)

    # Fused, transposed, zero-padded recurrent weights, gate-major columns:
    #   whh_p[d, i, k*HP + j] = W_hh[d, k, j, i]   (zeros in padded rows/cols,
    #   which keeps padded h/c lanes exactly 0 through the recurrence).
    whh_t = jnp.transpose(w_hh, (0, 1, 3, 2))                      # (2, 4, H, H)
    whh_t = jnp.pad(whh_t, ((0, 0), (0, 0), (0, HP - H), (0, HP - H)))
    whh_p = jnp.transpose(whh_t, (0, 2, 1, 3)).reshape(2, HP, G).astype(f32)

    # Single kernel invocation (no grid): whole xproj / whh / output slabs are
    # VMEM-resident (tiny at these sizes); no per-step pipeline overhead.
    y_pad = pl.pallas_call(
        lstm_kernel,
        out_shape=jax.ShapeDtypeStruct((2, T, B, HP), f32),
    )(xproj, whh_p)

    # Glue: drop lane padding, concat fwd/bwd, then pair adjacent features
    # exactly like h.view(T, -1, 2) in PyTorch (H even -> pairs never cross
    # the direction boundary).
    y_cat = jnp.concatenate([y_pad[0, :, :, :H], y_pad[1, :, :, :H]], axis=-1)
    return y_cat.reshape(T, B * H, 2)


# ----------------------------------------------------------------------------
# Pure-JAX reference (mirrors torch.nn.LSTM bidirectional + F.softmax).
# ----------------------------------------------------------------------------
def mask_rnn_reference(x, w_ih, w_hh, b):
    T, B, _ = x.shape
    H = w_hh.shape[-1]

    def run_dir(d, xs):
        h = jnp.zeros((B, H), jnp.float32)
        c = jnp.zeros((B, H), jnp.float32)
        outs = []
        for t in range(xs.shape[0]):
            xt = xs[t]
            g = [xt @ w_ih[d, k].T + h @ w_hh[d, k].T + b[d, k] for k in range(4)]
            i_g = jax.nn.sigmoid(g[0])
            f_g = jax.nn.sigmoid(g[1])
            g_g = jnp.tanh(g[2])
            o_g = jax.nn.sigmoid(g[3])
            c = f_g * c + i_g * g_g
            h = o_g * jnp.tanh(c)
            outs.append(h)
        return jnp.stack(outs)

    h_f = run_dir(0, x)
    h_b = run_dir(1, x[::-1])[::-1]
    h_cat = jnp.concatenate([h_f, h_b], axis=-1)   # (T, B, 2H)
    return jax.nn.softmax(h_cat.reshape(T, -1, 2), axis=2)


if __name__ == "__main__":
    T, B, H = 8, 2, L   # small seq/batch; feature dims fixed by the module

    key = jax.random.PRNGKey(0)
    k_x, k_wih, k_whh, k_bih, k_bhh = jax.random.split(key, 5)

    bound = 1.0 / np.sqrt(H)   # PyTorch LSTM default init: U(-1/sqrt(H), 1/sqrt(H))
    w_ih = jax.random.uniform(k_wih, (2, 4, H, L), jnp.float32, -bound, bound)
    w_hh = jax.random.uniform(k_whh, (2, 4, H, H), jnp.float32, -bound, bound)
    b_ih = jax.random.uniform(k_bih, (2, 4, H), jnp.float32, -bound, bound)
    b_hh = jax.random.uniform(k_bhh, (2, 4, H), jnp.float32, -bound, bound)
    b = b_ih + b_hh            # PyTorch adds both biases

    x = jax.random.normal(k_x, (T, B, L), jnp.float32)

    y = jax.block_until_ready(mask_rnn_forward(x, w_ih, w_hh, b))
    y_ref = mask_rnn_reference(x, w_ih, w_hh, b)

    assert y.shape == (T, B * H, 2), y.shape
    err = float(jnp.max(jnp.abs(y - y_ref)))
    assert np.isfinite(err) and err < 1e-4, f"max abs err {err}"

    print("KERNEL_OK")
</pallas_src>

<mosaic_0001>
module attributes {stable_mosaic.version = 11 : i64} {
  func.func @lstm_kernel(%arg0: memref<2x8x2x512xf32, #tpu.memory_space<vmem>>, %arg1: memref<2x128x512xf32, #tpu.memory_space<vmem>>, %arg2: memref<2x8x2x128xf32, #tpu.memory_space<vmem>>) attributes {dimension_semantics = [], scalar_prefetch = 0 : i64, scratch_operands = 0 : i64, tpu.core_type = #tpu.core_type<tc>} {
    %0 = tpu.iota {dimensions = array<i32: 1>} : vector<2x128xi32>
    %c2_i32 = arith.constant 2 : i32
    %c0_i32 = arith.constant 0 : i32
    %1 = arith.cmpi eq, %c2_i32, %c0_i32 : i32
    %c1_i32 = arith.constant 1 : i32
    %2 = arith.select %1, %c1_i32, %c2_i32 : i32
    %3 = vector.broadcast %2 : i32 to vector<2x128xi32>
    %4 = arith.remsi %0, %3 : vector<2x128xi32>
    %c0_i32_0 = arith.constant 0 : i32
    %5 = vector.broadcast %c0_i32_0 : i32 to vector<2x128xi32>
    %6 = arith.cmpi ne, %4, %5 : vector<2x128xi32>
    %c0_i32_1 = arith.constant 0 : i32
    %7 = vector.broadcast %c0_i32_1 : i32 to vector<2x128xi32>
    %8 = arith.cmpi slt, %4, %7 : vector<2x128xi32>
    %c0_i32_2 = arith.constant 0 : i32
    %9 = arith.cmpi slt, %2, %c0_i32_2 : i32
    %10 = vector.broadcast %9 : i1 to vector<2x128xi1>
    %11 = vector.broadcast %10 : vector<2x128xi1> to vector<2x128xi1>
    %12 = arith.xori %8, %11 : vector<2x128xi1>
    %13 = arith.andi %12, %6 : vector<2x128xi1>
    %14 = vector.broadcast %2 : i32 to vector<2x128xi32>
    %15 = arith.addi %4, %14 : vector<2x128xi32>
    %16 = arith.select %13, %15, %4 : vector<2x128xi1>, vector<2x128xi32>
    %c0_i32_3 = arith.constant 0 : i32
    %17 = vector.broadcast %c0_i32_3 : i32 to vector<2x128xi32>
    %18 = arith.cmpi eq, %16, %17 : vector<2x128xi32>
    %cst = arith.constant 0.000000e+00 : f32
    %19 = vector.broadcast %cst : f32 to vector<2x128xf32>
    %c0_i32_4 = arith.constant 0 : i32
    %c1_i32_5 = arith.constant 1 : i32
    %c0_i32_6 = arith.constant 0 : i32
    %c7_i32 = arith.constant 7 : i32
    %20 = arith.subi %c7_i32, %c0_i32_6 : i32
    %c0 = arith.constant 0 : index
    %21 = arith.index_cast %c0_i32_6 : i32 to index
    %c0_7 = arith.constant 0 : index
    %c0_8 = arith.constant 0 : index
    %22 = vector.load %arg0[%c0, %21, %c0_7, %c0_8] : memref<2x8x2x512xf32, #tpu.memory_space<vmem>>, vector<1x1x2x512xf32>
    %23 = vector.shape_cast %22 : vector<1x1x2x512xf32> to vector<2x512xf32>
    %24 = arith.index_cast %c0_i32_4 : i32 to index
    %c0_9 = arith.constant 0 : index
    %c0_10 = arith.constant 0 : index
    %25 = vector.load %arg1[%24, %c0_9, %c0_10] : memref<2x128x512xf32, #tpu.memory_space<vmem>>, vector<1x128x512xf32>
    %26 = vector.shape_cast %25 : vector<1x128x512xf32> to vector<128x512xf32>
    %cst_11 = arith.constant dense<0.000000e+00> : vector<2x512xf32>
    %27 = tpu.matmul %19, %26, %cst_11 {dimension_numbers = #tpu.dot_dimension_numbers<[1], [0], [0], [1], [0, 0, 1, 1], [], []>} : vector<2x128xf32>, vector<128x512xf32>, vector<2x512xf32> -> vector<2x512xf32>
    %28 = arith.addf %23, %27 : vector<2x512xf32>
    %29 = vector.extract_strided_slice %28 {offsets = [0, 0], sizes = [2, 128], strides = [1, 1]} : vector<2x512xf32> to vector<2x128xf32>
    %30 = arith.negf %29 : vector<2x128xf32>
    %31 = math.exp %30 : vector<2x128xf32>
    %cst_12 = arith.constant 1.000000e+00 : f32
    %32 = vector.broadcast %cst_12 : f32 to vector<2x128xf32>
    %33 = arith.addf %32, %31 : vector<2x128xf32>
    %34 = arith.divf %32, %33 : vector<2x128xf32>
    %35 = vector.extract_strided_slice %28 {offsets = [0, 128], sizes = [2, 128], strides = [1, 1]} : vector<2x512xf32> to vector<2x128xf32>
    %36 = arith.negf %35 : vector<2x128xf32>
    %37 = math.exp %36 : vector<2x128xf32>
    %cst_13 = arith.constant 1.000000e+00 : f32
    %38 = vector.broadcast %cst_13 : f32 to vector<2x128xf32>
    %39 = arith.addf %38, %37 : vector<2x128xf32>
    %40 = arith.divf %38, %39 : vector<2x128xf32>
    %41 = vector.extract_strided_slice %28 {offsets = [0, 256], sizes = [2, 128], strides = [1, 1]} : vector<2x512xf32> to vector<2x128xf32>
    %42 = math.tanh %41 : vector<2x128xf32>
    %43 = vector.extract_strided_slice %28 {offsets = [0, 384], sizes = [2, 128], strides = [1, 1]} : vector<2x512xf32> to vector<2x128xf32>
    %44 = arith.negf %43 : vector<2x128xf32>
    %45 = math.exp %44 : vector<2x128xf32>
    %cst_14 = arith.constant 1.000000e+00 : f32
    %46 = vector.broadcast %cst_14 : f32 to vector<2x128xf32>
    %47 = arith.addf %46, %45 : vector<2x128xf32>
    %48 = arith.divf %46, %47 : vector<2x128xf32>
    %49 = arith.mulf %40, %19 : vector<2x128xf32>
    %50 = arith.mulf %34, %42 : vector<2x128xf32>
    %51 = arith.addf %49, %50 : vector<2x128xf32>
    %52 = math.tanh %51 : vector<2x128xf32>
    %53 = arith.mulf %48, %52 : vector<2x128xf32>
    %c1 = arith.constant 1 : index
    %54 = arith.index_cast %20 : i32 to index
    %c0_15 = arith.constant 0 : index
    %c0_16 = arith.constant 0 : index
    %55 = vector.load %arg0[%c1, %54, %c0_15, %c0_16] : memref<2x8x2x512xf32, #tpu.memory_space<vmem>>, vector<1x1x2x512xf32>
    %56 = vector.shape_cast %55 : vector<1x1x2x512xf32> to vector<2x512xf32>
    %57 = arith.index_cast %c1_i32_5 : i32 to index
    %c0_17 = arith.constant 0 : index
    %c0_18 = arith.constant 0 : index
    %58 = vector.load %arg1[%57, %c0_17, %c0_18] : memref<2x128x512xf32, #tpu.memory_space<vmem>>, vector<1x128x512xf32>
    %59 = vector.shape_cast %58 : vector<1x128x512xf32> to vector<128x512xf32>
    %cst_19 = arith.constant dense<0.000000e+00> : vector<2x512xf32>
    %60 = tpu.matmul %19, %59, %cst_19 {dimension_numbers = #tpu.dot_dimension_numbers<[1], [0], [0], [1], [0, 0, 1, 1], [], []>} : vector<2x128xf32>, vector<128x512xf32>, vector<2x512xf32> -> vector<2x512xf32>
    %61 = arith.addf %56, %60 : vector<2x512xf32>
    %62 = vector.extract_strided_slice %61 {offsets = [0, 0], sizes = [2, 128], strides = [1, 1]} : vector<2x512xf32> to vector<2x128xf32>
    %63 = arith.negf %62 : vector<2x128xf32>
    %64 = math.exp %63 : vector<2x128xf32>
    %cst_20 = arith.constant 1.000000e+00 : f32
    %65 = vector.broadcast %cst_20 : f32 to vector<2x128xf32>
    %66 = arith.addf %65, %64 : vector<2x128xf32>
    %67 = arith.divf %65, %66 : vector<2x128xf32>
    %68 = vector.extract_strided_slice %61 {offsets = [0, 128], sizes = [2, 128], strides = [1, 1]} : vector<2x512xf32> to vector<2x128xf32>
    %69 = arith.negf %68 : vector<2x128xf32>
    %70 = math.exp %69 : vector<2x128xf32>
    %cst_21 = arith.constant 1.000000e+00 : f32
    %71 = vector.broadcast %cst_21 : f32 to vector<2x128xf32>
    %72 = arith.addf %71, %70 : vector<2x128xf32>
    %73 = arith.divf %71, %72 : vector<2x128xf32>
    %74 = vector.extract_strided_slice %61 {offsets = [0, 256], sizes = [2, 128], strides = [1, 1]} : vector<2x512xf32> to vector<2x128xf32>
    %75 = math.tanh %74 : vector<2x128xf32>
    %76 = vector.extract_strided_slice %61 {offsets = [0, 384], sizes = [2, 128], strides = [1, 1]} : vector<2x512xf32> to vector<2x128xf32>
    %77 = arith.negf %76 : vector<2x128xf32>
    %78 = math.exp %77 : vector<2x128xf32>
    %cst_22 = arith.constant 1.000000e+00 : f32
    %79 = vector.broadcast %cst_22 : f32 to vector<2x128xf32>
    %80 = arith.addf %79, %78 : vector<2x128xf32>
    %81 = arith.divf %79, %80 : vector<2x128xf32>
    %82 = arith.mulf %73, %19 : vector<2x128xf32>
    %83 = arith.mulf %67, %75 : vector<2x128xf32>
    %84 = arith.addf %82, %83 : vector<2x128xf32>
    %85 = math.tanh %84 : vector<2x128xf32>
    %86 = arith.mulf %81, %85 : vector<2x128xf32>
    %c127_i32 = arith.constant 127 : i32
    %87 = tpu.dynamic_rotate %53 by %c127_i32 dim 1 : vector<2x128xf32>, i32 -> vector<2x128xf32>
    %c1_i32_23 = arith.constant 1 : i32
    %88 = tpu.dynamic_rotate %53 by %c1_i32_23 dim 1 : vector<2x128xf32>, i32 -> vector<2x128xf32>
    %89 = arith.select %18, %87, %88 : vector<2x128xi1>, vector<2x128xf32>
    %90 = arith.subf %53, %89 : vector<2x128xf32>
    %91 = arith.negf %90 : vector<2x128xf32>
    %92 = math.exp %91 : vector<2x128xf32>
    %cst_24 = arith.constant 1.000000e+00 : f32
    %93 = vector.broadcast %cst_24 : f32 to vector<2x128xf32>
    %94 = arith.addf %93, %92 : vector<2x128xf32>
    %95 = arith.divf %93, %94 : vector<2x128xf32>
    %96 = vector.shape_cast %95 : vector<2x128xf32> to vector<1x2x128xf32>
    %c0_25 = arith.constant 0 : index
    %97 = arith.index_cast %c0_i32_6 : i32 to index
    %c0_26 = arith.constant 0 : index
    %c0_27 = arith.constant 0 : index
    %98 = vector.load %arg2[%c0_25, %97, %c0_26, %c0_27] : memref<2x8x2x128xf32, #tpu.memory_space<vmem>>, vector<1x1x2x128xf32>
    %99 = vector.shape_cast %98 : vector<1x1x2x128xf32> to vector<1x2x128xf32>
    %100 = vector.shape_cast %96 : vector<1x2x128xf32> to vector<1x1x2x128xf32>
    tpu.vector_store %arg2[%c0_25, %97, %c0_26, %c0_27], %100 {strides = array<i32>} : memref<2x8x2x128xf32, #tpu.memory_space<vmem>>, vector<1x1x2x128xf32>,
    %c127_i32_28 = arith.constant 127 : i32
    %101 = tpu.dynamic_rotate %86 by %c127_i32_28 dim 1 : vector<2x128xf32>, i32 -> vector<2x128xf32>
    %c1_i32_29 = arith.constant 1 : i32
    %102 = tpu.dynamic_rotate %86 by %c1_i32_29 dim 1 : vector<2x128xf32>, i32 -> vector<2x128xf32>
    %103 = arith.select %18, %101, %102 : vector<2x128xi1>, vector<2x128xf32>
    %104 = arith.subf %86, %103 : vector<2x128xf32>
    %105 = arith.negf %104 : vector<2x128xf32>
    %106 = math.exp %105 : vector<2x128xf32>
    %cst_30 = arith.constant 1.000000e+00 : f32
    %107 = vector.broadcast %cst_30 : f32 to vector<2x128xf32>
    %108 = arith.addf %107, %106 : vector<2x128xf32>
    %109 = arith.divf %107, %108 : vector<2x128xf32>
    %110 = vector.shape_cast %109 : vector<2x128xf32> to vector<1x2x128xf32>
    %c1_31 = arith.constant 1 : index
    %111 = arith.index_cast %20 : i32 to index
    %c0_32 = arith.constant 0 : index
    %c0_33 = arith.constant 0 : index
    %112 = vector.load %arg2[%c1_31, %111, %c0_32, %c0_33] : memref<2x8x2x128xf32, #tpu.memory_space<vmem>>, vector<1x1x2x128xf32>
    %113 = vector.shape_cast %112 : vector<1x1x2x128xf32> to vector<1x2x128xf32>
    %114 = vector.shape_cast %110 : vector<1x2x128xf32> to vector<1x1x2x128xf32>
    tpu.vector_store %arg2[%c1_31, %111, %c0_32, %c0_33], %114 {strides = array<i32>} : memref<2x8x2x128xf32, #tpu.memory_space<vmem>>, vector<1x1x2x128xf32>,
    %c1_i32_34 = arith.constant 1 : i32
    %c7_i32_35 = arith.constant 7 : i32
    %115 = arith.subi %c7_i32_35, %c1_i32_34 : i32
    %c0_36 = arith.constant 0 : index
    %116 = arith.index_cast %c1_i32_34 : i32 to index
    %c0_37 = arith.constant 0 : index
    %c0_38 = arith.constant 0 : index
    %117 = vector.load %arg0[%c0_36, %116, %c0_37, %c0_38] : memref<2x8x2x512xf32, #tpu.memory_space<vmem>>, vector<1x1x2x512xf32>
    %118 = vector.shape_cast %117 : vector<1x1x2x512xf32> to vector<2x512xf32>
    %119 = arith.index_cast %c0_i32_4 : i32 to index
    %c0_39 = arith.constant 0 : index
    %c0_40 = arith.constant 0 : index
    %120 = vector.load %arg1[%119, %c0_39, %c0_40] : memref<2x128x512xf32, #tpu.memory_space<vmem>>, vector<1x128x512xf32>
    %121 = vector.shape_cast %120 : vector<1x128x512xf32> to vector<128x512xf32>
    %cst_41 = arith.constant dense<0.000000e+00> : vector<2x512xf32>
    %122 = tpu.matmul %53, %121, %cst_41 {dimension_numbers = #tpu.dot_dimension_numbers<[1], [0], [0], [1], [0, 0, 1, 1], [], []>} : vector<2x128xf32>, vector<128x512xf32>, vector<2x512xf32> -> vector<2x512xf32>
    %123 = arith.addf %118, %122 : vector<2x512xf32>
    %124 = vector.extract_strided_slice %123 {offsets = [0, 0], sizes = [2, 128], strides = [1, 1]} : vector<2x512xf32> to vector<2x128xf32>
    %125 = arith.negf %124 : vector<2x128xf32>
    %126 = math.exp %125 : vector<2x128xf32>
    %cst_42 = arith.constant 1.000000e+00 : f32
    %127 = vector.broadcast %cst_42 : f32 to vector<2x128xf32>
    %128 = arith.addf %127, %126 : vector<2x128xf32>
    %129 = arith.divf %127, %128 : vector<2x128xf32>
    %130 = vector.extract_strided_slice %123 {offsets = [0, 128], sizes = [2, 128], strides = [1, 1]} : vector<2x512xf32> to vector<2x128xf32>
    %131 = arith.negf %130 : vector<2x128xf32>
    %132 = math.exp %131 : vector<2x128xf32>
    %cst_43 = arith.constant 1.000000e+00 : f32
    %133 = vector.broadcast %cst_43 : f32 to vector<2x128xf32>
    %134 = arith.addf %133, %132 : vector<2x128xf32>
    %135 = arith.divf %133, %134 : vector<2x128xf32>
    %136 = vector.extract_strided_slice %123 {offsets = [0, 256], sizes = [2, 128], strides = [1, 1]} : vector<2x512xf32> to vector<2x128xf32>
    %137 = math.tanh %136 : vector<2x128xf32>
    %138 = vector.extract_strided_slice %123 {offsets = [0, 384], sizes = [2, 128], strides = [1, 1]} : vector<2x512xf32> to vector<2x128xf32>
    %139 = arith.negf %138 : vector<2x128xf32>
    %140 = math.exp %139 : vector<2x128xf32>
    %cst_44 = arith.constant 1.000000e+00 : f32
    %141 = vector.broadcast %cst_44 : f32 to vector<2x128xf32>
    %142 = arith.addf %141, %140 : vector<2x128xf32>
    %143 = arith.divf %141, %142 : vector<2x128xf32>
    %144 = arith.mulf %135, %51 : vector<2x128xf32>
    %145 = arith.mulf %129, %137 : vector<2x128xf32>
    %146 = arith.addf %144, %145 : vector<2x128xf32>
    %147 = math.tanh %146 : vector<2x128xf32>
    %148 = arith.mulf %143, %147 : vector<2x128xf32>
    %c1_45 = arith.constant 1 : index
    %149 = arith.index_cast %115 : i32 to index
    %c0_46 = arith.constant 0 : index
    %c0_47 = arith.constant 0 : index
    %150 = vector.load %arg0[%c1_45, %149, %c0_46, %c0_47] : memref<2x8x2x512xf32, #tpu.memory_space<vmem>>, vector<1x1x2x512xf32>
    %151 = vector.shape_cast %150 : vector<1x1x2x512xf32> to vector<2x512xf32>
    %152 = arith.index_cast %c1_i32_5 : i32 to index
    %c0_48 = arith.constant 0 : index
    %c0_49 = arith.constant 0 : index
    %153 = vector.load %arg1[%152, %c0_48, %c0_49] : memref<2x128x512xf32, #tpu.memory_space<vmem>>, vector<1x128x512xf32>
    %154 = vector.shape_cast %153 : vector<1x128x512xf32> to vector<128x512xf32>
    %cst_50 = arith.constant dense<0.000000e+00> : vector<2x512xf32>
    %155 = tpu.matmul %86, %154, %cst_50 {dimension_numbers = #tpu.dot_dimension_numbers<[1], [0], [0], [1], [0, 0, 1, 1], [], []>} : vector<2x128xf32>, vector<128x512xf32>, vector<2x512xf32> -> vector<2x512xf32>
    %156 = arith.addf %151, %155 : vector<2x512xf32>
    %157 = vector.extract_strided_slice %156 {offsets = [0, 0], sizes = [2, 128], strides = [1, 1]} : vector<2x512xf32> to vector<2x128xf32>
    %158 = arith.negf %157 : vector<2x128xf32>
    %159 = math.exp %158 : vector<2x128xf32>
    %cst_51 = arith.constant 1.000000e+00 : f32
    %160 = vector.broadcast %cst_51 : f32 to vector<2x128xf32>
    %161 = arith.addf %160, %159 : vector<2x128xf32>
    %162 = arith.divf %160, %161 : vector<2x128xf32>
    %163 = vector.extract_strided_slice %156 {offsets = [0, 128], sizes = [2, 128], strides = [1, 1]} : vector<2x512xf32> to vector<2x128xf32>
    %164 = arith.negf %163 : vector<2x128xf32>
    %165 = math.exp %164 : vector<2x128xf32>
    %cst_52 = arith.constant 1.000000e+00 : f32
    %166 = vector.broadcast %cst_52 : f32 to vector<2x128xf32>
    %167 = arith.addf %166, %165 : vector<2x128xf32>
    %168 = arith.divf %166, %167 : vector<2x128xf32>
    %169 = vector.extract_strided_slice %156 {offsets = [0, 256], sizes = [2, 128], strides = [1, 1]} : vector<2x512xf32> to vector<2x128xf32>
    %170 = math.tanh %169 : vector<2x128xf32>
    %171 = vector.extract_strided_slice %156 {offsets = [0, 384], sizes = [2, 128], strides = [1, 1]} : vector<2x512xf32> to vector<2x128xf32>
    %172 = arith.negf %171 : vector<2x128xf32>
    %173 = math.exp %172 : vector<2x128xf32>
    %cst_53 = arith.constant 1.000000e+00 : f32
    %174 = vector.broadcast %cst_53 : f32 to vector<2x128xf32>
    %175 = arith.addf %174, %173 : vector<2x128xf32>
    %176 = arith.divf %174, %175 : vector<2x128xf32>
    %177 = arith.mulf %168, %84 : vector<2x128xf32>
    %178 = arith.mulf %162, %170 : vector<2x128xf32>
    %179 = arith.addf %177, %178 : vector<2x128xf32>
    %180 = math.tanh %179 : vector<2x128xf32>
    %181 = arith.mulf %176, %180 : vector<2x128xf32>
    %c127_i32_54 = arith.constant 127 : i32
    %182 = tpu.dynamic_rotate %148 by %c127_i32_54 dim 1 : vector<2x128xf32>, i32 -> vector<2x128xf32>
    %c1_i32_55 = arith.constant 1 : i32
    %183 = tpu.dynamic_rotate %148 by %c1_i32_55 dim 1 : vector<2x128xf32>, i32 -> vector<2x128xf32>
    %184 = arith.select %18, %182, %183 : vector<2x128xi1>, vector<2x128xf32>
    %185 = arith.subf %148, %184 : vector<2x128xf32>
    %186 = arith.negf %185 : vector<2x128xf32>
    %187 = math.exp %186 : vector<2x128xf32>
    %cst_56 = arith.constant 1.000000e+00 : f32
    %188 = vector.broadcast %cst_56 : f32 to vector<2x128xf32>
    %189 = arith.addf %188, %187 : vector<2x128xf32>
    %190 = arith.divf %188, %189 : vector<2x128xf32>
    %191 = vector.shape_cast %190 : vector<2x128xf32> to vector<1x2x128xf32>
    %c0_57 = arith.constant 0 : index
    %192 = arith.index_cast %c1_i32_34 : i32 to index
    %c0_58 = arith.constant 0 : index
    %c0_59 = arith.constant 0 : index
    %193 = vector.load %arg2[%c0_57, %192, %c0_58, %c0_59] : memref<2x8x2x128xf32, #tpu.memory_space<vmem>>, vector<1x1x2x128xf32>
    %194 = vector.shape_cast %193 : vector<1x1x2x128xf32> to vector<1x2x128xf32>
    %195 = vector.shape_cast %191 : vector<1x2x128xf32> to vector<1x1x2x128xf32>
    tpu.vector_store %arg2[%c0_57, %192, %c0_58, %c0_59], %195 {strides = array<i32>} : memref<2x8x2x128xf32, #tpu.memory_space<vmem>>, vector<1x1x2x128xf32>,
    %c127_i32_60 = arith.constant 127 : i32
    %196 = tpu.dynamic_rotate %181 by %c127_i32_60 dim 1 : vector<2x128xf32>, i32 -> vector<2x128xf32>
    %c1_i32_61 = arith.constant 1 : i32
    %197 = tpu.dynamic_rotate %181 by %c1_i32_61 dim 1 : vector<2x128xf32>, i32 -> vector<2x128xf32>
    %198 = arith.select %18, %196, %197 : vector<2x128xi1>, vector<2x128xf32>
    %199 = arith.subf %181, %198 : vector<2x128xf32>
    %200 = arith.negf %199 : vector<2x128xf32>
    %201 = math.exp %200 : vector<2x128xf32>
    %cst_62 = arith.constant 1.000000e+00 : f32
    %202 = vector.broadcast %cst_62 : f32 to vector<2x128xf32>
    %203 = arith.addf %202, %201 : vector<2x128xf32>
    %204 = arith.divf %202, %203 : vector<2x128xf32>
    %205 = vector.shape_cast %204 : vector<2x128xf32> to vector<1x2x128xf32>
    %c1_63 = arith.constant 1 : index
    %206 = arith.index_cast %115 : i32 to index
    %c0_64 = arith.constant 0 : index
    %c0_65 = arith.constant 0 : index
    %207 = vector.load %arg2[%c1_63, %206, %c0_64, %c0_65] : memref<2x8x2x128xf32, #tpu.memory_space<vmem>>, vector<1x1x2x128xf32>
    %208 = vector.shape_cast %207 : vector<1x1x2x128xf32> to vector<1x2x128xf32>
    %209 = vector.shape_cast %205 : vector<1x2x128xf32> to vector<1x1x2x128xf32>
    tpu.vector_store %arg2[%c1_63, %206, %c0_64, %c0_65], %209 {strides = array<i32>} : memref<2x8x2x128xf32, #tpu.memory_space<vmem>>, vector<1x1x2x128xf32>,
    %c2_i32_66 = arith.constant 2 : i32
    %c7_i32_67 = arith.constant 7 : i32
    %210 = arith.subi %c7_i32_67, %c2_i32_66 : i32
    %c0_68 = arith.constant 0 : index
    %211 = arith.index_cast %c2_i32_66 : i32 to index
    %c0_69 = arith.constant 0 : index
    %c0_70 = arith.constant 0 : index
    %212 = vector.load %arg0[%c0_68, %211, %c0_69, %c0_70] : memref<2x8x2x512xf32, #tpu.memory_space<vmem>>, vector<1x1x2x512xf32>
    %213 = vector.shape_cast %212 : vector<1x1x2x512xf32> to vector<2x512xf32>
    %214 = arith.index_cast %c0_i32_4 : i32 to index
    %c0_71 = arith.constant 0 : index
    %c0_72 = arith.constant 0 : index
    %215 = vector.load %arg1[%214, %c0_71, %c0_72] : memref<2x128x512xf32, #tpu.memory_space<vmem>>, vector<1x128x512xf32>
    %216 = vector.shape_cast %215 : vector<1x128x512xf32> to vector<128x512xf32>
    %cst_73 = arith.constant dense<0.000000e+00> : vector<2x512xf32>
    %217 = tpu.matmul %148, %216, %cst_73 {dimension_numbers = #tpu.dot_dimension_numbers<[1], [0], [0], [1], [0, 0, 1, 1], [], []>} : vector<2x128xf32>, vector<128x512xf32>, vector<2x512xf32> -> vector<2x512xf32>
    %218 = arith.addf %213, %217 : vector<2x512xf32>
    %219 = vector.extract_strided_slice %218 {offsets = [0, 0], sizes = [2, 128], strides = [1, 1]} : vector<2x512xf32> to vector<2x128xf32>
    %220 = arith.negf %219 : vector<2x128xf32>
    %221 = math.exp %220 : vector<2x128xf32>
    %cst_74 = arith.constant 1.000000e+00 : f32
    %222 = vector.broadcast %cst_74 : f32 to vector<2x128xf32>
    %223 = arith.addf %222, %221 : vector<2x128xf32>
    %224 = arith.divf %222, %223 : vector<2x128xf32>
    %225 = vector.extract_strided_slice %218 {offsets = [0, 128], sizes = [2, 128], strides = [1, 1]} : vector<2x512xf32> to vector<2x128xf32>
    %226 = arith.negf %225 : vector<2x128xf32>
    %227 = math.exp %226 : vector<2x128xf32>
    %cst_75 = arith.constant 1.000000e+00 : f32
    %228 = vector.broadcast %cst_75 : f32 to vector<2x128xf32>
    %229 = arith.addf %228, %227 : vector<2x128xf32>
    %230 = arith.divf %228, %229 : vector<2x128xf32>
    %231 = vector.extract_strided_slice %218 {offsets = [0, 256], sizes = [2, 128], strides = [1, 1]} : vector<2x512xf32> to vector<2x128xf32>
    %232 = math.tanh %231 : vector<2x128xf32>
    %233 = vector.extract_strided_slice %218 {offsets = [0, 384], sizes = [2, 128], strides = [1, 1]} : vector<2x512xf32> to vector<2x128xf32>
    %234 = arith.negf %233 : vector<2x128xf32>
    %235 = math.exp %234 : vector<2x128xf32>
    %cst_76 = arith.constant 1.000000e+00 : f32
    %236 = vector.broadcast %cst_76 : f32 to vector<2x128xf32>
    %237 = arith.addf %236, %235 : vector<2x128xf32>
    %238 = arith.divf %236, %237 : vector<2x128xf32>
    %239 = arith.mulf %230, %146 : vector<2x128xf32>
    %240 = arith.mulf %224, %232 : vector<2x128xf32>
    %241 = arith.addf %239, %240 : vector<2x128xf32>
    %242 = math.tanh %241 : vector<2x128xf32>
    %243 = arith.mulf %238, %242 : vector<2x128xf32>
    %c1_77 = arith.constant 1 : index
    %244 = arith.index_cast %210 : i32 to index
    %c0_78 = arith.constant 0 : index
    %c0_79 = arith.constant 0 : index
    %245 = vector.load %arg0[%c1_77, %244, %c0_78, %c0_79] : memref<2x8x2x512xf32, #tpu.memory_space<vmem>>, vector<1x1x2x512xf32>
    %246 = vector.shape_cast %245 : vector<1x1x2x512xf32> to vector<2x512xf32>
    %247 = arith.index_cast %c1_i32_5 : i32 to index
    %c0_80 = arith.constant 0 : index
    %c0_81 = arith.constant 0 : index
    %248 = vector.load %arg1[%247, %c0_80, %c0_81] : memref<2x128x512xf32, #tpu.memory_space<vmem>>, vector<1x128x512xf32>
    %249 = vector.shape_cast %248 : vector<1x128x512xf32> to vector<128x512xf32>
    %cst_82 = arith.constant dense<0.000000e+00> : vector<2x512xf32>
    %250 = tpu.matmul %181, %249, %cst_82 {dimension_numbers = #tpu.dot_dimension_numbers<[1], [0], [0], [1], [0, 0, 1, 1], [], []>} : vector<2x128xf32>, vector<128x512xf32>, vector<2x512xf32> -> vector<2x512xf32>
    %251 = arith.addf %246, %250 : vector<2x512xf32>
    %252 = vector.extract_strided_slice %251 {offsets = [0, 0], sizes = [2, 128], strides = [1, 1]} : vector<2x512xf32> to vector<2x128xf32>
    %253 = arith.negf %252 : vector<2x128xf32>
    %254 = math.exp %253 : vector<2x128xf32>
    %cst_83 = arith.constant 1.000000e+00 : f32
    %255 = vector.broadcast %cst_83 : f32 to vector<2x128xf32>
    %256 = arith.addf %255, %254 : vector<2x128xf32>
    %257 = arith.divf %255, %256 : vector<2x128xf32>
    %258 = vector.extract_strided_slice %251 {offsets = [0, 128], sizes = [2, 128], strides = [1, 1]} : vector<2x512xf32> to vector<2x128xf32>
    %259 = arith.negf %258 : vector<2x128xf32>
    %260 = math.exp %259 : vector<2x128xf32>
    %cst_84 = arith.constant 1.000000e+00 : f32
    %261 = vector.broadcast %cst_84 : f32 to vector<2x128xf32>
    %262 = arith.addf %261, %260 : vector<2x128xf32>
    %263 = arith.divf %261, %262 : vector<2x128xf32>
    %264 = vector.extract_strided_slice %251 {offsets = [0, 256], sizes = [2, 128], strides = [1, 1]} : vector<2x512xf32> to vector<2x128xf32>
    %265 = math.tanh %264 : vector<2x128xf32>
    %266 = vector.extract_strided_slice %251 {offsets = [0, 384], sizes = [2, 128], strides = [1, 1]} : vector<2x512xf32> to vector<2x128xf32>
    %267 = arith.negf %266 : vector<2x128xf32>
    %268 = math.exp %267 : vector<2x128xf32>
    %cst_85 = arith.constant 1.000000e+00 : f32
    %269 = vector.broadcast %cst_85 : f32 to vector<2x128xf32>
    %270 = arith.addf %269, %268 : vector<2x128xf32>
    %271 = arith.divf %269, %270 : vector<2x128xf32>
    %272 = arith.mulf %263, %179 : vector<2x128xf32>
    %273 = arith.mulf %257, %265 : vector<2x128xf32>
    %274 = arith.addf %272, %273 : vector<2x128xf32>
    %275 = math.tanh %274 : vector<2x128xf32>
    %276 = arith.mulf %271, %275 : vector<2x128xf32>
    %c127_i32_86 = arith.constant 127 : i32
    %277 = tpu.dynamic_rotate %243 by %c127_i32_86 dim 1 : vector<2x128xf32>, i32 -> vector<2x128xf32>
    %c1_i32_87 = arith.constant 1 : i32
    %278 = tpu.dynamic_rotate %243 by %c1_i32_87 dim 1 : vector<2x128xf32>, i32 -> vector<2x128xf32>
    %279 = arith.select %18, %277, %278 : vector<2x128xi1>, vector<2x128xf32>
    %280 = arith.subf %243, %279 : vector<2x128xf32>
    %281 = arith.negf %280 : vector<2x128xf32>
    %282 = math.exp %281 : vector<2x128xf32>
    %cst_88 = arith.constant 1.000000e+00 : f32
    %283 = vector.broadcast %cst_88 : f32 to vector<2x128xf32>
    %284 = arith.addf %283, %282 : vector<2x128xf32>
    %285 = arith.divf %283, %284 : vector<2x128xf32>
    %286 = vector.shape_cast %285 : vector<2x128xf32> to vector<1x2x128xf32>
    %c0_89 = arith.constant 0 : index
    %287 = arith.index_cast %c2_i32_66 : i32 to index
    %c0_90 = arith.constant 0 : index
    %c0_91 = arith.constant 0 : index
    %288 = vector.load %arg2[%c0_89, %287, %c0_90, %c0_91] : memref<2x8x2x128xf32, #tpu.memory_space<vmem>>, vector<1x1x2x128xf32>
    %289 = vector.shape_cast %288 : vector<1x1x2x128xf32> to vector<1x2x128xf32>
    %290 = vector.shape_cast %286 : vector<1x2x128xf32> to vector<1x1x2x128xf32>
    tpu.vector_store %arg2[%c0_89, %287, %c0_90, %c0_91], %290 {strides = array<i32>} : memref<2x8x2x128xf32, #tpu.memory_space<vmem>>, vector<1x1x2x128xf32>,
    %c127_i32_92 = arith.constant 127 : i32
    %291 = tpu.dynamic_rotate %276 by %c127_i32_92 dim 1 : vector<2x128xf32>, i32 -> vector<2x128xf32>
    %c1_i32_93 = arith.constant 1 : i32
    %292 = tpu.dynamic_rotate %276 by %c1_i32_93 dim 1 : vector<2x128xf32>, i32 -> vector<2x128xf32>
    %293 = arith.select %18, %291, %292 : vector<2x128xi1>, vector<2x128xf32>
    %294 = arith.subf %276, %293 : vector<2x128xf32>
    %295 = arith.negf %294 : vector<2x128xf32>
    %296 = math.exp %295 : vector<2x128xf32>
    %cst_94 = arith.constant 1.000000e+00 : f32
    %297 = vector.broadcast %cst_94 : f32 to vector<2x128xf32>
    %298 = arith.addf %297, %296 : vector<2x128xf32>
    %299 = arith.divf %297, %298 : vector<2x128xf32>
    %300 = vector.shape_cast %299 : vector<2x128xf32> to vector<1x2x128xf32>
    %c1_95 = arith.constant 1 : index
    %301 = arith.index_cast %210 : i32 to index
    %c0_96 = arith.constant 0 : index
    %c0_97 = arith.constant 0 : index
    %302 = vector.load %arg2[%c1_95, %301, %c0_96, %c0_97] : memref<2x8x2x128xf32, #tpu.memory_space<vmem>>, vector<1x1x2x128xf32>
    %303 = vector.shape_cast %302 : vector<1x1x2x128xf32> to vector<1x2x128xf32>
    %304 = vector.shape_cast %300 : vector<1x2x128xf32> to vector<1x1x2x128xf32>
    tpu.vector_store %arg2[%c1_95, %301, %c0_96, %c0_97], %304 {strides = array<i32>} : memref<2x8x2x128xf32, #tpu.memory_space<vmem>>, vector<1x1x2x128xf32>,
    %c3_i32 = arith.constant 3 : i32
    %c7_i32_98 = arith.constant 7 : i32
    %305 = arith.subi %c7_i32_98, %c3_i32 : i32
    %c0_99 = arith.constant 0 : index
    %306 = arith.index_cast %c3_i32 : i32 to index
    %c0_100 = arith.constant 0 : index
    %c0_101 = arith.constant 0 : index
    %307 = vector.load %arg0[%c0_99, %306, %c0_100, %c0_101] : memref<2x8x2x512xf32, #tpu.memory_space<vmem>>, vector<1x1x2x512xf32>
    %308 = vector.shape_cast %307 : vector<1x1x2x512xf32> to vector<2x512xf32>
    %309 = arith.index_cast %c0_i32_4 : i32 to index
    %c0_102 = arith.constant 0 : index
    %c0_103 = arith.constant 0 : index
    %310 = vector.load %arg1[%309, %c0_102, %c0_103] : memref<2x128x512xf32, #tpu.memory_space<vmem>>, vector<1x128x512xf32>
    %311 = vector.shape_cast %310 : vector<1x128x512xf32> to vector<128x512xf32>
    %cst_104 = arith.constant dense<0.000000e+00> : vector<2x512xf32>
    %312 = tpu.matmul %243, %311, %cst_104 {dimension_numbers = #tpu.dot_dimension_numbers<[1], [0], [0], [1], [0, 0, 1, 1], [], []>} : vector<2x128xf32>, vector<128x512xf32>, vector<2x512xf32> -> vector<2x512xf32>
    %313 = arith.addf %308, %312 : vector<2x512xf32>
    %314 = vector.extract_strided_slice %313 {offsets = [0, 0], sizes = [2, 128], strides = [1, 1]} : vector<2x512xf32> to vector<2x128xf32>
    %315 = arith.negf %314 : vector<2x128xf32>
    %316 = math.exp %315 : vector<2x128xf32>
    %cst_105 = arith.constant 1.000000e+00 : f32
    %317 = vector.broadcast %cst_105 : f32 to vector<2x128xf32>
    %318 = arith.addf %317, %316 : vector<2x128xf32>
    %319 = arith.divf %317, %318 : vector<2x128xf32>
    %320 = vector.extract_strided_slice %313 {offsets = [0, 128], sizes = [2, 128], strides = [1, 1]} : vector<2x512xf32> to vector<2x128xf32>
    %321 = arith.negf %320 : vector<2x128xf32>
    %322 = math.exp %321 : vector<2x128xf32>
    %cst_106 = arith.constant 1.000000e+00 : f32
    %323 = vector.broadcast %cst_106 : f32 to vector<2x128xf32>
    %324 = arith.addf %323, %322 : vector<2x128xf32>
    %325 = arith.divf %323, %324 : vector<2x128xf32>
    %326 = vector.extract_strided_slice %313 {offsets = [0, 256], sizes = [2, 128], strides = [1, 1]} : vector<2x512xf32> to vector<2x128xf32>
    %327 = math.tanh %326 : vector<2x128xf32>
    %328 = vector.extract_strided_slice %313 {offsets = [0, 384], sizes = [2, 128], strides = [1, 1]} : vector<2x512xf32> to vector<2x128xf32>
    %329 = arith.negf %328 : vector<2x128xf32>
    %330 = math.exp %329 : vector<2x128xf32>
    %cst_107 = arith.constant 1.000000e+00 : f32
    %331 = vector.broadcast %cst_107 : f32 to vector<2x128xf32>
    %332 = arith.addf %331, %330 : vector<2x128xf32>
    %333 = arith.divf %331, %332 : vector<2x128xf32>
    %334 = arith.mulf %325, %241 : vector<2x128xf32>
    %335 = arith.mulf %319, %327 : vector<2x128xf32>
    %336 = arith.addf %334, %335 : vector<2x128xf32>
    %337 = math.tanh %336 : vector<2x128xf32>
    %338 = arith.mulf %333, %337 : vector<2x128xf32>
    %c1_108 = arith.constant 1 : index
    %339 = arith.index_cast %305 : i32 to index
    %c0_109 = arith.constant 0 : index
    %c0_110 = arith.constant 0 : index
    %340 = vector.load %arg0[%c1_108, %339, %c0_109, %c0_110] : memref<2x8x2x512xf32, #tpu.memory_space<vmem>>, vector<1x1x2x512xf32>
    %341 = vector.shape_cast %340 : vector<1x1x2x512xf32> to vector<2x512xf32>
    %342 = arith.index_cast %c1_i32_5 : i32 to index
    %c0_111 = arith.constant 0 : index
    %c0_112 = arith.constant 0 : index
    %343 = vector.load %arg1[%342, %c0_111, %c0_112] : memref<2x128x512xf32, #tpu.memory_space<vmem>>, vector<1x128x512xf32>
    %344 = vector.shape_cast %343 : vector<1x128x512xf32> to vector<128x512xf32>
    %cst_113 = arith.constant dense<0.000000e+00> : vector<2x512xf32>
    %345 = tpu.matmul %276, %344, %cst_113 {dimension_numbers = #tpu.dot_dimension_numbers<[1], [0], [0], [1], [0, 0, 1, 1], [], []>} : vector<2x128xf32>, vector<128x512xf32>, vector<2x512xf32> -> vector<2x512xf32>
    %346 = arith.addf %341, %345 : vector<2x512xf32>
    %347 = vector.extract_strided_slice %346 {offsets = [0, 0], sizes = [2, 128], strides = [1, 1]} : vector<2x512xf32> to vector<2x128xf32>
    %348 = arith.negf %347 : vector<2x128xf32>
    %349 = math.exp %348 : vector<2x128xf32>
    %cst_114 = arith.constant 1.000000e+00 : f32
    %350 = vector.broadcast %cst_114 : f32 to vector<2x128xf32>
    %351 = arith.addf %350, %349 : vector<2x128xf32>
    %352 = arith.divf %350, %351 : vector<2x128xf32>
    %353 = vector.extract_strided_slice %346 {offsets = [0, 128], sizes = [2, 128], strides = [1, 1]} : vector<2x512xf32> to vector<2x128xf32>
    %354 = arith.negf %353 : vector<2x128xf32>
    %355 = math.exp %354 : vector<2x128xf32>
    %cst_115 = arith.constant 1.000000e+00 : f32
    %356 = vector.broadcast %cst_115 : f32 to vector<2x128xf32>
    %357 = arith.addf %356, %355 : vector<2x128xf32>
    %358 = arith.divf %356, %357 : vector<2x128xf32>
    %359 = vector.extract_strided_slice %346 {offsets = [0, 256], sizes = [2, 128], strides = [1, 1]} : vector<2x512xf32> to vector<2x128xf32>
    %360 = math.tanh %359 : vector<2x128xf32>
    %361 = vector.extract_strided_slice %346 {offsets = [0, 384], sizes = [2, 128], strides = [1, 1]} : vector<2x512xf32> to vector<2x128xf32>
    %362 = arith.negf %361 : vector<2x128xf32>
    %363 = math.exp %362 : vector<2x128xf32>
    %cst_116 = arith.constant 1.000000e+00 : f32
    %364 = vector.broadcast %cst_116 : f32 to vector<2x128xf32>
    %365 = arith.addf %364, %363 : vector<2x128xf32>
    %366 = arith.divf %364, %365 : vector<2x128xf32>
    %367 = arith.mulf %358, %274 : vector<2x128xf32>
    %368 = arith.mulf %352, %360 : vector<2x128xf32>
    %369 = arith.addf %367, %368 : vector<2x128xf32>
    %370 = math.tanh %369 : vector<2x128xf32>
    %371 = arith.mulf %366, %370 : vector<2x128xf32>
    %c127_i32_117 = arith.constant 127 : i32
    %372 = tpu.dynamic_rotate %338 by %c127_i32_117 dim 1 : vector<2x128xf32>, i32 -> vector<2x128xf32>
    %c1_i32_118 = arith.constant 1 : i32
    %373 = tpu.dynamic_rotate %338 by %c1_i32_118 dim 1 : vector<2x128xf32>, i32 -> vector<2x128xf32>
    %374 = arith.select %18, %372, %373 : vector<2x128xi1>, vector<2x128xf32>
    %375 = arith.subf %338, %374 : vector<2x128xf32>
    %376 = arith.negf %375 : vector<2x128xf32>
    %377 = math.exp %376 : vector<2x128xf32>
    %cst_119 = arith.constant 1.000000e+00 : f32
    %378 = vector.broadcast %cst_119 : f32 to vector<2x128xf32>
    %379 = arith.addf %378, %377 : vector<2x128xf32>
    %380 = arith.divf %378, %379 : vector<2x128xf32>
    %381 = vector.shape_cast %380 : vector<2x128xf32> to vector<1x2x128xf32>
    %c0_120 = arith.constant 0 : index
    %382 = arith.index_cast %c3_i32 : i32 to index
    %c0_121 = arith.constant 0 : index
    %c0_122 = arith.constant 0 : index
    %383 = vector.load %arg2[%c0_120, %382, %c0_121, %c0_122] : memref<2x8x2x128xf32, #tpu.memory_space<vmem>>, vector<1x1x2x128xf32>
    %384 = vector.shape_cast %383 : vector<1x1x2x128xf32> to vector<1x2x128xf32>
    %385 = vector.shape_cast %381 : vector<1x2x128xf32> to vector<1x1x2x128xf32>
    tpu.vector_store %arg2[%c0_120, %382, %c0_121, %c0_122], %385 {strides = array<i32>} : memref<2x8x2x128xf32, #tpu.memory_space<vmem>>, vector<1x1x2x128xf32>,
    %c127_i32_123 = arith.constant 127 : i32
    %386 = tpu.dynamic_rotate %371 by %c127_i32_123 dim 1 : vector<2x128xf32>, i32 -> vector<2x128xf32>
    %c1_i32_124 = arith.constant 1 : i32
    %387 = tpu.dynamic_rotate %371 by %c1_i32_124 dim 1 : vector<2x128xf32>, i32 -> vector<2x128xf32>
    %388 = arith.select %18, %386, %387 : vector<2x128xi1>, vector<2x128xf32>
    %389 = arith.subf %371, %388 : vector<2x128xf32>
    %390 = arith.negf %389 : vector<2x128xf32>
    %391 = math.exp %390 : vector<2x128xf32>
    %cst_125 = arith.constant 1.000000e+00 : f32
    %392 = vector.broadcast %cst_125 : f32 to vector<2x128xf32>
    %393 = arith.addf %392, %391 : vector<2x128xf32>
    %394 = arith.divf %392, %393 : vector<2x128xf32>
    %395 = vector.shape_cast %394 : vector<2x128xf32> to vector<1x2x128xf32>
    %c1_126 = arith.constant 1 : index
    %396 = arith.index_cast %305 : i32 to index
    %c0_127 = arith.constant 0 : index
    %c0_128 = arith.constant 0 : index
    %397 = vector.load %arg2[%c1_126, %396, %c0_127, %c0_128] : memref<2x8x2x128xf32, #tpu.memory_space<vmem>>, vector<1x1x2x128xf32>
    %398 = vector.shape_cast %397 : vector<1x1x2x128xf32> to vector<1x2x128xf32>
    %399 = vector.shape_cast %395 : vector<1x2x128xf32> to vector<1x1x2x128xf32>
    tpu.vector_store %arg2[%c1_126, %396, %c0_127, %c0_128], %399 {strides = array<i32>} : memref<2x8x2x128xf32, #tpu.memory_space<vmem>>, vector<1x1x2x128xf32>,
    %c4_i32 = arith.constant 4 : i32
    %c7_i32_129 = arith.constant 7 : i32
    %400 = arith.subi %c7_i32_129, %c4_i32 : i32
    %c0_130 = arith.constant 0 : index
    %401 = arith.index_cast %c4_i32 : i32 to index
    %c0_131 = arith.constant 0 : index
    %c0_132 = arith.constant 0 : index
    %402 = vector.load %arg0[%c0_130, %401, %c0_131, %c0_132] : memref<2x8x2x512xf32, #tpu.memory_space<vmem>>, vector<1x1x2x512xf32>
    %403 = vector.shape_cast %402 : vector<1x1x2x512xf32> to vector<2x512xf32>
    %404 = arith.index_cast %c0_i32_4 : i32 to index
    %c0_133 = arith.constant 0 : index
    %c0_134 = arith.constant 0 : index
    %405 = vector.load %arg1[%404, %c0_133, %c0_134] : memref<2x128x512xf32, #tpu.memory_space<vmem>>, vector<1x128x512xf32>
    %406 = vector.shape_cast %405 : vector<1x128x512xf32> to vector<128x512xf32>
    %cst_135 = arith.constant dense<0.000000e+00> : vector<2x512xf32>
    %407 = tpu.matmul %338, %406, %cst_135 {dimension_numbers = #tpu.dot_dimension_numbers<[1], [0], [0], [1], [0, 0, 1, 1], [], []>} : vector<2x128xf32>, vector<128x512xf32>, vector<2x512xf32> -> vector<2x512xf32>
    %408 = arith.addf %403, %407 : vector<2x512xf32>
    %409 = vector.extract_strided_slice %408 {offsets = [0, 0], sizes = [2, 128], strides = [1, 1]} : vector<2x512xf32> to vector<2x128xf32>
    %410 = arith.negf %409 : vector<2x128xf32>
    %411 = math.exp %410 : vector<2x128xf32>
    %cst_136 = arith.constant 1.000000e+00 : f32
    %412 = vector.broadcast %cst_136 : f32 to vector<2x128xf32>
    %413 = arith.addf %412, %411 : vector<2x128xf32>
    %414 = arith.divf %412, %413 : vector<2x128xf32>
    %415 = vector.extract_strided_slice %408 {offsets = [0, 128], sizes = [2, 128], strides = [1, 1]} : vector<2x512xf32> to vector<2x128xf32>
    %416 = arith.negf %415 : vector<2x128xf32>
    %417 = math.exp %416 : vector<2x128xf32>
    %cst_137 = arith.constant 1.000000e+00 : f32
    %418 = vector.broadcast %cst_137 : f32 to vector<2x128xf32>
    %419 = arith.addf %418, %417 : vector<2x128xf32>
    %420 = arith.divf %418, %419 : vector<2x128xf32>
    %421 = vector.extract_strided_slice %408 {offsets = [0, 256], sizes = [2, 128], strides = [1, 1]} : vector<2x512xf32> to vector<2x128xf32>
    %422 = math.tanh %421 : vector<2x128xf32>
    %423 = vector.extract_strided_slice %408 {offsets = [0, 384], sizes = [2, 128], strides = [1, 1]} : vector<2x512xf32> to vector<2x128xf32>
    %424 = arith.negf %423 : vector<2x128xf32>
    %425 = math.exp %424 : vector<2x128xf32>
    %cst_138 = arith.constant 1.000000e+00 : f32
    %426 = vector.broadcast %cst_138 : f32 to vector<2x128xf32>
    %427 = arith.addf %426, %425 : vector<2x128xf32>
    %428 = arith.divf %426, %427 : vector<2x128xf32>
    %429 = arith.mulf %420, %336 : vector<2x128xf32>
    %430 = arith.mulf %414, %422 : vector<2x128xf32>
    %431 = arith.addf %429, %430 : vector<2x128xf32>
    %432 = math.tanh %431 : vector<2x128xf32>
    %433 = arith.mulf %428, %432 : vector<2x128xf32>
    %c1_139 = arith.constant 1 : index
    %434 = arith.index_cast %400 : i32 to index
    %c0_140 = arith.constant 0 : index
    %c0_141 = arith.constant 0 : index
    %435 = vector.load %arg0[%c1_139, %434, %c0_140, %c0_141] : memref<2x8x2x512xf32, #tpu.memory_space<vmem>>, vector<1x1x2x512xf32>
    %436 = vector.shape_cast %435 : vector<1x1x2x512xf32> to vector<2x512xf32>
    %437 = arith.index_cast %c1_i32_5 : i32 to index
    %c0_142 = arith.constant 0 : index
    %c0_143 = arith.constant 0 : index
    %438 = vector.load %arg1[%437, %c0_142, %c0_143] : memref<2x128x512xf32, #tpu.memory_space<vmem>>, vector<1x128x512xf32>
    %439 = vector.shape_cast %438 : vector<1x128x512xf32> to vector<128x512xf32>
    %cst_144 = arith.constant dense<0.000000e+00> : vector<2x512xf32>
    %440 = tpu.matmul %371, %439, %cst_144 {dimension_numbers = #tpu.dot_dimension_numbers<[1], [0], [0], [1], [0, 0, 1, 1], [], []>} : vector<2x128xf32>, vector<128x512xf32>, vector<2x512xf32> -> vector<2x512xf32>
    %441 = arith.addf %436, %440 : vector<2x512xf32>
    %442 = vector.extract_strided_slice %441 {offsets = [0, 0], sizes = [2, 128], strides = [1, 1]} : vector<2x512xf32> to vector<2x128xf32>
    %443 = arith.negf %442 : vector<2x128xf32>
    %444 = math.exp %443 : vector<2x128xf32>
    %cst_145 = arith.constant 1.000000e+00 : f32
    %445 = vector.broadcast %cst_145 : f32 to vector<2x128xf32>
    %446 = arith.addf %445, %444 : vector<2x128xf32>
    %447 = arith.divf %445, %446 : vector<2x128xf32>
    %448 = vector.extract_strided_slice %441 {offsets = [0, 128], sizes = [2, 128], strides = [1, 1]} : vector<2x512xf32> to vector<2x128xf32>
    %449 = arith.negf %448 : vector<2x128xf32>
    %450 = math.exp %449 : vector<2x128xf32>
    %cst_146 = arith.constant 1.000000e+00 : f32
    %451 = vector.broadcast %cst_146 : f32 to vector<2x128xf32>
    %452 = arith.addf %451, %450 : vector<2x128xf32>
    %453 = arith.divf %451, %452 : vector<2x128xf32>
    %454 = vector.extract_strided_slice %441 {offsets = [0, 256], sizes = [2, 128], strides = [1, 1]} : vector<2x512xf32> to vector<2x128xf32>
    %455 = math.tanh %454 : vector<2x128xf32>
    %456 = vector.extract_strided_slice %441 {offsets = [0, 384], sizes = [2, 128], strides = [1, 1]} : vector<2x512xf32> to vector<2x128xf32>
    %457 = arith.negf %456 : vector<2x128xf32>
    %458 = math.exp %457 : vector<2x128xf32>
    %cst_147 = arith.constant 1.000000e+00 : f32
    %459 = vector.broadcast %cst_147 : f32 to vector<2x128xf32>
    %460 = arith.addf %459, %458 : vector<2x128xf32>
    %461 = arith.divf %459, %460 : vector<2x128xf32>
    %462 = arith.mulf %453, %369 : vector<2x128xf32>
    %463 = arith.mulf %447, %455 : vector<2x128xf32>
    %464 = arith.addf %462, %463 : vector<2x128xf32>
    %465 = math.tanh %464 : vector<2x128xf32>
    %466 = arith.mulf %461, %465 : vector<2x128xf32>
    %c127_i32_148 = arith.constant 127 : i32
    %467 = tpu.dynamic_rotate %433 by %c127_i32_148 dim 1 : vector<2x128xf32>, i32 -> vector<2x128xf32>
    %c1_i32_149 = arith.constant 1 : i32
    %468 = tpu.dynamic_rotate %433 by %c1_i32_149 dim 1 : vector<2x128xf32>, i32 -> vector<2x128xf32>
    %469 = arith.select %18, %467, %468 : vector<2x128xi1>, vector<2x128xf32>
    %470 = arith.subf %433, %469 : vector<2x128xf32>
    %471 = arith.negf %470 : vector<2x128xf32>
    %472 = math.exp %471 : vector<2x128xf32>
    %cst_150 = arith.constant 1.000000e+00 : f32
    %473 = vector.broadcast %cst_150 : f32 to vector<2x128xf32>
    %474 = arith.addf %473, %472 : vector<2x128xf32>
    %475 = arith.divf %473, %474 : vector<2x128xf32>
    %476 = vector.shape_cast %475 : vector<2x128xf32> to vector<1x2x128xf32>
    %c0_151 = arith.constant 0 : index
    %477 = arith.index_cast %c4_i32 : i32 to index
    %c0_152 = arith.constant 0 : index
    %c0_153 = arith.constant 0 : index
    %478 = vector.load %arg2[%c0_151, %477, %c0_152, %c0_153] : memref<2x8x2x128xf32, #tpu.memory_space<vmem>>, vector<1x1x2x128xf32>
    %479 = vector.shape_cast %478 : vector<1x1x2x128xf32> to vector<1x2x128xf32>
    %480 = vector.shape_cast %476 : vector<1x2x128xf32> to vector<1x1x2x128xf32>
    tpu.vector_store %arg2[%c0_151, %477, %c0_152, %c0_153], %480 {strides = array<i32>} : memref<2x8x2x128xf32, #tpu.memory_space<vmem>>, vector<1x1x2x128xf32>,
    %c127_i32_154 = arith.constant 127 : i32
    %481 = tpu.dynamic_rotate %466 by %c127_i32_154 dim 1 : vector<2x128xf32>, i32 -> vector<2x128xf32>
    %c1_i32_155 = arith.constant 1 : i32
    %482 = tpu.dynamic_rotate %466 by %c1_i32_155 dim 1 : vector<2x128xf32>, i32 -> vector<2x128xf32>
    %483 = arith.select %18, %481, %482 : vector<2x128xi1>, vector<2x128xf32>
    %484 = arith.subf %466, %483 : vector<2x128xf32>
    %485 = arith.negf %484 : vector<2x128xf32>
    %486 = math.exp %485 : vector<2x128xf32>
    %cst_156 = arith.constant 1.000000e+00 : f32
    %487 = vector.broadcast %cst_156 : f32 to vector<2x128xf32>
    %488 = arith.addf %487, %486 : vector<2x128xf32>
    %489 = arith.divf %487, %488 : vector<2x128xf32>
    %490 = vector.shape_cast %489 : vector<2x128xf32> to vector<1x2x128xf32>
    %c1_157 = arith.constant 1 : index
    %491 = arith.index_cast %400 : i32 to index
    %c0_158 = arith.constant 0 : index
    %c0_159 = arith.constant 0 : index
    %492 = vector.load %arg2[%c1_157, %491, %c0_158, %c0_159] : memref<2x8x2x128xf32, #tpu.memory_space<vmem>>, vector<1x1x2x128xf32>
    %493 = vector.shape_cast %492 : vector<1x1x2x128xf32> to vector<1x2x128xf32>
    %494 = vector.shape_cast %490 : vector<1x2x128xf32> to vector<1x1x2x128xf32>
    tpu.vector_store %arg2[%c1_157, %491, %c0_158, %c0_159], %494 {strides = array<i32>} : memref<2x8x2x128xf32, #tpu.memory_space<vmem>>, vector<1x1x2x128xf32>,
    %c5_i32 = arith.constant 5 : i32
    %c7_i32_160 = arith.constant 7 : i32
    %495 = arith.subi %c7_i32_160, %c5_i32 : i32
    %c0_161 = arith.constant 0 : index
    %496 = arith.index_cast %c5_i32 : i32 to index
    %c0_162 = arith.constant 0 : index
    %c0_163 = arith.constant 0 : index
    %497 = vector.load %arg0[%c0_161, %496, %c0_162, %c0_163] : memref<2x8x2x512xf32, #tpu.memory_space<vmem>>, vector<1x1x2x512xf32>
    %498 = vector.shape_cast %497 : vector<1x1x2x512xf32> to vector<2x512xf32>
    %499 = arith.index_cast %c0_i32_4 : i32 to index
    %c0_164 = arith.constant 0 : index
    %c0_165 = arith.constant 0 : index
    %500 = vector.load %arg1[%499, %c0_164, %c0_165] : memref<2x128x512xf32, #tpu.memory_space<vmem>>, vector<1x128x512xf32>
    %501 = vector.shape_cast %500 : vector<1x128x512xf32> to vector<128x512xf32>
    %cst_166 = arith.constant dense<0.000000e+00> : vector<2x512xf32>
    %502 = tpu.matmul %433, %501, %cst_166 {dimension_numbers = #tpu.dot_dimension_numbers<[1], [0], [0], [1], [0, 0, 1, 1], [], []>} : vector<2x128xf32>, vector<128x512xf32>, vector<2x512xf32> -> vector<2x512xf32>
    %503 = arith.addf %498, %502 : vector<2x512xf32>
    %504 = vector.extract_strided_slice %503 {offsets = [0, 0], sizes = [2, 128], strides = [1, 1]} : vector<2x512xf32> to vector<2x128xf32>
    %505 = arith.negf %504 : vector<2x128xf32>
    %506 = math.exp %505 : vector<2x128xf32>
    %cst_167 = arith.constant 1.000000e+00 : f32
    %507 = vector.broadcast %cst_167 : f32 to vector<2x128xf32>
    %508 = arith.addf %507, %506 : vector<2x128xf32>
    %509 = arith.divf %507, %508 : vector<2x128xf32>
    %510 = vector.extract_strided_slice %503 {offsets = [0, 128], sizes = [2, 128], strides = [1, 1]} : vector<2x512xf32> to vector<2x128xf32>
    %511 = arith.negf %510 : vector<2x128xf32>
    %512 = math.exp %511 : vector<2x128xf32>
    %cst_168 = arith.constant 1.000000e+00 : f32
    %513 = vector.broadcast %cst_168 : f32 to vector<2x128xf32>
    %514 = arith.addf %513, %512 : vector<2x128xf32>
    %515 = arith.divf %513, %514 : vector<2x128xf32>
    %516 = vector.extract_strided_slice %503 {offsets = [0, 256], sizes = [2, 128], strides = [1, 1]} : vector<2x512xf32> to vector<2x128xf32>
    %517 = math.tanh %516 : vector<2x128xf32>
    %518 = vector.extract_strided_slice %503 {offsets = [0, 384], sizes = [2, 128], strides = [1, 1]} : vector<2x512xf32> to vector<2x128xf32>
    %519 = arith.negf %518 : vector<2x128xf32>
    %520 = math.exp %519 : vector<2x128xf32>
    %cst_169 = arith.constant 1.000000e+00 : f32
    %521 = vector.broadcast %cst_169 : f32 to vector<2x128xf32>
    %522 = arith.addf %521, %520 : vector<2x128xf32>
    %523 = arith.divf %521, %522 : vector<2x128xf32>
    %524 = arith.mulf %515, %431 : vector<2x128xf32>
    %525 = arith.mulf %509, %517 : vector<2x128xf32>
    %526 = arith.addf %524, %525 : vector<2x128xf32>
    %527 = math.tanh %526 : vector<2x128xf32>
    %528 = arith.mulf %523, %527 : vector<2x128xf32>
    %c1_170 = arith.constant 1 : index
    %529 = arith.index_cast %495 : i32 to index
    %c0_171 = arith.constant 0 : index
    %c0_172 = arith.constant 0 : index
    %530 = vector.load %arg0[%c1_170, %529, %c0_171, %c0_172] : memref<2x8x2x512xf32, #tpu.memory_space<vmem>>, vector<1x1x2x512xf32>
    %531 = vector.shape_cast %530 : vector<1x1x2x512xf32> to vector<2x512xf32>
    %532 = arith.index_cast %c1_i32_5 : i32 to index
    %c0_173 = arith.constant 0 : index
    %c0_174 = arith.constant 0 : index
    %533 = vector.load %arg1[%532, %c0_173, %c0_174] : memref<2x128x512xf32, #tpu.memory_space<vmem>>, vector<1x128x512xf32>
    %534 = vector.shape_cast %533 : vector<1x128x512xf32> to vector<128x512xf32>
    %cst_175 = arith.constant dense<0.000000e+00> : vector<2x512xf32>
    %535 = tpu.matmul %466, %534, %cst_175 {dimension_numbers = #tpu.dot_dimension_numbers<[1], [0], [0], [1], [0, 0, 1, 1], [], []>} : vector<2x128xf32>, vector<128x512xf32>, vector<2x512xf32> -> vector<2x512xf32>
    %536 = arith.addf %531, %535 : vector<2x512xf32>
    %537 = vector.extract_strided_slice %536 {offsets = [0, 0], sizes = [2, 128], strides = [1, 1]} : vector<2x512xf32> to vector<2x128xf32>
    %538 = arith.negf %537 : vector<2x128xf32>
    %539 = math.exp %538 : vector<2x128xf32>
    %cst_176 = arith.constant 1.000000e+00 : f32
    %540 = vector.broadcast %cst_176 : f32 to vector<2x128xf32>
    %541 = arith.addf %540, %539 : vector<2x128xf32>
    %542 = arith.divf %540, %541 : vector<2x128xf32>
    %543 = vector.extract_strided_slice %536 {offsets = [0, 128], sizes = [2, 128], strides = [1, 1]} : vector<2x512xf32> to vector<2x128xf32>
    %544 = arith.negf %543 : vector<2x128xf32>
    %545 = math.exp %544 : vector<2x128xf32>
    %cst_177 = arith.constant 1.000000e+00 : f32
    %546 = vector.broadcast %cst_177 : f32 to vector<2x128xf32>
    %547 = arith.addf %546, %545 : vector<2x128xf32>
    %548 = arith.divf %546, %547 : vector<2x128xf32>
    %549 = vector.extract_strided_slice %536 {offsets = [0, 256], sizes = [2, 128], strides = [1, 1]} : vector<2x512xf32> to vector<2x128xf32>
    %550 = math.tanh %549 : vector<2x128xf32>
    %551 = vector.extract_strided_slice %536 {offsets = [0, 384], sizes = [2, 128], strides = [1, 1]} : vector<2x512xf32> to vector<2x128xf32>
    %552 = arith.negf %551 : vector<2x128xf32>
    %553 = math.exp %552 : vector<2x128xf32>
    %cst_178 = arith.constant 1.000000e+00 : f32
    %554 = vector.broadcast %cst_178 : f32 to vector<2x128xf32>
    %555 = arith.addf %554, %553 : vector<2x128xf32>
    %556 = arith.divf %554, %555 : vector<2x128xf32>
    %557 = arith.mulf %548, %464 : vector<2x128xf32>
    %558 = arith.mulf %542, %550 : vector<2x128xf32>
    %559 = arith.addf %557, %558 : vector<2x128xf32>
    %560 = math.tanh %559 : vector<2x128xf32>
    %561 = arith.mulf %556, %560 : vector<2x128xf32>
    %c127_i32_179 = arith.constant 127 : i32
    %562 = tpu.dynamic_rotate %528 by %c127_i32_179 dim 1 : vector<2x128xf32>, i32 -> vector<2x128xf32>
    %c1_i32_180 = arith.constant 1 : i32
    %563 = tpu.dynamic_rotate %528 by %c1_i32_180 dim 1 : vector<2x128xf32>, i32 -> vector<2x128xf32>
    %564 = arith.select %18, %562, %563 : vector<2x128xi1>, vector<2x128xf32>
    %565 = arith.subf %528, %564 : vector<2x128xf32>
    %566 = arith.negf %565 : vector<2x128xf32>
    %567 = math.exp %566 : vector<2x128xf32>
    %cst_181 = arith.constant 1.000000e+00 : f32
    %568 = vector.broadcast %cst_181 : f32 to vector<2x128xf32>
    %569 = arith.addf %568, %567 : vector<2x128xf32>
    %570 = arith.divf %568, %569 : vector<2x128xf32>
    %571 = vector.shape_cast %570 : vector<2x128xf32> to vector<1x2x128xf32>
    %c0_182 = arith.constant 0 : index
    %572 = arith.index_cast %c5_i32 : i32 to index
    %c0_183 = arith.constant 0 : index
    %c0_184 = arith.constant 0 : index
    %573 = vector.load %arg2[%c0_182, %572, %c0_183, %c0_184] : memref<2x8x2x128xf32, #tpu.memory_space<vmem>>, vector<1x1x2x128xf32>
    %574 = vector.shape_cast %573 : vector<1x1x2x128xf32> to vector<1x2x128xf32>
    %575 = vector.shape_cast %571 : vector<1x2x128xf32> to vector<1x1x2x128xf32>
    tpu.vector_store %arg2[%c0_182, %572, %c0_183, %c0_184], %575 {strides = array<i32>} : memref<2x8x2x128xf32, #tpu.memory_space<vmem>>, vector<1x1x2x128xf32>,
    %c127_i32_185 = arith.constant 127 : i32
    %576 = tpu.dynamic_rotate %561 by %c127_i32_185 dim 1 : vector<2x128xf32>, i32 -> vector<2x128xf32>
    %c1_i32_186 = arith.constant 1 : i32
    %577 = tpu.dynamic_rotate %561 by %c1_i32_186 dim 1 : vector<2x128xf32>, i32 -> vector<2x128xf32>
    %578 = arith.select %18, %576, %577 : vector<2x128xi1>, vector<2x128xf32>
    %579 = arith.subf %561, %578 : vector<2x128xf32>
    %580 = arith.negf %579 : vector<2x128xf32>
    %581 = math.exp %580 : vector<2x128xf32>
    %cst_187 = arith.constant 1.000000e+00 : f32
    %582 = vector.broadcast %cst_187 : f32 to vector<2x128xf32>
    %583 = arith.addf %582, %581 : vector<2x128xf32>
    %584 = arith.divf %582, %583 : vector<2x128xf32>
    %585 = vector.shape_cast %584 : vector<2x128xf32> to vector<1x2x128xf32>
    %c1_188 = arith.constant 1 : index
    %586 = arith.index_cast %495 : i32 to index
    %c0_189 = arith.constant 0 : index
    %c0_190 = arith.constant 0 : index
    %587 = vector.load %arg2[%c1_188, %586, %c0_189, %c0_190] : memref<2x8x2x128xf32, #tpu.memory_space<vmem>>, vector<1x1x2x128xf32>
    %588 = vector.shape_cast %587 : vector<1x1x2x128xf32> to vector<1x2x128xf32>
    %589 = vector.shape_cast %585 : vector<1x2x128xf32> to vector<1x1x2x128xf32>
    tpu.vector_store %arg2[%c1_188, %586, %c0_189, %c0_190], %589 {strides = array<i32>} : memref<2x8x2x128xf32, #tpu.memory_space<vmem>>, vector<1x1x2x128xf32>,
    %c6_i32 = arith.constant 6 : i32
    %c7_i32_191 = arith.constant 7 : i32
    %590 = arith.subi %c7_i32_191, %c6_i32 : i32
    %c0_192 = arith.constant 0 : index
    %591 = arith.index_cast %c6_i32 : i32 to index
    %c0_193 = arith.constant 0 : index
    %c0_194 = arith.constant 0 : index
    %592 = vector.load %arg0[%c0_192, %591, %c0_193, %c0_194] : memref<2x8x2x512xf32, #tpu.memory_space<vmem>>, vector<1x1x2x512xf32>
    %593 = vector.shape_cast %592 : vector<1x1x2x512xf32> to vector<2x512xf32>
    %594 = arith.index_cast %c0_i32_4 : i32 to index
    %c0_195 = arith.constant 0 : index
    %c0_196 = arith.constant 0 : index
    %595 = vector.load %arg1[%594, %c0_195, %c0_196] : memref<2x128x512xf32, #tpu.memory_space<vmem>>, vector<1x128x512xf32>
    %596 = vector.shape_cast %595 : vector<1x128x512xf32> to vector<128x512xf32>
    %cst_197 = arith.constant dense<0.000000e+00> : vector<2x512xf32>
    %597 = tpu.matmul %528, %596, %cst_197 {dimension_numbers = #tpu.dot_dimension_numbers<[1], [0], [0], [1], [0, 0, 1, 1], [], []>} : vector<2x128xf32>, vector<128x512xf32>, vector<2x512xf32> -> vector<2x512xf32>
    %598 = arith.addf %593, %597 : vector<2x512xf32>
    %599 = vector.extract_strided_slice %598 {offsets = [0, 0], sizes = [2, 128], strides = [1, 1]} : vector<2x512xf32> to vector<2x128xf32>
    %600 = arith.negf %599 : vector<2x128xf32>
    %601 = math.exp %600 : vector<2x128xf32>
    %cst_198 = arith.constant 1.000000e+00 : f32
    %602 = vector.broadcast %cst_198 : f32 to vector<2x128xf32>
    %603 = arith.addf %602, %601 : vector<2x128xf32>
    %604 = arith.divf %602, %603 : vector<2x128xf32>
    %605 = vector.extract_strided_slice %598 {offsets = [0, 128], sizes = [2, 128], strides = [1, 1]} : vector<2x512xf32> to vector<2x128xf32>
    %606 = arith.negf %605 : vector<2x128xf32>
    %607 = math.exp %606 : vector<2x128xf32>
    %cst_199 = arith.constant 1.000000e+00 : f32
    %608 = vector.broadcast %cst_199 : f32 to vector<2x128xf32>
    %609 = arith.addf %608, %607 : vector<2x128xf32>
    %610 = arith.divf %608, %609 : vector<2x128xf32>
    %611 = vector.extract_strided_slice %598 {offsets = [0, 256], sizes = [2, 128], strides = [1, 1]} : vector<2x512xf32> to vector<2x128xf32>
    %612 = math.tanh %611 : vector<2x128xf32>
    %613 = vector.extract_strided_slice %598 {offsets = [0, 384], sizes = [2, 128], strides = [1, 1]} : vector<2x512xf32> to vector<2x128xf32>
    %614 = arith.negf %613 : vector<2x128xf32>
    %615 = math.exp %614 : vector<2x128xf32>
    %cst_200 = arith.constant 1.000000e+00 : f32
    %616 = vector.broadcast %cst_200 : f32 to vector<2x128xf32>
    %617 = arith.addf %616, %615 : vector<2x128xf32>
    %618 = arith.divf %616, %617 : vector<2x128xf32>
    %619 = arith.mulf %610, %526 : vector<2x128xf32>
    %620 = arith.mulf %604, %612 : vector<2x128xf32>
    %621 = arith.addf %619, %620 : vector<2x128xf32>
    %622 = math.tanh %621 : vector<2x128xf32>
    %623 = arith.mulf %618, %622 : vector<2x128xf32>
    %c1_201 = arith.constant 1 : index
    %624 = arith.index_cast %590 : i32 to index
    %c0_202 = arith.constant 0 : index
    %c0_203 = arith.constant 0 : index
    %625 = vector.load %arg0[%c1_201, %624, %c0_202, %c0_203] : memref<2x8x2x512xf32, #tpu.memory_space<vmem>>, vector<1x1x2x512xf32>
    %626 = vector.shape_cast %625 : vector<1x1x2x512xf32> to vector<2x512xf32>
    %627 = arith.index_cast %c1_i32_5 : i32 to index
    %c0_204 = arith.constant 0 : index
    %c0_205 = arith.constant 0 : index
    %628 = vector.load %arg1[%627, %c0_204, %c0_205] : memref<2x128x512xf32, #tpu.memory_space<vmem>>, vector<1x128x512xf32>
    %629 = vector.shape_cast %628 : vector<1x128x512xf32> to vector<128x512xf32>
    %cst_206 = arith.constant dense<0.000000e+00> : vector<2x512xf32>
    %630 = tpu.matmul %561, %629, %cst_206 {dimension_numbers = #tpu.dot_dimension_numbers<[1], [0], [0], [1], [0, 0, 1, 1], [], []>} : vector<2x128xf32>, vector<128x512xf32>, vector<2x512xf32> -> vector<2x512xf32>
    %631 = arith.addf %626, %630 : vector<2x512xf32>
    %632 = vector.extract_strided_slice %631 {offsets = [0, 0], sizes = [2, 128], strides = [1, 1]} : vector<2x512xf32> to vector<2x128xf32>
    %633 = arith.negf %632 : vector<2x128xf32>
    %634 = math.exp %633 : vector<2x128xf32>
    %cst_207 = arith.constant 1.000000e+00 : f32
    %635 = vector.broadcast %cst_207 : f32 to vector<2x128xf32>
    %636 = arith.addf %635, %634 : vector<2x128xf32>
    %637 = arith.divf %635, %636 : vector<2x128xf32>
    %638 = vector.extract_strided_slice %631 {offsets = [0, 128], sizes = [2, 128], strides = [1, 1]} : vector<2x512xf32> to vector<2x128xf32>
    %639 = arith.negf %638 : vector<2x128xf32>
    %640 = math.exp %639 : vector<2x128xf32>
    %cst_208 = arith.constant 1.000000e+00 : f32
    %641 = vector.broadcast %cst_208 : f32 to vector<2x128xf32>
    %642 = arith.addf %641, %640 : vector<2x128xf32>
    %643 = arith.divf %641, %642 : vector<2x128xf32>
    %644 = vector.extract_strided_slice %631 {offsets = [0, 256], sizes = [2, 128], strides = [1, 1]} : vector<2x512xf32> to vector<2x128xf32>
    %645 = math.tanh %644 : vector<2x128xf32>
    %646 = vector.extract_strided_slice %631 {offsets = [0, 384], sizes = [2, 128], strides = [1, 1]} : vector<2x512xf32> to vector<2x128xf32>
    %647 = arith.negf %646 : vector<2x128xf32>
    %648 = math.exp %647 : vector<2x128xf32>
    %cst_209 = arith.constant 1.000000e+00 : f32
    %649 = vector.broadcast %cst_209 : f32 to vector<2x128xf32>
    %650 = arith.addf %649, %648 : vector<2x128xf32>
    %651 = arith.divf %649, %650 : vector<2x128xf32>
    %652 = arith.mulf %643, %559 : vector<2x128xf32>
    %653 = arith.mulf %637, %645 : vector<2x128xf32>
    %654 = arith.addf %652, %653 : vector<2x128xf32>
    %655 = math.tanh %654 : vector<2x128xf32>
    %656 = arith.mulf %651, %655 : vector<2x128xf32>
    %c127_i32_210 = arith.constant 127 : i32
    %657 = tpu.dynamic_rotate %623 by %c127_i32_210 dim 1 : vector<2x128xf32>, i32 -> vector<2x128xf32>
    %c1_i32_211 = arith.constant 1 : i32
    %658 = tpu.dynamic_rotate %623 by %c1_i32_211 dim 1 : vector<2x128xf32>, i32 -> vector<2x128xf32>
    %659 = arith.select %18, %657, %658 : vector<2x128xi1>, vector<2x128xf32>
    %660 = arith.subf %623, %659 : vector<2x128xf32>
    %661 = arith.negf %660 : vector<2x128xf32>
    %662 = math.exp %661 : vector<2x128xf32>
    %cst_212 = arith.constant 1.000000e+00 : f32
    %663 = vector.broadcast %cst_212 : f32 to vector<2x128xf32>
    %664 = arith.addf %663, %662 : vector<2x128xf32>
    %665 = arith.divf %663, %664 : vector<2x128xf32>
    %666 = vector.shape_cast %665 : vector<2x128xf32> to vector<1x2x128xf32>
    %c0_213 = arith.constant 0 : index
    %667 = arith.index_cast %c6_i32 : i32 to index
    %c0_214 = arith.constant 0 : index
    %c0_215 = arith.constant 0 : index
    %668 = vector.load %arg2[%c0_213, %667, %c0_214, %c0_215] : memref<2x8x2x128xf32, #tpu.memory_space<vmem>>, vector<1x1x2x128xf32>
    %669 = vector.shape_cast %668 : vector<1x1x2x128xf32> to vector<1x2x128xf32>
    %670 = vector.shape_cast %666 : vector<1x2x128xf32> to vector<1x1x2x128xf32>
    tpu.vector_store %arg2[%c0_213, %667, %c0_214, %c0_215], %670 {strides = array<i32>} : memref<2x8x2x128xf32, #tpu.memory_space<vmem>>, vector<1x1x2x128xf32>,
    %c127_i32_216 = arith.constant 127 : i32
    %671 = tpu.dynamic_rotate %656 by %c127_i32_216 dim 1 : vector<2x128xf32>, i32 -> vector<2x128xf32>
    %c1_i32_217 = arith.constant 1 : i32
    %672 = tpu.dynamic_rotate %656 by %c1_i32_217 dim 1 : vector<2x128xf32>, i32 -> vector<2x128xf32>
    %673 = arith.select %18, %671, %672 : vector<2x128xi1>, vector<2x128xf32>
    %674 = arith.subf %656, %673 : vector<2x128xf32>
    %675 = arith.negf %674 : vector<2x128xf32>
    %676 = math.exp %675 : vector<2x128xf32>
    %cst_218 = arith.constant 1.000000e+00 : f32
    %677 = vector.broadcast %cst_218 : f32 to vector<2x128xf32>
    %678 = arith.addf %677, %676 : vector<2x128xf32>
    %679 = arith.divf %677, %678 : vector<2x128xf32>
    %680 = vector.shape_cast %679 : vector<2x128xf32> to vector<1x2x128xf32>
    %c1_219 = arith.constant 1 : index
    %681 = arith.index_cast %590 : i32 to index
    %c0_220 = arith.constant 0 : index
    %c0_221 = arith.constant 0 : index
    %682 = vector.load %arg2[%c1_219, %681, %c0_220, %c0_221] : memref<2x8x2x128xf32, #tpu.memory_space<vmem>>, vector<1x1x2x128xf32>
    %683 = vector.shape_cast %682 : vector<1x1x2x128xf32> to vector<1x2x128xf32>
    %684 = vector.shape_cast %680 : vector<1x2x128xf32> to vector<1x1x2x128xf32>
    tpu.vector_store %arg2[%c1_219, %681, %c0_220, %c0_221], %684 {strides = array<i32>} : memref<2x8x2x128xf32, #tpu.memory_space<vmem>>, vector<1x1x2x128xf32>,
    %c7_i32_222 = arith.constant 7 : i32
    %c7_i32_223 = arith.constant 7 : i32
    %685 = arith.subi %c7_i32_223, %c7_i32_222 : i32
    %c0_224 = arith.constant 0 : index
    %686 = arith.index_cast %c7_i32_222 : i32 to index
    %c0_225 = arith.constant 0 : index
    %c0_226 = arith.constant 0 : index
    %687 = vector.load %arg0[%c0_224, %686, %c0_225, %c0_226] : memref<2x8x2x512xf32, #tpu.memory_space<vmem>>, vector<1x1x2x512xf32>
    %688 = vector.shape_cast %687 : vector<1x1x2x512xf32> to vector<2x512xf32>
    %689 = arith.index_cast %c0_i32_4 : i32 to index
    %c0_227 = arith.constant 0 : index
    %c0_228 = arith.constant 0 : index
    %690 = vector.load %arg1[%689, %c0_227, %c0_228] : memref<2x128x512xf32, #tpu.memory_space<vmem>>, vector<1x128x512xf32>
    %691 = vector.shape_cast %690 : vector<1x128x512xf32> to vector<128x512xf32>
    %cst_229 = arith.constant dense<0.000000e+00> : vector<2x512xf32>
    %692 = tpu.matmul %623, %691, %cst_229 {dimension_numbers = #tpu.dot_dimension_numbers<[1], [0], [0], [1], [0, 0, 1, 1], [], []>} : vector<2x128xf32>, vector<128x512xf32>, vector<2x512xf32> -> vector<2x512xf32>
    %693 = arith.addf %688, %692 : vector<2x512xf32>
    %694 = vector.extract_strided_slice %693 {offsets = [0, 0], sizes = [2, 128], strides = [1, 1]} : vector<2x512xf32> to vector<2x128xf32>
    %695 = arith.negf %694 : vector<2x128xf32>
    %696 = math.exp %695 : vector<2x128xf32>
    %cst_230 = arith.constant 1.000000e+00 : f32
    %697 = vector.broadcast %cst_230 : f32 to vector<2x128xf32>
    %698 = arith.addf %697, %696 : vector<2x128xf32>
    %699 = arith.divf %697, %698 : vector<2x128xf32>
    %700 = vector.extract_strided_slice %693 {offsets = [0, 128], sizes = [2, 128], strides = [1, 1]} : vector<2x512xf32> to vector<2x128xf32>
    %701 = arith.negf %700 : vector<2x128xf32>
    %702 = math.exp %701 : vector<2x128xf32>
    %cst_231 = arith.constant 1.000000e+00 : f32
    %703 = vector.broadcast %cst_231 : f32 to vector<2x128xf32>
    %704 = arith.addf %703, %702 : vector<2x128xf32>
    %705 = arith.divf %703, %704 : vector<2x128xf32>
    %706 = vector.extract_strided_slice %693 {offsets = [0, 256], sizes = [2, 128], strides = [1, 1]} : vector<2x512xf32> to vector<2x128xf32>
    %707 = math.tanh %706 : vector<2x128xf32>
    %708 = vector.extract_strided_slice %693 {offsets = [0, 384], sizes = [2, 128], strides = [1, 1]} : vector<2x512xf32> to vector<2x128xf32>
    %709 = arith.negf %708 : vector<2x128xf32>
    %710 = math.exp %709 : vector<2x128xf32>
    %cst_232 = arith.constant 1.000000e+00 : f32
    %711 = vector.broadcast %cst_232 : f32 to vector<2x128xf32>
    %712 = arith.addf %711, %710 : vector<2x128xf32>
    %713 = arith.divf %711, %712 : vector<2x128xf32>
    %714 = arith.mulf %705, %621 : vector<2x128xf32>
    %715 = arith.mulf %699, %707 : vector<2x128xf32>
    %716 = arith.addf %714, %715 : vector<2x128xf32>
    %717 = math.tanh %716 : vector<2x128xf32>
    %718 = arith.mulf %713, %717 : vector<2x128xf32>
    %c1_233 = arith.constant 1 : index
    %719 = arith.index_cast %685 : i32 to index
    %c0_234 = arith.constant 0 : index
    %c0_235 = arith.constant 0 : index
    %720 = vector.load %arg0[%c1_233, %719, %c0_234, %c0_235] : memref<2x8x2x512xf32, #tpu.memory_space<vmem>>, vector<1x1x2x512xf32>
    %721 = vector.shape_cast %720 : vector<1x1x2x512xf32> to vector<2x512xf32>
    %722 = arith.index_cast %c1_i32_5 : i32 to index
    %c0_236 = arith.constant 0 : index
    %c0_237 = arith.constant 0 : index
    %723 = vector.load %arg1[%722, %c0_236, %c0_237] : memref<2x128x512xf32, #tpu.memory_space<vmem>>, vector<1x128x512xf32>
    %724 = vector.shape_cast %723 : vector<1x128x512xf32> to vector<128x512xf32>
    %cst_238 = arith.constant dense<0.000000e+00> : vector<2x512xf32>
    %725 = tpu.matmul %656, %724, %cst_238 {dimension_numbers = #tpu.dot_dimension_numbers<[1], [0], [0], [1], [0, 0, 1, 1], [], []>} : vector<2x128xf32>, vector<128x512xf32>, vector<2x512xf32> -> vector<2x512xf32>
    %726 = arith.addf %721, %725 : vector<2x512xf32>
    %727 = vector.extract_strided_slice %726 {offsets = [0, 0], sizes = [2, 128], strides = [1, 1]} : vector<2x512xf32> to vector<2x128xf32>
    %728 = arith.negf %727 : vector<2x128xf32>
    %729 = math.exp %728 : vector<2x128xf32>
    %cst_239 = arith.constant 1.000000e+00 : f32
    %730 = vector.broadcast %cst_239 : f32 to vector<2x128xf32>
    %731 = arith.addf %730, %729 : vector<2x128xf32>
    %732 = arith.divf %730, %731 : vector<2x128xf32>
    %733 = vector.extract_strided_slice %726 {offsets = [0, 128], sizes = [2, 128], strides = [1, 1]} : vector<2x512xf32> to vector<2x128xf32>
    %734 = arith.negf %733 : vector<2x128xf32>
    %735 = math.exp %734 : vector<2x128xf32>
    %cst_240 = arith.constant 1.000000e+00 : f32
    %736 = vector.broadcast %cst_240 : f32 to vector<2x128xf32>
    %737 = arith.addf %736, %735 : vector<2x128xf32>
    %738 = arith.divf %736, %737 : vector<2x128xf32>
    %739 = vector.extract_strided_slice %726 {offsets = [0, 256], sizes = [2, 128], strides = [1, 1]} : vector<2x512xf32> to vector<2x128xf32>
    %740 = math.tanh %739 : vector<2x128xf32>
    %741 = vector.extract_strided_slice %726 {offsets = [0, 384], sizes = [2, 128], strides = [1, 1]} : vector<2x512xf32> to vector<2x128xf32>
    %742 = arith.negf %741 : vector<2x128xf32>
    %743 = math.exp %742 : vector<2x128xf32>
    %cst_241 = arith.constant 1.000000e+00 : f32
    %744 = vector.broadcast %cst_241 : f32 to vector<2x128xf32>
    %745 = arith.addf %744, %743 : vector<2x128xf32>
    %746 = arith.divf %744, %745 : vector<2x128xf32>
    %747 = arith.mulf %738, %654 : vector<2x128xf32>
    %748 = arith.mulf %732, %740 : vector<2x128xf32>
    %749 = arith.addf %747, %748 : vector<2x128xf32>
    %750 = math.tanh %749 : vector<2x128xf32>
    %751 = arith.mulf %746, %750 : vector<2x128xf32>
    %c127_i32_242 = arith.constant 127 : i32
    %752 = tpu.dynamic_rotate %718 by %c127_i32_242 dim 1 : vector<2x128xf32>, i32 -> vector<2x128xf32>
    %c1_i32_243 = arith.constant 1 : i32
    %753 = tpu.dynamic_rotate %718 by %c1_i32_243 dim 1 : vector<2x128xf32>, i32 -> vector<2x128xf32>
    %754 = arith.select %18, %752, %753 : vector<2x128xi1>, vector<2x128xf32>
    %755 = arith.subf %718, %754 : vector<2x128xf32>
    %756 = arith.negf %755 : vector<2x128xf32>
    %757 = math.exp %756 : vector<2x128xf32>
    %cst_244 = arith.constant 1.000000e+00 : f32
    %758 = vector.broadcast %cst_244 : f32 to vector<2x128xf32>
    %759 = arith.addf %758, %757 : vector<2x128xf32>
    %760 = arith.divf %758, %759 : vector<2x128xf32>
    %761 = vector.shape_cast %760 : vector<2x128xf32> to vector<1x2x128xf32>
    %c0_245 = arith.constant 0 : index
    %762 = arith.index_cast %c7_i32_222 : i32 to index
    %c0_246 = arith.constant 0 : index
    %c0_247 = arith.constant 0 : index
    %763 = vector.load %arg2[%c0_245, %762, %c0_246, %c0_247] : memref<2x8x2x128xf32, #tpu.memory_space<vmem>>, vector<1x1x2x128xf32>
    %764 = vector.shape_cast %763 : vector<1x1x2x128xf32> to vector<1x2x128xf32>
    %765 = vector.shape_cast %761 : vector<1x2x128xf32> to vector<1x1x2x128xf32>
    tpu.vector_store %arg2[%c0_245, %762, %c0_246, %c0_247], %765 {strides = array<i32>} : memref<2x8x2x128xf32, #tpu.memory_space<vmem>>, vector<1x1x2x128xf32>,
    %c127_i32_248 = arith.constant 127 : i32
    %766 = tpu.dynamic_rotate %751 by %c127_i32_248 dim 1 : vector<2x128xf32>, i32 -> vector<2x128xf32>
    %c1_i32_249 = arith.constant 1 : i32
    %767 = tpu.dynamic_rotate %751 by %c1_i32_249 dim 1 : vector<2x128xf32>, i32 -> vector<2x128xf32>
    %768 = arith.select %18, %766, %767 : vector<2x128xi1>, vector<2x128xf32>
    %769 = arith.subf %751, %768 : vector<2x128xf32>
    %770 = arith.negf %769 : vector<2x128xf32>
    %771 = math.exp %770 : vector<2x128xf32>
    %cst_250 = arith.constant 1.000000e+00 : f32
    %772 = vector.broadcast %cst_250 : f32 to vector<2x128xf32>
    %773 = arith.addf %772, %771 : vector<2x128xf32>
    %774 = arith.divf %772, %773 : vector<2x128xf32>
    %775 = vector.shape_cast %774 : vector<2x128xf32> to vector<1x2x128xf32>
    %c1_251 = arith.constant 1 : index
    %776 = arith.index_cast %685 : i32 to index
    %c0_252 = arith.constant 0 : index
    %c0_253 = arith.constant 0 : index
    %777 = vector.load %arg2[%c1_251, %776, %c0_252, %c0_253] : memref<2x8x2x128xf32, #tpu.memory_space<vmem>>, vector<1x1x2x128xf32>
    %778 = vector.shape_cast %777 : vector<1x1x2x128xf32> to vector<1x2x128xf32>
    %779 = vector.shape_cast %775 : vector<1x2x128xf32> to vector<1x1x2x128xf32>
    tpu.vector_store %arg2[%c1_251, %776, %c0_252, %c0_253], %779 {strides = array<i32>} : memref<2x8x2x128xf32, #tpu.memory_space<vmem>>, vector<1x1x2x128xf32>,
    %c8_i32 = arith.constant 8 : i32
    return
  }
}

</mosaic_0001>

<llo_original>
// kernel: mask_rnn_forward.1
$region0: #{mask_rnn_forward.1}
  #allocation0 [shape = 'u32[]', space=smem, size = 0x4, offset = 0x4, fixed_abs, tag = 'smem constant byte address 0x4 - core index']
  #allocation1 [shape = 'u32[72,128]{1,0:T(1,128)}', space=vmem, size = 0x9000, scoped, tag = 'internal scratch']
  %s0 = inlined_call_operand.vmem [shape: f32[2,8,2,512], index: 0, kind: input, shape index: {}]
  %s1 = inlined_call_operand.vmem [shape: f32[2,128,512], index: 1, kind: input, shape index: {}]
  %s2 = inlined_call_operand.vmem [shape: f32[2,8,2,128], index: 2, kind: output, shape index: {}]
  %s3 = sld [smem:[#allocation0]]
  $region18: #{mask_rnn_forward.1} parent=0
    _
  %s5 = ssub.s32 1, %s3
  %s6 = scalar_select 0, %s5, %s3
  // Predicated region
  $region2: #{mask_rnn_forward.1} parent=0 // pred_check
    _
  $region3: #{mask_rnn_forward.1} parent=0 // pred_check_branch
    %8 = sbr.rel (0) target = $region5
  $region4: #{mask_rnn_forward.1} parent=0 // pred_region
    _
  $region5: #{mask_rnn_forward.1} parent=0 // pred_fallthru
    _
  // Predicated region
  $region6: #{mask_rnn_forward.1} parent=0 // pred_check
    _
  $region7: #{mask_rnn_forward.1} parent=0 // pred_check_branch
    %10 = sbr.rel (0) target = $region9
  $region8: #{mask_rnn_forward.1} parent=0 // pred_region
    _
  $region9: #{mask_rnn_forward.1} parent=0 // pred_fallthru
    _
  %v11 = vlaneseq
  %v12 = vand.u32 %v11, 127
  %vm13 = vcmp.lt.s32.totalorder %v12, 0
  %v14 = vsub.s32 0, %v12
  %v15 = vsel %vm13, %v14, %v12
  %v16 = vshrl.u32 %v15, 1
  %v17 = vand.u32 %v15, 1
  %v18 = vsub.s32 0, %v17
  %v19 = vsel %vm13, %v18, %v17
  %vm20 = vcmp.ne.s32.totalorder %v19, 0
  %vm21 = vcmp.lt.s32.totalorder %v19, 0
  %vm22 = vmand %vm21, %vm20
  %v23 = vadd.s32 %v19, 2
  %v24 = vsel %vm22, %v23, %v19
  %vm25 = vcmp.eq.s32.totalorder %v24, 0
  %v26 = vld [vmem:[%s0] sm:$0xff]
  %v27 = vld [vmem:[%s1] sm:$0xff]
  %v28 = vld [vmem:[%s1 + $0x8] sm:$0xff]
  %v29 = vld [vmem:[%s1 + $0x10] sm:$0xff]
  %v30 = vld [vmem:[%s1 + $0x18] sm:$0xff]
  %v31 = vld [vmem:[%s1 + $0x20] sm:$0xff]
  %v32 = vld [vmem:[%s1 + $0x28] sm:$0xff]
  %v33 = vld [vmem:[%s1 + $0x30] sm:$0xff]
  %v34 = vld [vmem:[%s1 + $0x38] sm:$0xff]
  %v35 = vld [vmem:[%s1 + $0x40] sm:$0xff]
  %v36 = vld [vmem:[%s1 + $0x48] sm:$0xff]
  %v37 = vld [vmem:[%s1 + $0x50] sm:$0xff]
  %v38 = vld [vmem:[%s1 + $0x58] sm:$0xff]
  %v39 = vld [vmem:[%s1 + $0x60] sm:$0xff]
  %v40 = vld [vmem:[%s1 + $0x68] sm:$0xff]
  %v41 = vld [vmem:[%s1 + $0x70] sm:$0xff]
  %v42 = vld [vmem:[%s1 + $0x78] sm:$0xff]
  %v43 = vld [vmem:[%s1 + $0x80] sm:$0xff]
  %v44 = vld [vmem:[%s1 + $0x88] sm:$0xff]
  %v45 = vld [vmem:[%s1 + $0x90] sm:$0xff]
  %v46 = vld [vmem:[%s1 + $0x98] sm:$0xff]
  %v47 = vld [vmem:[%s1 + $0xa0] sm:$0xff]
  %v48 = vld [vmem:[%s1 + $0xa8] sm:$0xff]
  %v49 = vld [vmem:[%s1 + $0xb0] sm:$0xff]
  %v50 = vld [vmem:[%s1 + $0xb8] sm:$0xff]
  %v51 = vld [vmem:[%s1 + $0xc0] sm:$0xff]
  %v52 = vld [vmem:[%s1 + $0xc8] sm:$0xff]
  %v53 = vld [vmem:[%s1 + $0xd0] sm:$0xff]
  %v54 = vld [vmem:[%s1 + $0xd8] sm:$0xff]
  %v55 = vld [vmem:[%s1 + $0xe0] sm:$0xff]
  %v56 = vld [vmem:[%s1 + $0xe8] sm:$0xff]
  %v57 = vld [vmem:[%s1 + $0xf0] sm:$0xff]
  %v58 = vld [vmem:[%s1 + $0xf8] sm:$0xff]
  %v59 = vld [vmem:[%s1 + $0x100] sm:$0xff]
  %v60 = vld [vmem:[%s1 + $0x108] sm:$0xff]
  %v61 = vld [vmem:[%s1 + $0x110] sm:$0xff]
  %v62 = vld [vmem:[%s1 + $0x118] sm:$0xff]
  %v63 = vld [vmem:[%s1 + $0x120] sm:$0xff]
  %v64 = vld [vmem:[%s1 + $0x128] sm:$0xff]
  %v65 = vld [vmem:[%s1 + $0x130] sm:$0xff]
  %v66 = vld [vmem:[%s1 + $0x138] sm:$0xff]
  %v67 = vld [vmem:[%s1 + $0x140] sm:$0xff]
  %v68 = vld [vmem:[%s1 + $0x148] sm:$0xff]
  %v69 = vld [vmem:[%s1 + $0x150] sm:$0xff]
  %v70 = vld [vmem:[%s1 + $0x158] sm:$0xff]
  %v71 = vld [vmem:[%s1 + $0x160] sm:$0xff]
  %v72 = vld [vmem:[%s1 + $0x168] sm:$0xff]
  %v73 = vld [vmem:[%s1 + $0x170] sm:$0xff]
  %v74 = vld [vmem:[%s1 + $0x178] sm:$0xff]
  %v75 = vld [vmem:[%s1 + $0x180] sm:$0xff]
  %v76 = vld [vmem:[%s1 + $0x188] sm:$0xff]
  %v77 = vld [vmem:[%s1 + $0x190] sm:$0xff]
  %v78 = vld [vmem:[%s1 + $0x198] sm:$0xff]
  %v79 = vld [vmem:[%s1 + $0x1a0] sm:$0xff]
  %v80 = vld [vmem:[%s1 + $0x1a8] sm:$0xff]
  %v81 = vld [vmem:[%s1 + $0x1b0] sm:$0xff]
  %v82 = vld [vmem:[%s1 + $0x1b8] sm:$0xff]
  %v83 = vld [vmem:[%s1 + $0x1c0] sm:$0xff]
  %v84 = vld [vmem:[%s1 + $0x1c8] sm:$0xff]
  %v85 = vld [vmem:[%s1 + $0x1d0] sm:$0xff]
  %v86 = vld [vmem:[%s1 + $0x1d8] sm:$0xff]
  %v87 = vld [vmem:[%s1 + $0x1e0] sm:$0xff]
  %v88 = vld [vmem:[%s1 + $0x1e8] sm:$0xff]
  %v89 = vld [vmem:[%s1 + $0x1f0] sm:$0xff]
  %v90 = vld [vmem:[%s1 + $0x1f8] sm:$0xff]
  %91 = vmatpush.msra.mxu0 %v87
  %92 = vmatpush.msra.mxu0 %v83
  %93 = vmatpush.msra.mxu0 %v79
  %94 = vmatpush.msra.mxu0 %v75
  %95 = vmatpush.msra.mxu0 %v71
  %96 = vmatpush.msra.mxu0 %v67
  %97 = vmatpush.msra.mxu0 %v63
  %98 = vmatpush.msra.mxu0 %v59
  %99 = vmatpush.msra.mxu0 %v55
  %100 = vmatpush.msra.mxu0 %v51
  %101 = vmatpush.msra.mxu0 %v47
  %102 = vmatpush.msra.mxu0 %v43
  %103 = vmatpush.msra.mxu0 %v39
  %104 = vmatpush.msra.mxu0 %v35
  %105 = vmatpush.msra.mxu0 %v31
  %106 = vmatpush.msra.mxu0 %v27
  %107 = vmatmul.f32.gmra.mxu0 0.0
  %v108 = vpop.f32.mrf.mxu0
  %v109 = vadd.f32 0.0, %v108
  %110 = vdwg.mxu0
  %111 = vmatpush.msra.mxu0 %v88
  %112 = vmatpush.msra.mxu0 %v84
  %113 = vmatpush.msra.mxu0 %v80
  %114 = vmatpush.msra.mxu0 %v76
  %115 = vmatpush.msra.mxu0 %v72
  %116 = vmatpush.msra.mxu0 %v68
  %117 = vmatpush.msra.mxu0 %v64
  %118 = vmatpush.msra.mxu0 %v60
  %119 = vmatpush.msra.mxu0 %v56
  %120 = vmatpush.msra.mxu0 %v52
  %121 = vmatpush.msra.mxu0 %v48
  %122 = vmatpush.msra.mxu0 %v44
  %123 = vmatpush.msra.mxu0 %v40
  %124 = vmatpush.msra.mxu0 %v36
  %125 = vmatpush.msra.mxu0 %v32
  %126 = vmatpush.msra.mxu0 %v28
  %127 = vmatmul.f32.gmra.mxu0 0.0
  %v128 = vpop.f32.mrf.mxu0
  %v129 = vadd.f32 0.0, %v128
  %130 = vdwg.mxu0
  %131 = vmatpush.msra.mxu0 %v89
  %132 = vmatpush.msra.mxu0 %v85
  %133 = vmatpush.msra.mxu0 %v81
  %134 = vmatpush.msra.mxu0 %v77
  %135 = vmatpush.msra.mxu0 %v73
  %136 = vmatpush.msra.mxu0 %v69
  %137 = vmatpush.msra.mxu0 %v65
  %138 = vmatpush.msra.mxu0 %v61
  %139 = vmatpush.msra.mxu0 %v57
  %140 = vmatpush.msra.mxu0 %v53
  %141 = vmatpush.msra.mxu0 %v49
  %142 = vmatpush.msra.mxu0 %v45
  %143 = vmatpush.msra.mxu0 %v41
  %144 = vmatpush.msra.mxu0 %v37
  %145 = vmatpush.msra.mxu0 %v33
  %146 = vmatpush.msra.mxu0 %v29
  %147 = vmatmul.f32.gmra.mxu0 0.0
  %v148 = vpop.f32.mrf.mxu0
  %v149 = vadd.f32 0.0, %v148
  %150 = vdwg.mxu0
  %151 = vmatpush.msra.mxu0 %v90
  %152 = vmatpush.msra.mxu0 %v86
  %153 = vmatpush.msra.mxu0 %v82
  %154 = vmatpush.msra.mxu0 %v78
  %155 = vmatpush.msra.mxu0 %v74
  %156 = vmatpush.msra.mxu0 %v70
  %157 = vmatpush.msra.mxu0 %v66
  %158 = vmatpush.msra.mxu0 %v62
  %159 = vmatpush.msra.mxu0 %v58
  %160 = vmatpush.msra.mxu0 %v54
  %161 = vmatpush.msra.mxu0 %v50
  %162 = vmatpush.msra.mxu0 %v46
  %163 = vmatpush.msra.mxu0 %v42
  %164 = vmatpush.msra.mxu0 %v38
  %165 = vmatpush.msra.mxu0 %v34
  %166 = vmatpush.msra.mxu0 %v30
  %167 = vmatmul.f32.gmra.mxu0 0.0
  %v168 = vpop.f32.mrf.mxu0
  %v169 = vadd.f32 0.0, %v168
  %170 = vdwg.mxu0
  %v175 = vrot.slane %v129, 6
  %v176 = vrot.slane %v149, 4
  %v177 = vrot.slane %v169, 2
  %vm178 = vcmask 1041408
  %v179 = vsel %vm178, %v109, %v175
  %vm180 = vcmask 1045508
  %v181 = vsel %vm180, %v176, %v177
  %vm182 = vcmask 1043456
  %v183 = vsel %vm182, %v179, %v181
  %v185 = vadd.f32 %v26, %v183
  %v186 = vxor.u32 %v185, 2147483648
  %v187 = vmul.f32 %v186, 1.442695
  %v188 = vpow.pop %v187
  %v189 = vadd.f32 %v188, 1.0
  %v190 = vrcp.pop %v189
  %v191 = vmul.f32 %v189, %v190
  %v192 = vsub.f32 1.0, %v191
  %v193 = vmul.f32 %v190, %v192
  %v194 = vadd.f32 %v190, %v193
  %vm195 = vweird.f32 %v189
  %vm196 = vweird.f32 %v190
  %vm197 = vmor %vm195, %vm196
  %v198 = vsel %vm197, %v190, %v194
  %v199 = vand.u32 2147483647, %v189
  %vm200 = vcmp.eq.f32.partialorder %v199, 8.507059e+37
  %v201 = vand.u32 %v189, 2147483648
  %v202 = vor.u32 1.1754944e-38, %v201
  %v203 = vsel %vm200, %v202, %v198
  %v204 = vmul.f32 1.0, %v203
  %v206 = vrot.slane %v185, 2
  %v208 = vxor.u32 %v206, 2147483648
  %v209 = vmul.f32 %v208, 1.442695
  %v210 = vpow.pop %v209
  %v211 = vadd.f32 %v210, 1.0
  %v212 = vrcp.pop %v211
  %v213 = vmul.f32 %v211, %v212
  %v214 = vsub.f32 1.0, %v213
  %v215 = vmul.f32 %v212, %v214
  %v216 = vadd.f32 %v212, %v215
  %vm217 = vweird.f32 %v211
  %vm218 = vweird.f32 %v212
  %vm219 = vmor %vm217, %vm218
  %v220 = vsel %vm219, %v212, %v216
  %v221 = vand.u32 2147483647, %v211
  %vm222 = vcmp.eq.f32.partialorder %v221, 8.507059e+37
  %v223 = vand.u32 %v211, 2147483648
  %v224 = vor.u32 1.1754944e-38, %v223
  %v225 = vsel %vm222, %v224, %v220
  %v226 = vmul.f32 1.0, %v225
  %v227 = vrot.slane %v185, 4
  %v229 = vtanh.pop %v227
  %v230 = vrot.slane %v185, 6
  %v232 = vxor.u32 %v230, 2147483648
  %v233 = vmul.f32 %v232, 1.442695
  %v234 = vpow.pop %v233
  %v235 = vadd.f32 %v234, 1.0
  %v236 = vrcp.pop %v235
  %v237 = vmul.f32 %v235, %v236
  %v238 = vsub.f32 1.0, %v237
  %v239 = vmul.f32 %v236, %v238
  %v240 = vadd.f32 %v236, %v239
  %vm241 = vweird.f32 %v235
  %vm242 = vweird.f32 %v236
  %vm243 = vmor %vm241, %vm242
  %v244 = vsel %vm243, %v236, %v240
  %v245 = vand.u32 2147483647, %v235
  %vm246 = vcmp.eq.f32.partialorder %v245, 8.507059e+37
  %v247 = vand.u32 %v235, 2147483648
  %v248 = vor.u32 1.1754944e-38, %v247
  %v249 = vsel %vm246, %v248, %v244
  %v250 = vmul.f32 1.0, %v249
  %v251 = vmul.f32 %v226, 0.0
  %v252 = vmul.f32 %v204, %v229
  %v253 = vadd.f32 %v251, %v252
  %v254 = vtanh.pop %v253
  %v255 = vmul.f32 %v250, %v254
  %s256 = scalar_lea.vmem %s0, 120
  %v257 = vld [vmem:[%s256] sm:$0xff]
  %s258 = scalar_lea.vmem %s1, 512
  %v259 = vld [vmem:[%s258] sm:$0xff]
  %v260 = vld [vmem:[%s258 + $0x8] sm:$0xff]
  %v261 = vld [vmem:[%s258 + $0x10] sm:$0xff]
  %v262 = vld [vmem:[%s258 + $0x18] sm:$0xff]
  %v263 = vld [vmem:[%s258 + $0x20] sm:$0xff]
  %v264 = vld [vmem:[%s258 + $0x28] sm:$0xff]
  %v265 = vld [vmem:[%s258 + $0x30] sm:$0xff]
  %v266 = vld [vmem:[%s258 + $0x38] sm:$0xff]
  %v267 = vld [vmem:[%s258 + $0x40] sm:$0xff]
  %v268 = vld [vmem:[%s258 + $0x48] sm:$0xff]
  %v269 = vld [vmem:[%s258 + $0x50] sm:$0xff]
  %v270 = vld [vmem:[%s258 + $0x58] sm:$0xff]
  %v271 = vld [vmem:[%s258 + $0x60] sm:$0xff]
  %v272 = vld [vmem:[%s258 + $0x68] sm:$0xff]
  %v273 = vld [vmem:[%s258 + $0x70] sm:$0xff]
  %v274 = vld [vmem:[%s258 + $0x78] sm:$0xff]
  %v275 = vld [vmem:[%s258 + $0x80] sm:$0xff]
  %v276 = vld [vmem:[%s258 + $0x88] sm:$0xff]
  %v277 = vld [vmem:[%s258 + $0x90] sm:$0xff]
  %v278 = vld [vmem:[%s258 + $0x98] sm:$0xff]
  %v279 = vld [vmem:[%s258 + $0xa0] sm:$0xff]
  %v280 = vld [vmem:[%s258 + $0xa8] sm:$0xff]
  %v281 = vld [vmem:[%s258 + $0xb0] sm:$0xff]
  %v282 = vld [vmem:[%s258 + $0xb8] sm:$0xff]
  %v283 = vld [vmem:[%s258 + $0xc0] sm:$0xff]
  %v284 = vld [vmem:[%s258 + $0xc8] sm:$0xff]
  %v285 = vld [vmem:[%s258 + $0xd0] sm:$0xff]
  %v286 = vld [vmem:[%s258 + $0xd8] sm:$0xff]
  %v287 = vld [vmem:[%s258 + $0xe0] sm:$0xff]
  %v288 = vld [vmem:[%s258 + $0xe8] sm:$0xff]
  %v289 = vld [vmem:[%s258 + $0xf0] sm:$0xff]
  %v290 = vld [vmem:[%s258 + $0xf8] sm:$0xff]
  %v291 = vld [vmem:[%s258 + $0x100] sm:$0xff]
  %v292 = vld [vmem:[%s258 + $0x108] sm:$0xff]
  %v293 = vld [vmem:[%s258 + $0x110] sm:$0xff]
  %v294 = vld [vmem:[%s258 + $0x118] sm:$0xff]
  %v295 = vld [vmem:[%s258 + $0x120] sm:$0xff]
  %v296 = vld [vmem:[%s258 + $0x128] sm:$0xff]
  %v297 = vld [vmem:[%s258 + $0x130] sm:$0xff]
  %v298 = vld [vmem:[%s258 + $0x138] sm:$0xff]
  %v299 = vld [vmem:[%s258 + $0x140] sm:$0xff]
  %v300 = vld [vmem:[%s258 + $0x148] sm:$0xff]
  %v301 = vld [vmem:[%s258 + $0x150] sm:$0xff]
  %v302 = vld [vmem:[%s258 + $0x158] sm:$0xff]
  %v303 = vld [vmem:[%s258 + $0x160] sm:$0xff]
  %v304 = vld [vmem:[%s258 + $0x168] sm:$0xff]
  %v305 = vld [vmem:[%s258 + $0x170] sm:$0xff]
  %v306 = vld [vmem:[%s258 + $0x178] sm:$0xff]
  %v307 = vld [vmem:[%s258 + $0x180] sm:$0xff]
  %v308 = vld [vmem:[%s258 + $0x188] sm:$0xff]
  %v309 = vld [vmem:[%s258 + $0x190] sm:$0xff]
  %v310 = vld [vmem:[%s258 + $0x198] sm:$0xff]
  %v311 = vld [vmem:[%s258 + $0x1a0] sm:$0xff]
  %v312 = vld [vmem:[%s258 + $0x1a8] sm:$0xff]
  %v313 = vld [vmem:[%s258 + $0x1b0] sm:$0xff]
  %v314 = vld [vmem:[%s258 + $0x1b8] sm:$0xff]
  %v315 = vld [vmem:[%s258 + $0x1c0] sm:$0xff]
  %v316 = vld [vmem:[%s258 + $0x1c8] sm:$0xff]
  %v317 = vld [vmem:[%s258 + $0x1d0] sm:$0xff]
  %v318 = vld [vmem:[%s258 + $0x1d8] sm:$0xff]
  %v319 = vld [vmem:[%s258 + $0x1e0] sm:$0xff]
  %v320 = vld [vmem:[%s258 + $0x1e8] sm:$0xff]
  %v321 = vld [vmem:[%s258 + $0x1f0] sm:$0xff]
  %v322 = vld [vmem:[%s258 + $0x1f8] sm:$0xff]
  %323 = vmatpush.msra.mxu0 %v319
  %324 = vmatpush.msra.mxu0 %v315
  %325 = vmatpush.msra.mxu0 %v311
  %326 = vmatpush.msra.mxu0 %v307
  %327 = vmatpush.msra.mxu0 %v303
  %328 = vmatpush.msra.mxu0 %v299
  %329 = vmatpush.msra.mxu0 %v295
  %330 = vmatpush.msra.mxu0 %v291
  %331 = vmatpush.msra.mxu0 %v287
  %332 = vmatpush.msra.mxu0 %v283
  %333 = vmatpush.msra.mxu0 %v279
  %334 = vmatpush.msra.mxu0 %v275
  %335 = vmatpush.msra.mxu0 %v271
  %336 = vmatpush.msra.mxu0 %v267
  %337 = vmatpush.msra.mxu0 %v263
  %338 = vmatpush.msra.mxu0 %v259
  %339 = vmatmul.f32.gmra.mxu0 0.0
  %v340 = vpop.f32.mrf.mxu0
  %v341 = vadd.f32 0.0, %v340
  %342 = vdwg.mxu0
  %343 = vmatpush.msra.mxu0 %v320
  %344 = vmatpush.msra.mxu0 %v316
  %345 = vmatpush.msra.mxu0 %v312
  %346 = vmatpush.msra.mxu0 %v308
  %347 = vmatpush.msra.mxu0 %v304
  %348 = vmatpush.msra.mxu0 %v300
  %349 = vmatpush.msra.mxu0 %v296
  %350 = vmatpush.msra.mxu0 %v292
  %351 = vmatpush.msra.mxu0 %v288
  %352 = vmatpush.msra.mxu0 %v284
  %353 = vmatpush.msra.mxu0 %v280
  %354 = vmatpush.msra.mxu0 %v276
  %355 = vmatpush.msra.mxu0 %v272
  %356 = vmatpush.msra.mxu0 %v268
  %357 = vmatpush.msra.mxu0 %v264
  %358 = vmatpush.msra.mxu0 %v260
  %359 = vmatmul.f32.gmra.mxu0 0.0
  %v360 = vpop.f32.mrf.mxu0
  %v361 = vadd.f32 0.0, %v360
  %362 = vdwg.mxu0
  %363 = vmatpush.msra.mxu0 %v321
  %364 = vmatpush.msra.mxu0 %v317
  %365 = vmatpush.msra.mxu0 %v313
  %366 = vmatpush.msra.mxu0 %v309
  %367 = vmatpush.msra.mxu0 %v305
  %368 = vmatpush.msra.mxu0 %v301
  %369 = vmatpush.msra.mxu0 %v297
  %370 = vmatpush.msra.mxu0 %v293
  %371 = vmatpush.msra.mxu0 %v289
  %372 = vmatpush.msra.mxu0 %v285
  %373 = vmatpush.msra.mxu0 %v281
  %374 = vmatpush.msra.mxu0 %v277
  %375 = vmatpush.msra.mxu0 %v273
  %376 = vmatpush.msra.mxu0 %v269
  %377 = vmatpush.msra.mxu0 %v265
  %378 = vmatpush.msra.mxu0 %v261
  %379 = vmatmul.f32.gmra.mxu0 0.0
  %v380 = vpop.f32.mrf.mxu0
  %v381 = vadd.f32 0.0, %v380
  %382 = vdwg.mxu0
  %383 = vmatpush.msra.mxu0 %v322
  %384 = vmatpush.msra.mxu0 %v318
  %385 = vmatpush.msra.mxu0 %v314
  %386 = vmatpush.msra.mxu0 %v310
  %387 = vmatpush.msra.mxu0 %v306
  %388 = vmatpush.msra.mxu0 %v302
  %389 = vmatpush.msra.mxu0 %v298
  %390 = vmatpush.msra.mxu0 %v294
  %391 = vmatpush.msra.mxu0 %v290
  %392 = vmatpush.msra.mxu0 %v286
  %393 = vmatpush.msra.mxu0 %v282
  %394 = vmatpush.msra.mxu0 %v278
  %395 = vmatpush.msra.mxu0 %v274
  %396 = vmatpush.msra.mxu0 %v270
  %397 = vmatpush.msra.mxu0 %v266
  %398 = vmatpush.msra.mxu0 %v262
  %399 = vmatmul.f32.gmra.mxu0 0.0
  %v400 = vpop.f32.mrf.mxu0
  %v401 = vadd.f32 0.0, %v400
  %402 = vdwg.mxu0
  %v407 = vrot.slane %v361, 6
  %v408 = vrot.slane %v381, 4
  %v409 = vrot.slane %v401, 2
  %v410 = vsel %vm178, %v341, %v407
  %v411 = vsel %vm180, %v408, %v409
  %v412 = vsel %vm182, %v410, %v411
  %v414 = vadd.f32 %v257, %v412
  %v415 = vxor.u32 %v414, 2147483648
  %v416 = vmul.f32 %v415, 1.442695
  %v417 = vpow.pop %v416
  %v418 = vadd.f32 %v417, 1.0
  %v419 = vrcp.pop %v418
  %v420 = vmul.f32 %v418, %v419
  %v421 = vsub.f32 1.0, %v420
  %v422 = vmul.f32 %v419, %v421
  %v423 = vadd.f32 %v419, %v422
  %vm424 = vweird.f32 %v418
  %vm425 = vweird.f32 %v419
  %vm426 = vmor %vm424, %vm425
  %v427 = vsel %vm426, %v419, %v423
  %v428 = vand.u32 2147483647, %v418
  %vm429 = vcmp.eq.f32.partialorder %v428, 8.507059e+37
  %v430 = vand.u32 %v418, 2147483648
  %v431 = vor.u32 1.1754944e-38, %v430
  %v432 = vsel %vm429, %v431, %v427
  %v433 = vmul.f32 1.0, %v432
  %v435 = vrot.slane %v414, 2
  %v437 = vxor.u32 %v435, 2147483648
  %v438 = vmul.f32 %v437, 1.442695
  %v439 = vpow.pop %v438
  %v440 = vadd.f32 %v439, 1.0
  %v441 = vrcp.pop %v440
  %v442 = vmul.f32 %v440, %v441
  %v443 = vsub.f32 1.0, %v442
  %v444 = vmul.f32 %v441, %v443
  %v445 = vadd.f32 %v441, %v444
  %vm446 = vweird.f32 %v440
  %vm447 = vweird.f32 %v441
  %vm448 = vmor %vm446, %vm447
  %v449 = vsel %vm448, %v441, %v445
  %v450 = vand.u32 2147483647, %v440
  %vm451 = vcmp.eq.f32.partialorder %v450, 8.507059e+37
  %v452 = vand.u32 %v440, 2147483648
  %v453 = vor.u32 1.1754944e-38, %v452
  %v454 = vsel %vm451, %v453, %v449
  %v455 = vmul.f32 1.0, %v454
  %v456 = vrot.slane %v414, 4
  %v458 = vtanh.pop %v456
  %v459 = vrot.slane %v414, 6
  %v461 = vxor.u32 %v459, 2147483648
  %v462 = vmul.f32 %v461, 1.442695
  %v463 = vpow.pop %v462
  %v464 = vadd.f32 %v463, 1.0
  %v465 = vrcp.pop %v464
  %v466 = vmul.f32 %v464, %v465
  %v467 = vsub.f32 1.0, %v466
  %v468 = vmul.f32 %v465, %v467
  %v469 = vadd.f32 %v465, %v468
  %vm470 = vweird.f32 %v464
  %vm471 = vweird.f32 %v465
  %vm472 = vmor %vm470, %vm471
  %v473 = vsel %vm472, %v465, %v469
  %v474 = vand.u32 2147483647, %v464
  %vm475 = vcmp.eq.f32.partialorder %v474, 8.507059e+37
  %v476 = vand.u32 %v464, 2147483648
  %v477 = vor.u32 1.1754944e-38, %v476
  %v478 = vsel %vm475, %v477, %v473
  %v479 = vmul.f32 1.0, %v478
  %v480 = vmul.f32 %v455, 0.0
  %v481 = vmul.f32 %v433, %v458
  %v482 = vadd.f32 %v480, %v481
  %v483 = vtanh.pop %v482
  %v484 = vmul.f32 %v479, %v483
  %485 = vrot.lane.b32.xlu0 %v255, 127
  %v486 = vpop.permute.xlu0 %485
  %487 = vrot.lane.b32.xlu0 %v255, 1
  %v488 = vpop.permute.xlu0 %487
  %v489 = vsel %vm25, %v486, %v488
  %v490 = vsub.f32 %v255, %v489
  %v491 = vxor.u32 %v490, 2147483648
  %v492 = vmul.f32 %v491, 1.442695
  %v493 = vpow.pop %v492
  %v494 = vadd.f32 %v493, 1.0
  %v495 = vrcp.pop %v494
  %v496 = vmul.f32 %v494, %v495
  %v497 = vsub.f32 1.0, %v496
  %v498 = vmul.f32 %v495, %v497
  %v499 = vadd.f32 %v495, %v498
  %vm500 = vweird.f32 %v494
  %vm501 = vweird.f32 %v495
  %vm502 = vmor %vm500, %vm501
  %v503 = vsel %vm502, %v495, %v499
  %v504 = vand.u32 2147483647, %v494
  %vm505 = vcmp.eq.f32.partialorder %v504, 8.507059e+37
  %v506 = vand.u32 %v494, 2147483648
  %v507 = vor.u32 1.1754944e-38, %v506
  %v508 = vsel %vm505, %v507, %v503
  %v509 = vmul.f32 1.0, %v508
  %510 = vst [vmem:[%s2] sm:$0x3] %v509
  %511 = vrot.lane.b32.xlu0 %v484, 127
  %v512 = vpop.permute.xlu0 %511
  %513 = vrot.lane.b32.xlu0 %v484, 1
  %v514 = vpop.permute.xlu0 %513
  %v515 = vsel %vm25, %v512, %v514
  %v516 = vsub.f32 %v484, %v515
  %v517 = vxor.u32 %v516, 2147483648
  %v518 = vmul.f32 %v517, 1.442695
  %v519 = vpow.pop %v518
  %v520 = vadd.f32 %v519, 1.0
  %v521 = vrcp.pop %v520
  %v522 = vmul.f32 %v520, %v521
  %v523 = vsub.f32 1.0, %v522
  %v524 = vmul.f32 %v521, %v523
  %v525 = vadd.f32 %v521, %v524
  %vm526 = vweird.f32 %v520
  %vm527 = vweird.f32 %v521
  %vm528 = vmor %vm526, %vm527
  %v529 = vsel %vm528, %v521, %v525
  %v530 = vand.u32 2147483647, %v520
  %vm531 = vcmp.eq.f32.partialorder %v530, 8.507059e+37
  %v532 = vand.u32 %v520, 2147483648
  %v533 = vor.u32 1.1754944e-38, %v532
  %v534 = vsel %vm531, %v533, %v529
  %v535 = vmul.f32 1.0, %v534
  %s536 = scalar_lea.vmem %s2, 30
  %537 = vst [vmem:[%s536] sm:$0x3] %v535
  %s538 = scalar_lea.vmem %s0, 8
  %v539 = vld [vmem:[%s538] sm:$0xff]
  %v540 = vld [vmem:[%s1] sm:$0xff]
  %v541 = vld [vmem:[%s1 + $0x8] sm:$0xff]
  %v542 = vld [vmem:[%s1 + $0x10] sm:$0xff]
  %v543 = vld [vmem:[%s1 + $0x18] sm:$0xff]
  %v544 = vld [vmem:[%s1 + $0x20] sm:$0xff]
  %v545 = vld [vmem:[%s1 + $0x28] sm:$0xff]
  %v546 = vld [vmem:[%s1 + $0x30] sm:$0xff]
  %v547 = vld [vmem:[%s1 + $0x38] sm:$0xff]
  %v548 = vld [vmem:[%s1 + $0x40] sm:$0xff]
  %v549 = vld [vmem:[%s1 + $0x48] sm:$0xff]
  %v550 = vld [vmem:[%s1 + $0x50] sm:$0xff]
  %v551 = vld [vmem:[%s1 + $0x58] sm:$0xff]
  %v552 = vld [vmem:[%s1 + $0x60] sm:$0xff]
  %v553 = vld [vmem:[%s1 + $0x68] sm:$0xff]
  %v554 = vld [vmem:[%s1 + $0x70] sm:$0xff]
  %v555 = vld [vmem:[%s1 + $0x78] sm:$0xff]
  %v556 = vld [vmem:[%s1 + $0x80] sm:$0xff]
  %v557 = vld [vmem:[%s1 + $0x88] sm:$0xff]
  %v558 = vld [vmem:[%s1 + $0x90] sm:$0xff]
  %v559 = vld [vmem:[%s1 + $0x98] sm:$0xff]
  %v560 = vld [vmem:[%s1 + $0xa0] sm:$0xff]
  %v561 = vld [vmem:[%s1 + $0xa8] sm:$0xff]
  %v562 = vld [vmem:[%s1 + $0xb0] sm:$0xff]
  %v563 = vld [vmem:[%s1 + $0xb8] sm:$0xff]
  %v564 = vld [vmem:[%s1 + $0xc0] sm:$0xff]
  %v565 = vld [vmem:[%s1 + $0xc8] sm:$0xff]
  %v566 = vld [vmem:[%s1 + $0xd0] sm:$0xff]
  %v567 = vld [vmem:[%s1 + $0xd8] sm:$0xff]
  %v568 = vld [vmem:[%s1 + $0xe0] sm:$0xff]
  %v569 = vld [vmem:[%s1 + $0xe8] sm:$0xff]
  %v570 = vld [vmem:[%s1 + $0xf0] sm:$0xff]
  %v571 = vld [vmem:[%s1 + $0xf8] sm:$0xff]
  %v572 = vld [vmem:[%s1 + $0x100] sm:$0xff]
  %v573 = vld [vmem:[%s1 + $0x108] sm:$0xff]
  %v574 = vld [vmem:[%s1 + $0x110] sm:$0xff]
  %v575 = vld [vmem:[%s1 + $0x118] sm:$0xff]
  %v576 = vld [vmem:[%s1 + $0x120] sm:$0xff]
  %v577 = vld [vmem:[%s1 + $0x128] sm:$0xff]
  %v578 = vld [vmem:[%s1 + $0x130] sm:$0xff]
  %v579 = vld [vmem:[%s1 + $0x138] sm:$0xff]
  %v580 = vld [vmem:[%s1 + $0x140] sm:$0xff]
  %v581 = vld [vmem:[%s1 + $0x148] sm:$0xff]
  %v582 = vld [vmem:[%s1 + $0x150] sm:$0xff]
  %v583 = vld [vmem:[%s1 + $0x158] sm:$0xff]
  %v584 = vld [vmem:[%s1 + $0x160] sm:$0xff]
  %v585 = vld [vmem:[%s1 + $0x168] sm:$0xff]
  %v586 = vld [vmem:[%s1 + $0x170] sm:$0xff]
  %v587 = vld [vmem:[%s1 + $0x178] sm:$0xff]
  %v588 = vld [vmem:[%s1 + $0x180] sm:$0xff]
  %v589 = vld [vmem:[%s1 + $0x188] sm:$0xff]
  %v590 = vld [vmem:[%s1 + $0x190] sm:$0xff]
  %v591 = vld [vmem:[%s1 + $0x198] sm:$0xff]
  %v592 = vld [vmem:[%s1 + $0x1a0] sm:$0xff]
  %v593 = vld [vmem:[%s1 + $0x1a8] sm:$0xff]
  %v594 = vld [vmem:[%s1 + $0x1b0] sm:$0xff]
  %v595 = vld [vmem:[%s1 + $0x1b8] sm:$0xff]
  %v596 = vld [vmem:[%s1 + $0x1c0] sm:$0xff]
  %v597 = vld [vmem:[%s1 + $0x1c8] sm:$0xff]
  %v598 = vld [vmem:[%s1 + $0x1d0] sm:$0xff]
  %v599 = vld [vmem:[%s1 + $0x1d8] sm:$0xff]
  %v600 = vld [vmem:[%s1 + $0x1e0] sm:$0xff]
  %v601 = vld [vmem:[%s1 + $0x1e8] sm:$0xff]
  %v602 = vld [vmem:[%s1 + $0x1f0] sm:$0xff]
  %v603 = vld [vmem:[%s1 + $0x1f8] sm:$0xff]
  %604 = vmatpush.msra.mxu0 %v600
  %605 = vmatpush.msra.mxu0 %v596
  %606 = vmatpush.msra.mxu0 %v592
  %607 = vmatpush.msra.mxu0 %v588
  %608 = vmatpush.msra.mxu0 %v584
  %609 = vmatpush.msra.mxu0 %v580
  %610 = vmatpush.msra.mxu0 %v576
  %611 = vmatpush.msra.mxu0 %v572
  %612 = vmatpush.msra.mxu0 %v568
  %613 = vmatpush.msra.mxu0 %v564
  %614 = vmatpush.msra.mxu0 %v560
  %615 = vmatpush.msra.mxu0 %v556
  %616 = vmatpush.msra.mxu0 %v552
  %617 = vmatpush.msra.mxu0 %v548
  %618 = vmatpush.msra.mxu0 %v544
  %619 = vmatpush.msra.mxu0 %v540
  %620 = vmatmul.f32.gmra.mxu0 %v255
  %v621 = vpop.f32.mrf.mxu0
  %v622 = vadd.f32 0.0, %v621
  %623 = vdwg.mxu0
  %624 = vmatpush.msra.mxu0 %v601
  %625 = vmatpush.msra.mxu0 %v597
  %626 = vmatpush.msra.mxu0 %v593
  %627 = vmatpush.msra.mxu0 %v589
  %628 = vmatpush.msra.mxu0 %v585
  %629 = vmatpush.msra.mxu0 %v581
  %630 = vmatpush.msra.mxu0 %v577
  %631 = vmatpush.msra.mxu0 %v573
  %632 = vmatpush.msra.mxu0 %v569
  %633 = vmatpush.msra.mxu0 %v565
  %634 = vmatpush.msra.mxu0 %v561
  %635 = vmatpush.msra.mxu0 %v557
  %636 = vmatpush.msra.mxu0 %v553
  %637 = vmatpush.msra.mxu0 %v549
  %638 = vmatpush.msra.mxu0 %v545
  %639 = vmatpush.msra.mxu0 %v541
  %640 = vmatmul.f32.gmra.mxu0 %v255
  %v641 = vpop.f32.mrf.mxu0
  %v642 = vadd.f32 0.0, %v641
  %643 = vdwg.mxu0
  %644 = vmatpush.msra.mxu0 %v602
  %645 = vmatpush.msra.mxu0 %v598
  %646 = vmatpush.msra.mxu0 %v594
  %647 = vmatpush.msra.mxu0 %v590
  %648 = vmatpush.msra.mxu0 %v586
  %649 = vmatpush.msra.mxu0 %v582
  %650 = vmatpush.msra.mxu0 %v578
  %651 = vmatpush.msra.mxu0 %v574
  %652 = vmatpush.msra.mxu0 %v570
  %653 = vmatpush.msra.mxu0 %v566
  %654 = vmatpush.msra.mxu0 %v562
  %655 = vmatpush.msra.mxu0 %v558
  %656 = vmatpush.msra.mxu0 %v554
  %657 = vmatpush.msra.mxu0 %v550
  %658 = vmatpush.msra.mxu0 %v546
  %659 = vmatpush.msra.mxu0 %v542
  %660 = vmatmul.f32.gmra.mxu0 %v255
  %v661 = vpop.f32.mrf.mxu0
  %v662 = vadd.f32 0.0, %v661
  %663 = vdwg.mxu0
  %664 = vmatpush.msra.mxu0 %v603
  %665 = vmatpush.msra.mxu0 %v599
  %666 = vmatpush.msra.mxu0 %v595
  %667 = vmatpush.msra.mxu0 %v591
  %668 = vmatpush.msra.mxu0 %v587
  %669 = vmatpush.msra.mxu0 %v583
  %670 = vmatpush.msra.mxu0 %v579
  %671 = vmatpush.msra.mxu0 %v575
  %672 = vmatpush.msra.mxu0 %v571
  %673 = vmatpush.msra.mxu0 %v567
  %674 = vmatpush.msra.mxu0 %v563
  %675 = vmatpush.msra.mxu0 %v559
  %676 = vmatpush.msra.mxu0 %v555
  %677 = vmatpush.msra.mxu0 %v551
  %678 = vmatpush.msra.mxu0 %v547
  %679 = vmatpush.msra.mxu0 %v543
  %680 = vmatmul.f32.gmra.mxu0 %v255
  %v681 = vpop.f32.mrf.mxu0
  %v682 = vadd.f32 0.0, %v681
  %683 = vdwg.mxu0
  %v688 = vrot.slane %v642, 6
  %v689 = vrot.slane %v662, 4
  %v690 = vrot.slane %v682, 2
  %v691 = vsel %vm178, %v622, %v688
  %v692 = vsel %vm180, %v689, %v690
  %v693 = vsel %vm182, %v691, %v692
  %v695 = vadd.f32 %v539, %v693
  %v696 = vxor.u32 %v695, 2147483648
  %v697 = vmul.f32 %v696, 1.442695
  %v698 = vpow.pop %v697
  %v699 = vadd.f32 %v698, 1.0
  %v700 = vrcp.pop %v699
  %v701 = vmul.f32 %v699, %v700
  %v702 = vsub.f32 1.0, %v701
  %v703 = vmul.f32 %v700, %v702
  %v704 = vadd.f32 %v700, %v703
  %vm705 = vweird.f32 %v699
  %vm706 = vweird.f32 %v700
  %vm707 = vmor %vm705, %vm706
  %v708 = vsel %vm707, %v700, %v704
  %v709 = vand.u32 2147483647, %v699
  %vm710 = vcmp.eq.f32.partialorder %v709, 8.507059e+37
  %v711 = vand.u32 %v699, 2147483648
  %v712 = vor.u32 1.1754944e-38, %v711
  %v713 = vsel %vm710, %v712, %v708
  %v714 = vmul.f32 1.0, %v713
  %v716 = vrot.slane %v695, 2
  %v718 = vxor.u32 %v716, 2147483648
  %v719 = vmul.f32 %v718, 1.442695
  %v720 = vpow.pop %v719
  %v721 = vadd.f32 %v720, 1.0
  %v722 = vrcp.pop %v721
  %v723 = vmul.f32 %v721, %v722
  %v724 = vsub.f32 1.0, %v723
  %v725 = vmul.f32 %v722, %v724
  %v726 = vadd.f32 %v722, %v725
  %vm727 = vweird.f32 %v721
  %vm728 = vweird.f32 %v722
  %vm729 = vmor %vm727, %vm728
  %v730 = vsel %vm729, %v722, %v726
  %v731 = vand.u32 2147483647, %v721
  %vm732 = vcmp.eq.f32.partialorder %v731, 8.507059e+37
  %v733 = vand.u32 %v721, 2147483648
  %v734 = vor.u32 1.1754944e-38, %v733
  %v735 = vsel %vm732, %v734, %v730
  %v736 = vmul.f32 1.0, %v735
  %v737 = vrot.slane %v695, 4
  %v739 = vtanh.pop %v737
  %v740 = vrot.slane %v695, 6
  %v742 = vxor.u32 %v740, 2147483648
  %v743 = vmul.f32 %v742, 1.442695
  %v744 = vpow.pop %v743
  %v745 = vadd.f32 %v744, 1.0
  %v746 = vrcp.pop %v745
  %v747 = vmul.f32 %v745, %v746
  %v748 = vsub.f32 1.0, %v747
  %v749 = vmul.f32 %v746, %v748
  %v750 = vadd.f32 %v746, %v749
  %vm751 = vweird.f32 %v745
  %vm752 = vweird.f32 %v746
  %vm753 = vmor %vm751, %vm752
  %v754 = vsel %vm753, %v746, %v750
  %v755 = vand.u32 2147483647, %v745
  %vm756 = vcmp.eq.f32.partialorder %v755, 8.507059e+37
  %v757 = vand.u32 %v745, 2147483648
  %v758 = vor.u32 1.1754944e-38, %v757
  %v759 = vsel %vm756, %v758, %v754
  %v760 = vmul.f32 1.0, %v759
  %v761 = vmul.f32 %v736, %v253
  %v762 = vmul.f32 %v714, %v739
  %v763 = vadd.f32 %v761, %v762
  %v764 = vtanh.pop %v763
  %v765 = vmul.f32 %v760, %v764
  %s766 = scalar_lea.vmem %s0, 112
  %v767 = vld [vmem:[%s766] sm:$0xff]
  %v768 = vld [vmem:[%s258] sm:$0xff]
  %v769 = vld [vmem:[%s258 + $0x8] sm:$0xff]
  %v770 = vld [vmem:[%s258 + $0x10] sm:$0xff]
  %v771 = vld [vmem:[%s258 + $0x18] sm:$0xff]
  %v772 = vld [vmem:[%s258 + $0x20] sm:$0xff]
  %v773 = vld [vmem:[%s258 + $0x28] sm:$0xff]
  %v774 = vld [vmem:[%s258 + $0x30] sm:$0xff]
  %v775 = vld [vmem:[%s258 + $0x38] sm:$0xff]
  %v776 = vld [vmem:[%s258 + $0x40] sm:$0xff]
  %v777 = vld [vmem:[%s258 + $0x48] sm:$0xff]
  %v778 = vld [vmem:[%s258 + $0x50] sm:$0xff]
  %v779 = vld [vmem:[%s258 + $0x58] sm:$0xff]
  %v780 = vld [vmem:[%s258 + $0x60] sm:$0xff]
  %v781 = vld [vmem:[%s258 + $0x68] sm:$0xff]
  %v782 = vld [vmem:[%s258 + $0x70] sm:$0xff]
  %v783 = vld [vmem:[%s258 + $0x78] sm:$0xff]
  %v784 = vld [vmem:[%s258 + $0x80] sm:$0xff]
  %v785 = vld [vmem:[%s258 + $0x88] sm:$0xff]
  %v786 = vld [vmem:[%s258 + $0x90] sm:$0xff]
  %v787 = vld [vmem:[%s258 + $0x98] sm:$0xff]
  %v788 = vld [vmem:[%s258 + $0xa0] sm:$0xff]
  %v789 = vld [vmem:[%s258 + $0xa8] sm:$0xff]
  %v790 = vld [vmem:[%s258 + $0xb0] sm:$0xff]
  %v791 = vld [vmem:[%s258 + $0xb8] sm:$0xff]
  %v792 = vld [vmem:[%s258 + $0xc0] sm:$0xff]
  %v793 = vld [vmem:[%s258 + $0xc8] sm:$0xff]
  %v794 = vld [vmem:[%s258 + $0xd0] sm:$0xff]
  %v795 = vld [vmem:[%s258 + $0xd8] sm:$0xff]
  %v796 = vld [vmem:[%s258 + $0xe0] sm:$0xff]
  %v797 = vld [vmem:[%s258 + $0xe8] sm:$0xff]
  %v798 = vld [vmem:[%s258 + $0xf0] sm:$0xff]
  %v799 = vld [vmem:[%s258 + $0xf8] sm:$0xff]
  %v800 = vld [vmem:[%s258 + $0x100] sm:$0xff]
  %v801 = vld [vmem:[%s258 + $0x108] sm:$0xff]
  %v802 = vld [vmem:[%s258 + $0x110] sm:$0xff]
  %v803 = vld [vmem:[%s258 + $0x118] sm:$0xff]
  %v804 = vld [vmem:[%s258 + $0x120] sm:$0xff]
  %v805 = vld [vmem:[%s258 + $0x128] sm:$0xff]
  %v806 = vld [vmem:[%s258 + $0x130] sm:$0xff]
  %v807 = vld [vmem:[%s258 + $0x138] sm:$0xff]
  %v808 = vld [vmem:[%s258 + $0x140] sm:$0xff]
  %v809 = vld [vmem:[%s258 + $0x148] sm:$0xff]
  %v810 = vld [vmem:[%s258 + $0x150] sm:$0xff]
  %v811 = vld [vmem:[%s258 + $0x158] sm:$0xff]
  %v812 = vld [vmem:[%s258 + $0x160] sm:$0xff]
  %v813 = vld [vmem:[%s258 + $0x168] sm:$0xff]
  %v814 = vld [vmem:[%s258 + $0x170] sm:$0xff]
  %v815 = vld [vmem:[%s258 + $0x178] sm:$0xff]
  %v816 = vld [vmem:[%s258 + $0x180] sm:$0xff]
  %v817 = vld [vmem:[%s258 + $0x188] sm:$0xff]
  %v818 = vld [vmem:[%s258 + $0x190] sm:$0xff]
  %v819 = vld [vmem:[%s258 + $0x198] sm:$0xff]
  %v820 = vld [vmem:[%s258 + $0x1a0] sm:$0xff]
  %v821 = vld [vmem:[%s258 + $0x1a8] sm:$0xff]
  %v822 = vld [vmem:[%s258 + $0x1b0] sm:$0xff]
  %v823 = vld [vmem:[%s258 + $0x1b8] sm:$0xff]
  %v824 = vld [vmem:[%s258 + $0x1c0] sm:$0xff]
  %v825 = vld [vmem:[%s258 + $0x1c8] sm:$0xff]
  %v826 = vld [vmem:[%s258 + $0x1d0] sm:$0xff]
  %v827 = vld [vmem:[%s258 + $0x1d8] sm:$0xff]
  %v828 = vld [vmem:[%s258 + $0x1e0] sm:$0xff]
  %v829 = vld [vmem:[%s258 + $0x1e8] sm:$0xff]
  %v830 = vld [vmem:[%s258 + $0x1f0] sm:$0xff]
  %v831 = vld [vmem:[%s258 + $0x1f8] sm:$0xff]
  %832 = vmatpush.msra.mxu0 %v828
  %833 = vmatpush.msra.mxu0 %v824
  %834 = vmatpush.msra.mxu0 %v820
  %835 = vmatpush.msra.mxu0 %v816
  %836 = vmatpush.msra.mxu0 %v812
  %837 = vmatpush.msra.mxu0 %v808
  %838 = vmatpush.msra.mxu0 %v804
  %839 = vmatpush.msra.mxu0 %v800
  %840 = vmatpush.msra.mxu0 %v796
  %841 = vmatpush.msra.mxu0 %v792
  %842 = vmatpush.msra.mxu0 %v788
  %843 = vmatpush.msra.mxu0 %v784
  %844 = vmatpush.msra.mxu0 %v780
  %845 = vmatpush.msra.mxu0 %v776
  %846 = vmatpush.msra.mxu0 %v772
  %847 = vmatpush.msra.mxu0 %v768
  %848 = vmatmul.f32.gmra.mxu0 %v484
  %v849 = vpop.f32.mrf.mxu0
  %v850 = vadd.f32 0.0, %v849
  %851 = vdwg.mxu0
  %852 = vmatpush.msra.mxu0 %v829
  %853 = vmatpush.msra.mxu0 %v825
  %854 = vmatpush.msra.mxu0 %v821
  %855 = vmatpush.msra.mxu0 %v817
  %856 = vmatpush.msra.mxu0 %v813
  %857 = vmatpush.msra.mxu0 %v809
  %858 = vmatpush.msra.mxu0 %v805
  %859 = vmatpush.msra.mxu0 %v801
  %860 = vmatpush.msra.mxu0 %v797
  %861 = vmatpush.msra.mxu0 %v793
  %862 = vmatpush.msra.mxu0 %v789
  %863 = vmatpush.msra.mxu0 %v785
  %864 = vmatpush.msra.mxu0 %v781
  %865 = vmatpush.msra.mxu0 %v777
  %866 = vmatpush.msra.mxu0 %v773
  %867 = vmatpush.msra.mxu0 %v769
  %868 = vmatmul.f32.gmra.mxu0 %v484
  %v869 = vpop.f32.mrf.mxu0
  %v870 = vadd.f32 0.0, %v869
  %871 = vdwg.mxu0
  %872 = vmatpush.msra.mxu0 %v830
  %873 = vmatpush.msra.mxu0 %v826
  %874 = vmatpush.msra.mxu0 %v822
  %875 = vmatpush.msra.mxu0 %v818
  %876 = vmatpush.msra.mxu0 %v814
  %877 = vmatpush.msra.mxu0 %v810
  %878 = vmatpush.msra.mxu0 %v806
  %879 = vmatpush.msra.mxu0 %v802
  %880 = vmatpush.msra.mxu0 %v798
  %881 = vmatpush.msra.mxu0 %v794
  %882 = vmatpush.msra.mxu0 %v790
  %883 = vmatpush.msra.mxu0 %v786
  %884 = vmatpush.msra.mxu0 %v782
  %885 = vmatpush.msra.mxu0 %v778
  %886 = vmatpush.msra.mxu0 %v774
  %887 = vmatpush.msra.mxu0 %v770
  %888 = vmatmul.f32.gmra.mxu0 %v484
  %v889 = vpop.f32.mrf.mxu0
  %v890 = vadd.f32 0.0, %v889
  %891 = vdwg.mxu0
  %892 = vmatpush.msra.mxu0 %v831
  %893 = vmatpush.msra.mxu0 %v827
  %894 = vmatpush.msra.mxu0 %v823
  %895 = vmatpush.msra.mxu0 %v819
  %896 = vmatpush.msra.mxu0 %v815
  %897 = vmatpush.msra.mxu0 %v811
  %898 = vmatpush.msra.mxu0 %v807
  %899 = vmatpush.msra.mxu0 %v803
  %900 = vmatpush.msra.mxu0 %v799
  %901 = vmatpush.msra.mxu0 %v795
  %902 = vmatpush.msra.mxu0 %v791
  %903 = vmatpush.msra.mxu0 %v787
  %904 = vmatpush.msra.mxu0 %v783
  %905 = vmatpush.msra.mxu0 %v779
  %906 = vmatpush.msra.mxu0 %v775
  %907 = vmatpush.msra.mxu0 %v771
  %908 = vmatmul.f32.gmra.mxu0 %v484
  %v909 = vpop.f32.mrf.mxu0
  %v910 = vadd.f32 0.0, %v909
  %911 = vdwg.mxu0
  %v916 = vrot.slane %v870, 6
  %v917 = vrot.slane %v890, 4
  %v918 = vrot.slane %v910, 2
  %v919 = vsel %vm178, %v850, %v916
  %v920 = vsel %vm180, %v917, %v918
  %v921 = vsel %vm182, %v919, %v920
  %v923 = vadd.f32 %v767, %v921
  %v924 = vxor.u32 %v923, 2147483648
  %v925 = vmul.f32 %v924, 1.442695
  %v926 = vpow.pop %v925
  %v927 = vadd.f32 %v926, 1.0
  %v928 = vrcp.pop %v927
  %v929 = vmul.f32 %v927, %v928
  %v930 = vsub.f32 1.0, %v929
  %v931 = vmul.f32 %v928, %v930
  %v932 = vadd.f32 %v928, %v931
  %vm933 = vweird.f32 %v927
  %vm934 = vweird.f32 %v928
  %vm935 = vmor %vm933, %vm934
  %v936 = vsel %vm935, %v928, %v932
  %v937 = vand.u32 2147483647, %v927
  %vm938 = vcmp.eq.f32.partialorder %v937, 8.507059e+37
  %v939 = vand.u32 %v927, 2147483648
  %v940 = vor.u32 1.1754944e-38, %v939
  %v941 = vsel %vm938, %v940, %v936
  %v942 = vmul.f32 1.0, %v941
  %v944 = vrot.slane %v923, 2
  %v946 = vxor.u32 %v944, 2147483648
  %v947 = vmul.f32 %v946, 1.442695
  %v948 = vpow.pop %v947
  %v949 = vadd.f32 %v948, 1.0
  %v950 = vrcp.pop %v949
  %v951 = vmul.f32 %v949, %v950
  %v952 = vsub.f32 1.0, %v951
  %v953 = vmul.f32 %v950, %v952
  %v954 = vadd.f32 %v950, %v953
  %vm955 = vweird.f32 %v949
  %vm956 = vweird.f32 %v950
  %vm957 = vmor %vm955, %vm956
  %v958 = vsel %vm957, %v950, %v954
  %v959 = vand.u32 2147483647, %v949
  %vm960 = vcmp.eq.f32.partialorder %v959, 8.507059e+37
  %v961 = vand.u32 %v949, 2147483648
  %v962 = vor.u32 1.1754944e-38, %v961
  %v963 = vsel %vm960, %v962, %v958
  %v964 = vmul.f32 1.0, %v963
  %v965 = vrot.slane %v923, 4
  %v967 = vtanh.pop %v965
  %v968 = vrot.slane %v923, 6
  %v970 = vxor.u32 %v968, 2147483648
  %v971 = vmul.f32 %v970, 1.442695
  %v972 = vpow.pop %v971
  %v973 = vadd.f32 %v972, 1.0
  %v974 = vrcp.pop %v973
  %v975 = vmul.f32 %v973, %v974
  %v976 = vsub.f32 1.0, %v975
  %v977 = vmul.f32 %v974, %v976
  %v978 = vadd.f32 %v974, %v977
  %vm979 = vweird.f32 %v973
  %vm980 = vweird.f32 %v974
  %vm981 = vmor %vm979, %vm980
  %v982 = vsel %vm981, %v974, %v978
  %v983 = vand.u32 2147483647, %v973
  %vm984 = vcmp.eq.f32.partialorder %v983, 8.507059e+37
  %v985 = vand.u32 %v973, 2147483648
  %v986 = vor.u32 1.1754944e-38, %v985
  %v987 = vsel %vm984, %v986, %v982
  %v988 = vmul.f32 1.0, %v987
  %v989 = vmul.f32 %v964, %v482
  %v990 = vmul.f32 %v942, %v967
  %v991 = vadd.f32 %v989, %v990
  %v992 = vtanh.pop %v991
  %v993 = vmul.f32 %v988, %v992
  %994 = vrot.lane.b32.xlu0 %v765, 127
  %v995 = vpop.permute.xlu0 %994
  %996 = vrot.lane.b32.xlu0 %v765, 1
  %v997 = vpop.permute.xlu0 %996
  %v998 = vsel %vm25, %v995, %v997
  %v999 = vsub.f32 %v765, %v998
  %v1000 = vxor.u32 %v999, 2147483648
  %v1001 = vmul.f32 %v1000, 1.442695
  %v1002 = vpow.pop %v1001
  %v1003 = vadd.f32 %v1002, 1.0
  %v1004 = vrcp.pop %v1003
  %v1005 = vmul.f32 %v1003, %v1004
  %v1006 = vsub.f32 1.0, %v1005
  %v1007 = vmul.f32 %v1004, %v1006
  %v1008 = vadd.f32 %v1004, %v1007
  %vm1009 = vweird.f32 %v1003
  %vm1010 = vweird.f32 %v1004
  %vm1011 = vmor %vm1009, %vm1010
  %v1012 = vsel %vm1011, %v1004, %v1008
  %v1013 = vand.u32 2147483647, %v1003
  %vm1014 = vcmp.eq.f32.partialorder %v1013, 8.507059e+37
  %v1015 = vand.u32 %v1003, 2147483648
  %v1016 = vor.u32 1.1754944e-38, %v1015
  %v1017 = vsel %vm1014, %v1016, %v1012
  %v1018 = vmul.f32 1.0, %v1017
  %s1019 = scalar_lea.vmem %s2, 2
  %1020 = vst [vmem:[%s1019] sm:$0x3] %v1018
  %1021 = vrot.lane.b32.xlu0 %v993, 127
  %v1022 = vpop.permute.xlu0 %1021
  %1023 = vrot.lane.b32.xlu0 %v993, 1
  %v1024 = vpop.permute.xlu0 %1023
  %v1025 = vsel %vm25, %v1022, %v1024
  %v1026 = vsub.f32 %v993, %v1025
  %v1027 = vxor.u32 %v1026, 2147483648
  %v1028 = vmul.f32 %v1027, 1.442695
  %v1029 = vpow.pop %v1028
  %v1030 = vadd.f32 %v1029, 1.0
  %v1031 = vrcp.pop %v1030
  %v1032 = vmul.f32 %v1030, %v1031
  %v1033 = vsub.f32 1.0, %v1032
  %v1034 = vmul.f32 %v1031, %v1033
  %v1035 = vadd.f32 %v1031, %v1034
  %vm1036 = vweird.f32 %v1030
  %vm1037 = vweird.f32 %v1031
  %vm1038 = vmor %vm1036, %vm1037
  %v1039 = vsel %vm1038, %v1031, %v1035
  %v1040 = vand.u32 2147483647, %v1030
  %vm1041 = vcmp.eq.f32.partialorder %v1040, 8.507059e+37
  %v1042 = vand.u32 %v1030, 2147483648
  %v1043 = vor.u32 1.1754944e-38, %v1042
  %v1044 = vsel %vm1041, %v1043, %v1039
  %v1045 = vmul.f32 1.0, %v1044
  %s1046 = scalar_lea.vmem %s2, 28
  %1047 = vst [vmem:[%s1046] sm:$0x3] %v1045
  %s1048 = scalar_lea.vmem %s0, 16
  %v1049 = vld [vmem:[%s1048] sm:$0xff]
  %v1050 = vld [vmem:[%s1] sm:$0xff]
  %v1051 = vld [vmem:[%s1 + $0x8] sm:$0xff]
  %v1052 = vld [vmem:[%s1 + $0x10] sm:$0xff]
  %v1053 = vld [vmem:[%s1 + $0x18] sm:$0xff]
  %v1054 = vld [vmem:[%s1 + $0x20] sm:$0xff]
  %v1055 = vld [vmem:[%s1 + $0x28] sm:$0xff]
  %v1056 = vld [vmem:[%s1 + $0x30] sm:$0xff]
  %v1057 = vld [vmem:[%s1 + $0x38] sm:$0xff]
  %v1058 = vld [vmem:[%s1 + $0x40] sm:$0xff]
  %v1059 = vld [vmem:[%s1 + $0x48] sm:$0xff]
  %v1060 = vld [vmem:[%s1 + $0x50] sm:$0xff]
  %v1061 = vld [vmem:[%s1 + $0x58] sm:$0xff]
  %v1062 = vld [vmem:[%s1 + $0x60] sm:$0xff]
  %v1063 = vld [vmem:[%s1 + $0x68] sm:$0xff]
  %v1064 = vld [vmem:[%s1 + $0x70] sm:$0xff]
  %v1065 = vld [vmem:[%s1 + $0x78] sm:$0xff]
  %v1066 = vld [vmem:[%s1 + $0x80] sm:$0xff]
  %v1067 = vld [vmem:[%s1 + $0x88] sm:$0xff]
  %v1068 = vld [vmem:[%s1 + $0x90] sm:$0xff]
  %v1069 = vld [vmem:[%s1 + $0x98] sm:$0xff]
  %v1070 = vld [vmem:[%s1 + $0xa0] sm:$0xff]
  %v1071 = vld [vmem:[%s1 + $0xa8] sm:$0xff]
  %v1072 = vld [vmem:[%s1 + $0xb0] sm:$0xff]
  %v1073 = vld [vmem:[%s1 + $0xb8] sm:$0xff]
  %v1074 = vld [vmem:[%s1 + $0xc0] sm:$0xff]
  %v1075 = vld [vmem:[%s1 + $0xc8] sm:$0xff]
  %v1076 = vld [vmem:[%s1 + $0xd0] sm:$0xff]
  %v1077 = vld [vmem:[%s1 + $0xd8] sm:$0xff]
  %v1078 = vld [vmem:[%s1 + $0xe0] sm:$0xff]
  %v1079 = vld [vmem:[%s1 + $0xe8] sm:$0xff]
  %v1080 = vld [vmem:[%s1 + $0xf0] sm:$0xff]
  %v1081 = vld [vmem:[%s1 + $0xf8] sm:$0xff]
  %v1082 = vld [vmem:[%s1 + $0x100] sm:$0xff]
  %v1083 = vld [vmem:[%s1 + $0x108] sm:$0xff]
  %v1084 = vld [vmem:[%s1 + $0x110] sm:$0xff]
  %v1085 = vld [vmem:[%s1 + $0x118] sm:$0xff]
  %v1086 = vld [vmem:[%s1 + $0x120] sm:$0xff]
  %v1087 = vld [vmem:[%s1 + $0x128] sm:$0xff]
  %v1088 = vld [vmem:[%s1 + $0x130] sm:$0xff]
  %v1089 = vld [vmem:[%s1 + $0x138] sm:$0xff]
  %v1090 = vld [vmem:[%s1 + $0x140] sm:$0xff]
  %v1091 = vld [vmem:[%s1 + $0x148] sm:$0xff]
  %v1092 = vld [vmem:[%s1 + $0x150] sm:$0xff]
  %v1093 = vld [vmem:[%s1 + $0x158] sm:$0xff]
  %v1094 = vld [vmem:[%s1 + $0x160] sm:$0xff]
  %v1095 = vld [vmem:[%s1 + $0x168] sm:$0xff]
  %v1096 = vld [vmem:[%s1 + $0x170] sm:$0xff]
  %v1097 = vld [vmem:[%s1 + $0x178] sm:$0xff]
  %v1098 = vld [vmem:[%s1 + $0x180] sm:$0xff]
  %v1099 = vld [vmem:[%s1 + $0x188] sm:$0xff]
  %v1100 = vld [vmem:[%s1 + $0x190] sm:$0xff]
  %v1101 = vld [vmem:[%s1 + $0x198] sm:$0xff]
  %v1102 = vld [vmem:[%s1 + $0x1a0] sm:$0xff]
  %v1103 = vld [vmem:[%s1 + $0x1a8] sm:$0xff]
  %v1104 = vld [vmem:[%s1 + $0x1b0] sm:$0xff]
  %v1105 = vld [vmem:[%s1 + $0x1b8] sm:$0xff]
  %v1106 = vld [vmem:[%s1 + $0x1c0] sm:$0xff]
  %v1107 = vld [vmem:[%s1 + $0x1c8] sm:$0xff]
  %v1108 = vld [vmem:[%s1 + $0x1d0] sm:$0xff]
  %v1109 = vld [vmem:[%s1 + $0x1d8] sm:$0xff]
  %v1110 = vld [vmem:[%s1 + $0x1e0] sm:$0xff]
  %v1111 = vld [vmem:[%s1 + $0x1e8] sm:$0xff]
  %v1112 = vld [vmem:[%s1 + $0x1f0] sm:$0xff]
  %v1113 = vld [vmem:[%s1 + $0x1f8] sm:$0xff]
  %1114 = vmatpush.msra.mxu0 %v1110
  %1115 = vmatpush.msra.mxu0 %v1106
  %1116 = vmatpush.msra.mxu0 %v1102
  %1117 = vmatpush.msra.mxu0 %v1098
  %1118 = vmatpush.msra.mxu0 %v1094
  %1119 = vmatpush.msra.mxu0 %v1090
  %1120 = vmatpush.msra.mxu0 %v1086
  %1121 = vmatpush.msra.mxu0 %v1082
  %1122 = vmatpush.msra.mxu0 %v1078
  %1123 = vmatpush.msra.mxu0 %v1074
  %1124 = vmatpush.msra.mxu0 %v1070
  %1125 = vmatpush.msra.mxu0 %v1066
  %1126 = vmatpush.msra.mxu0 %v1062
  %1127 = vmatpush.msra.mxu0 %v1058
  %1128 = vmatpush.msra.mxu0 %v1054
  %1129 = vmatpush.msra.mxu0 %v1050
  %1130 = vmatmul.f32.gmra.mxu0 %v765
  %v1131 = vpop.f32.mrf.mxu0
  %v1132 = vadd.f32 0.0, %v1131
  %1133 = vdwg.mxu0
  %1134 = vmatpush.msra.mxu0 %v1111
  %1135 = vmatpush.msra.mxu0 %v1107
  %1136 = vmatpush.msra.mxu0 %v1103
  %1137 = vmatpush.msra.mxu0 %v1099
  %1138 = vmatpush.msra.mxu0 %v1095
  %1139 = vmatpush.msra.mxu0 %v1091
  %1140 = vmatpush.msra.mxu0 %v1087
  %1141 = vmatpush.msra.mxu0 %v1083
  %1142 = vmatpush.msra.mxu0 %v1079
  %1143 = vmatpush.msra.mxu0 %v1075
  %1144 = vmatpush.msra.mxu0 %v1071
  %1145 = vmatpush.msra.mxu0 %v1067
  %1146 = vmatpush.msra.mxu0 %v1063
  %1147 = vmatpush.msra.mxu0 %v1059
  %1148 = vmatpush.msra.mxu0 %v1055
  %1149 = vmatpush.msra.mxu0 %v1051
  %1150 = vmatmul.f32.gmra.mxu0 %v765
  %v1151 = vpop.f32.mrf.mxu0
  %v1152 = vadd.f32 0.0, %v1151
  %1153 = vdwg.mxu0
  %1154 = vmatpush.msra.mxu0 %v1112
  %1155 = vmatpush.msra.mxu0 %v1108
  %1156 = vmatpush.msra.mxu0 %v1104
  %1157 = vmatpush.msra.mxu0 %v1100
  %1158 = vmatpush.msra.mxu0 %v1096
  %1159 = vmatpush.msra.mxu0 %v1092
  %1160 = vmatpush.msra.mxu0 %v1088
  %1161 = vmatpush.msra.mxu0 %v1084
  %1162 = vmatpush.msra.mxu0 %v1080
  %1163 = vmatpush.msra.mxu0 %v1076
  %1164 = vmatpush.msra.mxu0 %v1072
  %1165 = vmatpush.msra.mxu0 %v1068
  %1166 = vmatpush.msra.mxu0 %v1064
  %1167 = vmatpush.msra.mxu0 %v1060
  %1168 = vmatpush.msra.mxu0 %v1056
  %1169 = vmatpush.msra.mxu0 %v1052
  %1170 = vmatmul.f32.gmra.mxu0 %v765
  %v1171 = vpop.f32.mrf.mxu0
  %v1172 = vadd.f32 0.0, %v1171
  %1173 = vdwg.mxu0
  %1174 = vmatpush.msra.mxu0 %v1113
  %1175 = vmatpush.msra.mxu0 %v1109
  %1176 = vmatpush.msra.mxu0 %v1105
  %1177 = vmatpush.msra.mxu0 %v1101
  %1178 = vmatpush.msra.mxu0 %v1097
  %1179 = vmatpush.msra.mxu0 %v1093
  %1180 = vmatpush.msra.mxu0 %v1089
  %1181 = vmatpush.msra.mxu0 %v1085
  %1182 = vmatpush.msra.mxu0 %v1081
  %1183 = vmatpush.msra.mxu0 %v1077
  %1184 = vmatpush.msra.mxu0 %v1073
  %1185 = vmatpush.msra.mxu0 %v1069
  %1186 = vmatpush.msra.mxu0 %v1065
  %1187 = vmatpush.msra.mxu0 %v1061
  %1188 = vmatpush.msra.mxu0 %v1057
  %1189 = vmatpush.msra.mxu0 %v1053
  %1190 = vmatmul.f32.gmra.mxu0 %v765
  %v1191 = vpop.f32.mrf.mxu0
  %v1192 = vadd.f32 0.0, %v1191
  %1193 = vdwg.mxu0
  %v1198 = vrot.slane %v1152, 6
  %v1199 = vrot.slane %v1172, 4
  %v1200 = vrot.slane %v1192, 2
  %v1201 = vsel %vm178, %v1132, %v1198
  %v1202 = vsel %vm180, %v1199, %v1200
  %v1203 = vsel %vm182, %v1201, %v1202
  %v1205 = vadd.f32 %v1049, %v1203
  %v1206 = vxor.u32 %v1205, 2147483648
  %v1207 = vmul.f32 %v1206, 1.442695
  %v1208 = vpow.pop %v1207
  %v1209 = vadd.f32 %v1208, 1.0
  %v1210 = vrcp.pop %v1209
  %v1211 = vmul.f32 %v1209, %v1210
  %v1212 = vsub.f32 1.0, %v1211
  %v1213 = vmul.f32 %v1210, %v1212
  %v1214 = vadd.f32 %v1210, %v1213
  %vm1215 = vweird.f32 %v1209
  %vm1216 = vweird.f32 %v1210
  %vm1217 = vmor %vm1215, %vm1216
  %v1218 = vsel %vm1217, %v1210, %v1214
  %v1219 = vand.u32 2147483647, %v1209
  %vm1220 = vcmp.eq.f32.partialorder %v1219, 8.507059e+37
  %v1221 = vand.u32 %v1209, 2147483648
  %v1222 = vor.u32 1.1754944e-38, %v1221
  %v1223 = vsel %vm1220, %v1222, %v1218
  %v1224 = vmul.f32 1.0, %v1223
  %v1226 = vrot.slane %v1205, 2
  %v1228 = vxor.u32 %v1226, 2147483648
  %v1229 = vmul.f32 %v1228, 1.442695
  %v1230 = vpow.pop %v1229
  %v1231 = vadd.f32 %v1230, 1.0
  %v1232 = vrcp.pop %v1231
  %v1233 = vmul.f32 %v1231, %v1232
  %v1234 = vsub.f32 1.0, %v1233
  %v1235 = vmul.f32 %v1232, %v1234
  %v1236 = vadd.f32 %v1232, %v1235
  %vm1237 = vweird.f32 %v1231
  %vm1238 = vweird.f32 %v1232
  %vm1239 = vmor %vm1237, %vm1238
  %v1240 = vsel %vm1239, %v1232, %v1236
  %v1241 = vand.u32 2147483647, %v1231
  %vm1242 = vcmp.eq.f32.partialorder %v1241, 8.507059e+37
  %v1243 = vand.u32 %v1231, 2147483648
  %v1244 = vor.u32 1.1754944e-38, %v1243
  %v1245 = vsel %vm1242, %v1244, %v1240
  %v1246 = vmul.f32 1.0, %v1245
  %v1247 = vrot.slane %v1205, 4
  %v1249 = vtanh.pop %v1247
  %v1250 = vrot.slane %v1205, 6
  %v1252 = vxor.u32 %v1250, 2147483648
  %v1253 = vmul.f32 %v1252, 1.442695
  %v1254 = vpow.pop %v1253
  %v1255 = vadd.f32 %v1254, 1.0
  %v1256 = vrcp.pop %v1255
  %v1257 = vmul.f32 %v1255, %v1256
  %v1258 = vsub.f32 1.0, %v1257
  %v1259 = vmul.f32 %v1256, %v1258
  %v1260 = vadd.f32 %v1256, %v1259
  %vm1261 = vweird.f32 %v1255
  %vm1262 = vweird.f32 %v1256
  %vm1263 = vmor %vm1261, %vm1262
  %v1264 = vsel %vm1263, %v1256, %v1260
  %v1265 = vand.u32 2147483647, %v1255
  %vm1266 = vcmp.eq.f32.partialorder %v1265, 8.507059e+37
  %v1267 = vand.u32 %v1255, 2147483648
  %v1268 = vor.u32 1.1754944e-38, %v1267
  %v1269 = vsel %vm1266, %v1268, %v1264
  %v1270 = vmul.f32 1.0, %v1269
  %v1271 = vmul.f32 %v1246, %v763
  %v1272 = vmul.f32 %v1224, %v1249
  %v1273 = vadd.f32 %v1271, %v1272
  %v1274 = vtanh.pop %v1273
  %v1275 = vmul.f32 %v1270, %v1274
  %s1276 = scalar_lea.vmem %s0, 104
  %v1277 = vld [vmem:[%s1276] sm:$0xff]
  %v1278 = vld [vmem:[%s258] sm:$0xff]
  %v1279 = vld [vmem:[%s258 + $0x8] sm:$0xff]
  %v1280 = vld [vmem:[%s258 + $0x10] sm:$0xff]
  %v1281 = vld [vmem:[%s258 + $0x18] sm:$0xff]
  %v1282 = vld [vmem:[%s258 + $0x20] sm:$0xff]
  %v1283 = vld [vmem:[%s258 + $0x28] sm:$0xff]
  %v1284 = vld [vmem:[%s258 + $0x30] sm:$0xff]
  %v1285 = vld [vmem:[%s258 + $0x38] sm:$0xff]
  %v1286 = vld [vmem:[%s258 + $0x40] sm:$0xff]
  %v1287 = vld [vmem:[%s258 + $0x48] sm:$0xff]
  %v1288 = vld [vmem:[%s258 + $0x50] sm:$0xff]
  %v1289 = vld [vmem:[%s258 + $0x58] sm:$0xff]
  %v1290 = vld [vmem:[%s258 + $0x60] sm:$0xff]
  %v1291 = vld [vmem:[%s258 + $0x68] sm:$0xff]
  %v1292 = vld [vmem:[%s258 + $0x70] sm:$0xff]
  %v1293 = vld [vmem:[%s258 + $0x78] sm:$0xff]
  %v1294 = vld [vmem:[%s258 + $0x80] sm:$0xff]
  %v1295 = vld [vmem:[%s258 + $0x88] sm:$0xff]
  %v1296 = vld [vmem:[%s258 + $0x90] sm:$0xff]
  %v1297 = vld [vmem:[%s258 + $0x98] sm:$0xff]
  %v1298 = vld [vmem:[%s258 + $0xa0] sm:$0xff]
  %v1299 = vld [vmem:[%s258 + $0xa8] sm:$0xff]
  %v1300 = vld [vmem:[%s258 + $0xb0] sm:$0xff]
  %v1301 = vld [vmem:[%s258 + $0xb8] sm:$0xff]
  %v1302 = vld [vmem:[%s258 + $0xc0] sm:$0xff]
  %v1303 = vld [vmem:[%s258 + $0xc8] sm:$0xff]
  %v1304 = vld [vmem:[%s258 + $0xd0] sm:$0xff]
  %v1305 = vld [vmem:[%s258 + $0xd8] sm:$0xff]
  %v1306 = vld [vmem:[%s258 + $0xe0] sm:$0xff]
  %v1307 = vld [vmem:[%s258 + $0xe8] sm:$0xff]
  %v1308 = vld [vmem:[%s258 + $0xf0] sm:$0xff]
  %v1309 = vld [vmem:[%s258 + $0xf8] sm:$0xff]
  %v1310 = vld [vmem:[%s258 + $0x100] sm:$0xff]
  %v1311 = vld [vmem:[%s258 + $0x108] sm:$0xff]
  %v1312 = vld [vmem:[%s258 + $0x110] sm:$0xff]
  %v1313 = vld [vmem:[%s258 + $0x118] sm:$0xff]
  %v1314 = vld [vmem:[%s258 + $0x120] sm:$0xff]
  %v1315 = vld [vmem:[%s258 + $0x128] sm:$0xff]
  %v1316 = vld [vmem:[%s258 + $0x130] sm:$0xff]
  %v1317 = vld [vmem:[%s258 + $0x138] sm:$0xff]
  %v1318 = vld [vmem:[%s258 + $0x140] sm:$0xff]
  %v1319 = vld [vmem:[%s258 + $0x148] sm:$0xff]
  %v1320 = vld [vmem:[%s258 + $0x150] sm:$0xff]
  %v1321 = vld [vmem:[%s258 + $0x158] sm:$0xff]
  %v1322 = vld [vmem:[%s258 + $0x160] sm:$0xff]
  %v1323 = vld [vmem:[%s258 + $0x168] sm:$0xff]
  %v1324 = vld [vmem:[%s258 + $0x170] sm:$0xff]
  %v1325 = vld [vmem:[%s258 + $0x178] sm:$0xff]
  %v1326 = vld [vmem:[%s258 + $0x180] sm:$0xff]
  %v1327 = vld [vmem:[%s258 + $0x188] sm:$0xff]
  %v1328 = vld [vmem:[%s258 + $0x190] sm:$0xff]
  %v1329 = vld [vmem:[%s258 + $0x198] sm:$0xff]
  %v1330 = vld [vmem:[%s258 + $0x1a0] sm:$0xff]
  %v1331 = vld [vmem:[%s258 + $0x1a8] sm:$0xff]
  %v1332 = vld [vmem:[%s258 + $0x1b0] sm:$0xff]
  %v1333 = vld [vmem:[%s258 + $0x1b8] sm:$0xff]
  %v1334 = vld [vmem:[%s258 + $0x1c0] sm:$0xff]
  %v1335 = vld [vmem:[%s258 + $0x1c8] sm:$0xff]
  %v1336 = vld [vmem:[%s258 + $0x1d0] sm:$0xff]
  %v1337 = vld [vmem:[%s258 + $0x1d8] sm:$0xff]
  %v1338 = vld [vmem:[%s258 + $0x1e0] sm:$0xff]
  %v1339 = vld [vmem:[%s258 + $0x1e8] sm:$0xff]
  %v1340 = vld [vmem:[%s258 + $0x1f0] sm:$0xff]
  %v1341 = vld [vmem:[%s258 + $0x1f8] sm:$0xff]
  %1342 = vmatpush.msra.mxu0 %v1338
  %1343 = vmatpush.msra.mxu0 %v1334
  %1344 = vmatpush.msra.mxu0 %v1330
  %1345 = vmatpush.msra.mxu0 %v1326
  %1346 = vmatpush.msra.mxu0 %v1322
  %1347 = vmatpush.msra.mxu0 %v1318
  %1348 = vmatpush.msra.mxu0 %v1314
  %1349 = vmatpush.msra.mxu0 %v1310
  %1350 = vmatpush.msra.mxu0 %v1306
  %1351 = vmatpush.msra.mxu0 %v1302
  %1352 = vmatpush.msra.mxu0 %v1298
  %1353 = vmatpush.msra.mxu0 %v1294
  %1354 = vmatpush.msra.mxu0 %v1290
  %1355 = vmatpush.msra.mxu0 %v1286
  %1356 = vmatpush.msra.mxu0 %v1282
  %1357 = vmatpush.msra.mxu0 %v1278
  %1358 = vmatmul.f32.gmra.mxu0 %v993
  %v1359 = vpop.f32.mrf.mxu0
  %v1360 = vadd.f32 0.0, %v1359
  %1361 = vdwg.mxu0
  %1362 = vmatpush.msra.mxu0 %v1339
  %1363 = vmatpush.msra.mxu0 %v1335
  %1364 = vmatpush.msra.mxu0 %v1331
  %1365 = vmatpush.msra.mxu0 %v1327
  %1366 = vmatpush.msra.mxu0 %v1323
  %1367 = vmatpush.msra.mxu0 %v1319
  %1368 = vmatpush.msra.mxu0 %v1315
  %1369 = vmatpush.msra.mxu0 %v1311
  %1370 = vmatpush.msra.mxu0 %v1307
  %1371 = vmatpush.msra.mxu0 %v1303
  %1372 = vmatpush.msra.mxu0 %v1299
  %1373 = vmatpush.msra.mxu0 %v1295
  %1374 = vmatpush.msra.mxu0 %v1291
  %1375 = vmatpush.msra.mxu0 %v1287
  %1376 = vmatpush.msra.mxu0 %v1283
  %1377 = vmatpush.msra.mxu0 %v1279
  %1378 = vmatmul.f32.gmra.mxu0 %v993
  %v1379 = vpop.f32.mrf.mxu0
  %v1380 = vadd.f32 0.0, %v1379
  %1381 = vdwg.mxu0
  %1382 = vmatpush.msra.mxu0 %v1340
  %1383 = vmatpush.msra.mxu0 %v1336
  %1384 = vmatpush.msra.mxu0 %v1332
  %1385 = vmatpush.msra.mxu0 %v1328
  %1386 = vmatpush.msra.mxu0 %v1324
  %1387 = vmatpush.msra.mxu0 %v1320
  %1388 = vmatpush.msra.mxu0 %v1316
  %1389 = vmatpush.msra.mxu0 %v1312
  %1390 = vmatpush.msra.mxu0 %v1308
  %1391 = vmatpush.msra.mxu0 %v1304
  %1392 = vmatpush.msra.mxu0 %v1300
  %1393 = vmatpush.msra.mxu0 %v1296
  %1394 = vmatpush.msra.mxu0 %v1292
  %1395 = vmatpush.msra.mxu0 %v1288
  %1396 = vmatpush.msra.mxu0 %v1284
  %1397 = vmatpush.msra.mxu0 %v1280
  %1398 = vmatmul.f32.gmra.mxu0 %v993
  %v1399 = vpop.f32.mrf.mxu0
  %v1400 = vadd.f32 0.0, %v1399
  %1401 = vdwg.mxu0
  %1402 = vmatpush.msra.mxu0 %v1341
  %1403 = vmatpush.msra.mxu0 %v1337
  %1404 = vmatpush.msra.mxu0 %v1333
  %1405 = vmatpush.msra.mxu0 %v1329
  %1406 = vmatpush.msra.mxu0 %v1325
  %1407 = vmatpush.msra.mxu0 %v1321
  %1408 = vmatpush.msra.mxu0 %v1317
  %1409 = vmatpush.msra.mxu0 %v1313
  %1410 = vmatpush.msra.mxu0 %v1309
  %1411 = vmatpush.msra.mxu0 %v1305
  %1412 = vmatpush.msra.mxu0 %v1301
  %1413 = vmatpush.msra.mxu0 %v1297
  %1414 = vmatpush.msra.mxu0 %v1293
  %1415 = vmatpush.msra.mxu0 %v1289
  %1416 = vmatpush.msra.mxu0 %v1285
  %1417 = vmatpush.msra.mxu0 %v1281
  %1418 = vmatmul.f32.gmra.mxu0 %v993
  %v1419 = vpop.f32.mrf.mxu0
  %v1420 = vadd.f32 0.0, %v1419
  %1421 = vdwg.mxu0
  %v1426 = vrot.slane %v1380, 6
  %v1427 = vrot.slane %v1400, 4
  %v1428 = vrot.slane %v1420, 2
  %v1429 = vsel %vm178, %v1360, %v1426
  %v1430 = vsel %vm180, %v1427, %v1428
  %v1431 = vsel %vm182, %v1429, %v1430
  %v1433 = vadd.f32 %v1277, %v1431
  %v1434 = vxor.u32 %v1433, 2147483648
  %v1435 = vmul.f32 %v1434, 1.442695
  %v1436 = vpow.pop %v1435
  %v1437 = vadd.f32 %v1436, 1.0
  %v1438 = vrcp.pop %v1437
  %v1439 = vmul.f32 %v1437, %v1438
  %v1440 = vsub.f32 1.0, %v1439
  %v1441 = vmul.f32 %v1438, %v1440
  %v1442 = vadd.f32 %v1438, %v1441
  %vm1443 = vweird.f32 %v1437
  %vm1444 = vweird.f32 %v1438
  %vm1445 = vmor %vm1443, %vm1444
  %v1446 = vsel %vm1445, %v1438, %v1442
  %v1447 = vand.u32 2147483647, %v1437
  %vm1448 = vcmp.eq.f32.partialorder %v1447, 8.507059e+37
  %v1449 = vand.u32 %v1437, 2147483648
  %v1450 = vor.u32 1.1754944e-38, %v1449
  %v1451 = vsel %vm1448, %v1450, %v1446
  %v1452 = vmul.f32 1.0, %v1451
  %v1454 = vrot.slane %v1433, 2
  %v1456 = vxor.u32 %v1454, 2147483648
  %v1457 = vmul.f32 %v1456, 1.442695
  %v1458 = vpow.pop %v1457
  %v1459 = vadd.f32 %v1458, 1.0
  %v1460 = vrcp.pop %v1459
  %v1461 = vmul.f32 %v1459, %v1460
  %v1462 = vsub.f32 1.0, %v1461
  %v1463 = vmul.f32 %v1460, %v1462
  %v1464 = vadd.f32 %v1460, %v1463
  %vm1465 = vweird.f32 %v1459
  %vm1466 = vweird.f32 %v1460
  %vm1467 = vmor %vm1465, %vm1466
  %v1468 = vsel %vm1467, %v1460, %v1464
  %v1469 = vand.u32 2147483647, %v1459
  %vm1470 = vcmp.eq.f32.partialorder %v1469, 8.507059e+37
  %v1471 = vand.u32 %v1459, 2147483648
  %v1472 = vor.u32 1.1754944e-38, %v1471
  %v1473 = vsel %vm1470, %v1472, %v1468
  %v1474 = vmul.f32 1.0, %v1473
  %v1475 = vrot.slane %v1433, 4
  %v1477 = vtanh.pop %v1475
  %v1478 = vrot.slane %v1433, 6
  %v1480 = vxor.u32 %v1478, 2147483648
  %v1481 = vmul.f32 %v1480, 1.442695
  %v1482 = vpow.pop %v1481
  %v1483 = vadd.f32 %v1482, 1.0
  %v1484 = vrcp.pop %v1483
  %v1485 = vmul.f32 %v1483, %v1484
  %v1486 = vsub.f32 1.0, %v1485
  %v1487 = vmul.f32 %v1484, %v1486
  %v1488 = vadd.f32 %v1484, %v1487
  %vm1489 = vweird.f32 %v1483
  %vm1490 = vweird.f32 %v1484
  %vm1491 = vmor %vm1489, %vm1490
  %v1492 = vsel %vm1491, %v1484, %v1488
  %v1493 = vand.u32 2147483647, %v1483
  %vm1494 = vcmp.eq.f32.partialorder %v1493, 8.507059e+37
  %v1495 = vand.u32 %v1483, 2147483648
  %v1496 = vor.u32 1.1754944e-38, %v1495
  %v1497 = vsel %vm1494, %v1496, %v1492
  %v1498 = vmul.f32 1.0, %v1497
  %v1499 = vmul.f32 %v1474, %v991
  %v1500 = vmul.f32 %v1452, %v1477
  %v1501 = vadd.f32 %v1499, %v1500
  %v1502 = vtanh.pop %v1501
  %v1503 = vmul.f32 %v1498, %v1502
  %1504 = vrot.lane.b32.xlu0 %v1275, 127
  %v1505 = vpop.permute.xlu0 %1504
  %1506 = vrot.lane.b32.xlu0 %v1275, 1
  %v1507 = vpop.permute.xlu0 %1506
  %v1508 = vsel %vm25, %v1505, %v1507
  %v1509 = vsub.f32 %v1275, %v1508
  %v1510 = vxor.u32 %v1509, 2147483648
  %v1511 = vmul.f32 %v1510, 1.442695
  %v1512 = vpow.pop %v1511
  %v1513 = vadd.f32 %v1512, 1.0
  %v1514 = vrcp.pop %v1513
  %v1515 = vmul.f32 %v1513, %v1514
  %v1516 = vsub.f32 1.0, %v1515
  %v1517 = vmul.f32 %v1514, %v1516
  %v1518 = vadd.f32 %v1514, %v1517
  %vm1519 = vweird.f32 %v1513
  %vm1520 = vweird.f32 %v1514
  %vm1521 = vmor %vm1519, %vm1520
  %v1522 = vsel %vm1521, %v1514, %v1518
  %v1523 = vand.u32 2147483647, %v1513
  %vm1524 = vcmp.eq.f32.partialorder %v1523, 8.507059e+37
  %v1525 = vand.u32 %v1513, 2147483648
  %v1526 = vor.u32 1.1754944e-38, %v1525
  %v1527 = vsel %vm1524, %v1526, %v1522
  %v1528 = vmul.f32 1.0, %v1527
  %s1529 = scalar_lea.vmem %s2, 4
  %1530 = vst [vmem:[%s1529] sm:$0x3] %v1528
  %1531 = vrot.lane.b32.xlu0 %v1503, 127
  %v1532 = vpop.permute.xlu0 %1531
  %1533 = vrot.lane.b32.xlu0 %v1503, 1
  %v1534 = vpop.permute.xlu0 %1533
  %v1535 = vsel %vm25, %v1532, %v1534
  %v1536 = vsub.f32 %v1503, %v1535
  %v1537 = vxor.u32 %v1536, 2147483648
  %v1538 = vmul.f32 %v1537, 1.442695
  %v1539 = vpow.pop %v1538
  %v1540 = vadd.f32 %v1539, 1.0
  %v1541 = vrcp.pop %v1540
  %v1542 = vmul.f32 %v1540, %v1541
  %v1543 = vsub.f32 1.0, %v1542
  %v1544 = vmul.f32 %v1541, %v1543
  %v1545 = vadd.f32 %v1541, %v1544
  %vm1546 = vweird.f32 %v1540
  %vm1547 = vweird.f32 %v1541
  %vm1548 = vmor %vm1546, %vm1547
  %v1549 = vsel %vm1548, %v1541, %v1545
  %v1550 = vand.u32 2147483647, %v1540
  %vm1551 = vcmp.eq.f32.partialorder %v1550, 8.507059e+37
  %v1552 = vand.u32 %v1540, 2147483648
  %v1553 = vor.u32 1.1754944e-38, %v1552
  %v1554 = vsel %vm1551, %v1553, %v1549
  %v1555 = vmul.f32 1.0, %v1554
  %s1556 = scalar_lea.vmem %s2, 26
  %1557 = vst [vmem:[%s1556] sm:$0x3] %v1555
  %s1558 = scalar_lea.vmem %s0, 24
  %v1559 = vld [vmem:[%s1558] sm:$0xff]
  %v1560 = vld [vmem:[%s1] sm:$0xff]
  %v1561 = vld [vmem:[%s1 + $0x8] sm:$0xff]
  %v1562 = vld [vmem:[%s1 + $0x10] sm:$0xff]
  %v1563 = vld [vmem:[%s1 + $0x18] sm:$0xff]
  %v1564 = vld [vmem:[%s1 + $0x20] sm:$0xff]
  %v1565 = vld [vmem:[%s1 + $0x28] sm:$0xff]
  %v1566 = vld [vmem:[%s1 + $0x30] sm:$0xff]
  %v1567 = vld [vmem:[%s1 + $0x38] sm:$0xff]
  %v1568 = vld [vmem:[%s1 + $0x40] sm:$0xff]
  %v1569 = vld [vmem:[%s1 + $0x48] sm:$0xff]
  %v1570 = vld [vmem:[%s1 + $0x50] sm:$0xff]
  %v1571 = vld [vmem:[%s1 + $0x58] sm:$0xff]
  %v1572 = vld [vmem:[%s1 + $0x60] sm:$0xff]
  %v1573 = vld [vmem:[%s1 + $0x68] sm:$0xff]
  %v1574 = vld [vmem:[%s1 + $0x70] sm:$0xff]
  %v1575 = vld [vmem:[%s1 + $0x78] sm:$0xff]
  %v1576 = vld [vmem:[%s1 + $0x80] sm:$0xff]
  %v1577 = vld [vmem:[%s1 + $0x88] sm:$0xff]
  %v1578 = vld [vmem:[%s1 + $0x90] sm:$0xff]
  %v1579 = vld [vmem:[%s1 + $0x98] sm:$0xff]
  %v1580 = vld [vmem:[%s1 + $0xa0] sm:$0xff]
  %v1581 = vld [vmem:[%s1 + $0xa8] sm:$0xff]
  %v1582 = vld [vmem:[%s1 + $0xb0] sm:$0xff]
  %v1583 = vld [vmem:[%s1 + $0xb8] sm:$0xff]
  %v1584 = vld [vmem:[%s1 + $0xc0] sm:$0xff]
  %v1585 = vld [vmem:[%s1 + $0xc8] sm:$0xff]
  %v1586 = vld [vmem:[%s1 + $0xd0] sm:$0xff]
  %v1587 = vld [vmem:[%s1 + $0xd8] sm:$0xff]
  %v1588 = vld [vmem:[%s1 + $0xe0] sm:$0xff]
  %v1589 = vld [vmem:[%s1 + $0xe8] sm:$0xff]
  %v1590 = vld [vmem:[%s1 + $0xf0] sm:$0xff]
  %v1591 = vld [vmem:[%s1 + $0xf8] sm:$0xff]
  %v1592 = vld [vmem:[%s1 + $0x100] sm:$0xff]
  %v1593 = vld [vmem:[%s1 + $0x108] sm:$0xff]
  %v1594 = vld [vmem:[%s1 + $0x110] sm:$0xff]
  %v1595 = vld [vmem:[%s1 + $0x118] sm:$0xff]
  %v1596 = vld [vmem:[%s1 + $0x120] sm:$0xff]
  %v1597 = vld [vmem:[%s1 + $0x128] sm:$0xff]
  %v1598 = vld [vmem:[%s1 + $0x130] sm:$0xff]
  %v1599 = vld [vmem:[%s1 + $0x138] sm:$0xff]
  %v1600 = vld [vmem:[%s1 + $0x140] sm:$0xff]
  %v1601 = vld [vmem:[%s1 + $0x148] sm:$0xff]
  %v1602 = vld [vmem:[%s1 + $0x150] sm:$0xff]
  %v1603 = vld [vmem:[%s1 + $0x158] sm:$0xff]
  %v1604 = vld [vmem:[%s1 + $0x160] sm:$0xff]
  %v1605 = vld [vmem:[%s1 + $0x168] sm:$0xff]
  %v1606 = vld [vmem:[%s1 + $0x170] sm:$0xff]
  %v1607 = vld [vmem:[%s1 + $0x178] sm:$0xff]
  %v1608 = vld [vmem:[%s1 + $0x180] sm:$0xff]
  %v1609 = vld [vmem:[%s1 + $0x188] sm:$0xff]
  %v1610 = vld [vmem:[%s1 + $0x190] sm:$0xff]
  %v1611 = vld [vmem:[%s1 + $0x198] sm:$0xff]
  %v1612 = vld [vmem:[%s1 + $0x1a0] sm:$0xff]
  %v1613 = vld [vmem:[%s1 + $0x1a8] sm:$0xff]
  %v1614 = vld [vmem:[%s1 + $0x1b0] sm:$0xff]
  %v1615 = vld [vmem:[%s1 + $0x1b8] sm:$0xff]
  %v1616 = vld [vmem:[%s1 + $0x1c0] sm:$0xff]
  %v1617 = vld [vmem:[%s1 + $0x1c8] sm:$0xff]
  %v1618 = vld [vmem:[%s1 + $0x1d0] sm:$0xff]
  %v1619 = vld [vmem:[%s1 + $0x1d8] sm:$0xff]
  %v1620 = vld [vmem:[%s1 + $0x1e0] sm:$0xff]
  %v1621 = vld [vmem:[%s1 + $0x1e8] sm:$0xff]
  %v1622 = vld [vmem:[%s1 + $0x1f0] sm:$0xff]
  %v1623 = vld [vmem:[%s1 + $0x1f8] sm:$0xff]
  %1624 = vmatpush.msra.mxu0 %v1620
  %1625 = vmatpush.msra.mxu0 %v1616
  %1626 = vmatpush.msra.mxu0 %v1612
  %1627 = vmatpush.msra.mxu0 %v1608
  %1628 = vmatpush.msra.mxu0 %v1604
  %1629 = vmatpush.msra.mxu0 %v1600
  %1630 = vmatpush.msra.mxu0 %v1596
  %1631 = vmatpush.msra.mxu0 %v1592
  %1632 = vmatpush.msra.mxu0 %v1588
  %1633 = vmatpush.msra.mxu0 %v1584
  %1634 = vmatpush.msra.mxu0 %v1580
  %1635 = vmatpush.msra.mxu0 %v1576
  %1636 = vmatpush.msra.mxu0 %v1572
  %1637 = vmatpush.msra.mxu0 %v1568
  %1638 = vmatpush.msra.mxu0 %v1564
  %1639 = vmatpush.msra.mxu0 %v1560
  %1640 = vmatmul.f32.gmra.mxu0 %v1275
  %v1641 = vpop.f32.mrf.mxu0
  %v1642 = vadd.f32 0.0, %v1641
  %1643 = vdwg.mxu0
  %1644 = vmatpush.msra.mxu0 %v1621
  %1645 = vmatpush.msra.mxu0 %v1617
  %1646 = vmatpush.msra.mxu0 %v1613
  %1647 = vmatpush.msra.mxu0 %v1609
  %1648 = vmatpush.msra.mxu0 %v1605
  %1649 = vmatpush.msra.mxu0 %v1601
  %1650 = vmatpush.msra.mxu0 %v1597
  %1651 = vmatpush.msra.mxu0 %v1593
  %1652 = vmatpush.msra.mxu0 %v1589
  %1653 = vmatpush.msra.mxu0 %v1585
  %1654 = vmatpush.msra.mxu0 %v1581
  %1655 = vmatpush.msra.mxu0 %v1577
  %1656 = vmatpush.msra.mxu0 %v1573
  %1657 = vmatpush.msra.mxu0 %v1569
  %1658 = vmatpush.msra.mxu0 %v1565
  %1659 = vmatpush.msra.mxu0 %v1561
  %1660 = vmatmul.f32.gmra.mxu0 %v1275
  %v1661 = vpop.f32.mrf.mxu0
  %v1662 = vadd.f32 0.0, %v1661
  %1663 = vdwg.mxu0
  %1664 = vmatpush.msra.mxu0 %v1622
  %1665 = vmatpush.msra.mxu0 %v1618
  %1666 = vmatpush.msra.mxu0 %v1614
  %1667 = vmatpush.msra.mxu0 %v1610
  %1668 = vmatpush.msra.mxu0 %v1606
  %1669 = vmatpush.msra.mxu0 %v1602
  %1670 = vmatpush.msra.mxu0 %v1598
  %1671 = vmatpush.msra.mxu0 %v1594
  %1672 = vmatpush.msra.mxu0 %v1590
  %1673 = vmatpush.msra.mxu0 %v1586
  %1674 = vmatpush.msra.mxu0 %v1582
  %1675 = vmatpush.msra.mxu0 %v1578
  %1676 = vmatpush.msra.mxu0 %v1574
  %1677 = vmatpush.msra.mxu0 %v1570
  %1678 = vmatpush.msra.mxu0 %v1566
  %1679 = vmatpush.msra.mxu0 %v1562
  %1680 = vmatmul.f32.gmra.mxu0 %v1275
  %v1681 = vpop.f32.mrf.mxu0
  %v1682 = vadd.f32 0.0, %v1681
  %1683 = vdwg.mxu0
  %1684 = vmatpush.msra.mxu0 %v1623
  %1685 = vmatpush.msra.mxu0 %v1619
  %1686 = vmatpush.msra.mxu0 %v1615
  %1687 = vmatpush.msra.mxu0 %v1611
  %1688 = vmatpush.msra.mxu0 %v1607
  %1689 = vmatpush.msra.mxu0 %v1603
  %1690 = vmatpush.msra.mxu0 %v1599
  %1691 = vmatpush.msra.mxu0 %v1595
  %1692 = vmatpush.msra.mxu0 %v1591
  %1693 = vmatpush.msra.mxu0 %v1587
  %1694 = vmatpush.msra.mxu0 %v1583
  %1695 = vmatpush.msra.mxu0 %v1579
  %1696 = vmatpush.msra.mxu0 %v1575
  %1697 = vmatpush.msra.mxu0 %v1571
  %1698 = vmatpush.msra.mxu0 %v1567
  %1699 = vmatpush.msra.mxu0 %v1563
  %1700 = vmatmul.f32.gmra.mxu0 %v1275
  %v1701 = vpop.f32.mrf.mxu0
  %v1702 = vadd.f32 0.0, %v1701
  %1703 = vdwg.mxu0
  %v1708 = vrot.slane %v1662, 6
  %v1709 = vrot.slane %v1682, 4
  %v1710 = vrot.slane %v1702, 2
  %v1711 = vsel %vm178, %v1642, %v1708
  %v1712 = vsel %vm180, %v1709, %v1710
  %v1713 = vsel %vm182, %v1711, %v1712
  %v1715 = vadd.f32 %v1559, %v1713
  %v1716 = vxor.u32 %v1715, 2147483648
  %v1717 = vmul.f32 %v1716, 1.442695
  %v1718 = vpow.pop %v1717
  %v1719 = vadd.f32 %v1718, 1.0
  %v1720 = vrcp.pop %v1719
  %v1721 = vmul.f32 %v1719, %v1720
  %v1722 = vsub.f32 1.0, %v1721
  %v1723 = vmul.f32 %v1720, %v1722
  %v1724 = vadd.f32 %v1720, %v1723
  %vm1725 = vweird.f32 %v1719
  %vm1726 = vweird.f32 %v1720
  %vm1727 = vmor %vm1725, %vm1726
  %v1728 = vsel %vm1727, %v1720, %v1724
  %v1729 = vand.u32 2147483647, %v1719
  %vm1730 = vcmp.eq.f32.partialorder %v1729, 8.507059e+37
  %v1731 = vand.u32 %v1719, 2147483648
  %v1732 = vor.u32 1.1754944e-38, %v1731
  %v1733 = vsel %vm1730, %v1732, %v1728
  %v1734 = vmul.f32 1.0, %v1733
  %v1736 = vrot.slane %v1715, 2
  %v1738 = vxor.u32 %v1736, 2147483648
  %v1739 = vmul.f32 %v1738, 1.442695
  %v1740 = vpow.pop %v1739
  %v1741 = vadd.f32 %v1740, 1.0
  %v1742 = vrcp.pop %v1741
  %v1743 = vmul.f32 %v1741, %v1742
  %v1744 = vsub.f32 1.0, %v1743
  %v1745 = vmul.f32 %v1742, %v1744
  %v1746 = vadd.f32 %v1742, %v1745
  %vm1747 = vweird.f32 %v1741
  %vm1748 = vweird.f32 %v1742
  %vm1749 = vmor %vm1747, %vm1748
  %v1750 = vsel %vm1749, %v1742, %v1746
  %v1751 = vand.u32 2147483647, %v1741
  %vm1752 = vcmp.eq.f32.partialorder %v1751, 8.507059e+37
  %v1753 = vand.u32 %v1741, 2147483648
  %v1754 = vor.u32 1.1754944e-38, %v1753
  %v1755 = vsel %vm1752, %v1754, %v1750
  %v1756 = vmul.f32 1.0, %v1755
  %v1757 = vrot.slane %v1715, 4
  %v1759 = vtanh.pop %v1757
  %v1760 = vrot.slane %v1715, 6
  %v1762 = vxor.u32 %v1760, 2147483648
  %v1763 = vmul.f32 %v1762, 1.442695
  %v1764 = vpow.pop %v1763
  %v1765 = vadd.f32 %v1764, 1.0
  %v1766 = vrcp.pop %v1765
  %v1767 = vmul.f32 %v1765, %v1766
  %v1768 = vsub.f32 1.0, %v1767
  %v1769 = vmul.f32 %v1766, %v1768
  %v1770 = vadd.f32 %v1766, %v1769
  %vm1771 = vweird.f32 %v1765
  %vm1772 = vweird.f32 %v1766
  %vm1773 = vmor %vm1771, %vm1772
  %v1774 = vsel %vm1773, %v1766, %v1770
  %v1775 = vand.u32 2147483647, %v1765
  %vm1776 = vcmp.eq.f32.partialorder %v1775, 8.507059e+37
  %v1777 = vand.u32 %v1765, 2147483648
  %v1778 = vor.u32 1.1754944e-38, %v1777
  %v1779 = vsel %vm1776, %v1778, %v1774
  %v1780 = vmul.f32 1.0, %v1779
  %v1781 = vmul.f32 %v1756, %v1273
  %v1782 = vmul.f32 %v1734, %v1759
  %v1783 = vadd.f32 %v1781, %v1782
  %v1784 = vtanh.pop %v1783
  %v1785 = vmul.f32 %v1780, %v1784
  %s1786 = scalar_lea.vmem %s0, 96
  %v1787 = vld [vmem:[%s1786] sm:$0xff]
  %v1788 = vld [vmem:[%s258] sm:$0xff]
  %v1789 = vld [vmem:[%s258 + $0x8] sm:$0xff]
  %v1790 = vld [vmem:[%s258 + $0x10] sm:$0xff]
  %v1791 = vld [vmem:[%s258 + $0x18] sm:$0xff]
  %v1792 = vld [vmem:[%s258 + $0x20] sm:$0xff]
  %v1793 = vld [vmem:[%s258 + $0x28] sm:$0xff]
  %v1794 = vld [vmem:[%s258 + $0x30] sm:$0xff]
  %v1795 = vld [vmem:[%s258 + $0x38] sm:$0xff]
  %v1796 = vld [vmem:[%s258 + $0x40] sm:$0xff]
  %v1797 = vld [vmem:[%s258 + $0x48] sm:$0xff]
  %v1798 = vld [vmem:[%s258 + $0x50] sm:$0xff]
  %v1799 = vld [vmem:[%s258 + $0x58] sm:$0xff]
  %v1800 = vld [vmem:[%s258 + $0x60] sm:$0xff]
  %v1801 = vld [vmem:[%s258 + $0x68] sm:$0xff]
  %v1802 = vld [vmem:[%s258 + $0x70] sm:$0xff]
  %v1803 = vld [vmem:[%s258 + $0x78] sm:$0xff]
  %v1804 = vld [vmem:[%s258 + $0x80] sm:$0xff]
  %v1805 = vld [vmem:[%s258 + $0x88] sm:$0xff]
  %v1806 = vld [vmem:[%s258 + $0x90] sm:$0xff]
  %v1807 = vld [vmem:[%s258 + $0x98] sm:$0xff]
  %v1808 = vld [vmem:[%s258 + $0xa0] sm:$0xff]
  %v1809 = vld [vmem:[%s258 + $0xa8] sm:$0xff]
  %v1810 = vld [vmem:[%s258 + $0xb0] sm:$0xff]
  %v1811 = vld [vmem:[%s258 + $0xb8] sm:$0xff]
  %v1812 = vld [vmem:[%s258 + $0xc0] sm:$0xff]
  %v1813 = vld [vmem:[%s258 + $0xc8] sm:$0xff]
  %v1814 = vld [vmem:[%s258 + $0xd0] sm:$0xff]
  %v1815 = vld [vmem:[%s258 + $0xd8] sm:$0xff]
  %v1816 = vld [vmem:[%s258 + $0xe0] sm:$0xff]
  %v1817 = vld [vmem:[%s258 + $0xe8] sm:$0xff]
  %v1818 = vld [vmem:[%s258 + $0xf0] sm:$0xff]
  %v1819 = vld [vmem:[%s258 + $0xf8] sm:$0xff]
  %v1820 = vld [vmem:[%s258 + $0x100] sm:$0xff]
  %v1821 = vld [vmem:[%s258 + $0x108] sm:$0xff]
  %v1822 = vld [vmem:[%s258 + $0x110] sm:$0xff]
  %v1823 = vld [vmem:[%s258 + $0x118] sm:$0xff]
  %v1824 = vld [vmem:[%s258 + $0x120] sm:$0xff]
  %v1825 = vld [vmem:[%s258 + $0x128] sm:$0xff]
  %v1826 = vld [vmem:[%s258 + $0x130] sm:$0xff]
  %v1827 = vld [vmem:[%s258 + $0x138] sm:$0xff]
  %v1828 = vld [vmem:[%s258 + $0x140] sm:$0xff]
  %v1829 = vld [vmem:[%s258 + $0x148] sm:$0xff]
  %v1830 = vld [vmem:[%s258 + $0x150] sm:$0xff]
  %v1831 = vld [vmem:[%s258 + $0x158] sm:$0xff]
  %v1832 = vld [vmem:[%s258 + $0x160] sm:$0xff]
  %v1833 = vld [vmem:[%s258 + $0x168] sm:$0xff]
  %v1834 = vld [vmem:[%s258 + $0x170] sm:$0xff]
  %v1835 = vld [vmem:[%s258 + $0x178] sm:$0xff]
  %v1836 = vld [vmem:[%s258 + $0x180] sm:$0xff]
  %v1837 = vld [vmem:[%s258 + $0x188] sm:$0xff]
  %v1838 = vld [vmem:[%s258 + $0x190] sm:$0xff]
  %v1839 = vld [vmem:[%s258 + $0x198] sm:$0xff]
  %v1840 = vld [vmem:[%s258 + $0x1a0] sm:$0xff]
  %v1841 = vld [vmem:[%s258 + $0x1a8] sm:$0xff]
  %v1842 = vld [vmem:[%s258 + $0x1b0] sm:$0xff]
  %v1843 = vld [vmem:[%s258 + $0x1b8] sm:$0xff]
  %v1844 = vld [vmem:[%s258 + $0x1c0] sm:$0xff]
  %v1845 = vld [vmem:[%s258 + $0x1c8] sm:$0xff]
  %v1846 = vld [vmem:[%s258 + $0x1d0] sm:$0xff]
  %v1847 = vld [vmem:[%s258 + $0x1d8] sm:$0xff]
  %v1848 = vld [vmem:[%s258 + $0x1e0] sm:$0xff]
  %v1849 = vld [vmem:[%s258 + $0x1e8] sm:$0xff]
  %v1850 = vld [vmem:[%s258 + $0x1f0] sm:$0xff]
  %v1851 = vld [vmem:[%s258 + $0x1f8] sm:$0xff]
  %1852 = vmatpush.msra.mxu0 %v1848
  %1853 = vmatpush.msra.mxu0 %v1844
  %1854 = vmatpush.msra.mxu0 %v1840
  %1855 = vmatpush.msra.mxu0 %v1836
  %1856 = vmatpush.msra.mxu0 %v1832
  %1857 = vmatpush.msra.mxu0 %v1828
  %1858 = vmatpush.msra.mxu0 %v1824
  %1859 = vmatpush.msra.mxu0 %v1820
  %1860 = vmatpush.msra.mxu0 %v1816
  %1861 = vmatpush.msra.mxu0 %v1812
  %1862 = vmatpush.msra.mxu0 %v1808
  %1863 = vmatpush.msra.mxu0 %v1804
  %1864 = vmatpush.msra.mxu0 %v1800
  %1865 = vmatpush.msra.mxu0 %v1796
  %1866 = vmatpush.msra.mxu0 %v1792
  %1867 = vmatpush.msra.mxu0 %v1788
  %1868 = vmatmul.f32.gmra.mxu0 %v1503
  %v1869 = vpop.f32.mrf.mxu0
  %v1870 = vadd.f32 0.0, %v1869
  %1871 = vdwg.mxu0
  %1872 = vmatpush.msra.mxu0 %v1849
  %1873 = vmatpush.msra.mxu0 %v1845
  %1874 = vmatpush.msra.mxu0 %v1841
  %1875 = vmatpush.msra.mxu0 %v1837
  %1876 = vmatpush.msra.mxu0 %v1833
  %1877 = vmatpush.msra.mxu0 %v1829
  %1878 = vmatpush.msra.mxu0 %v1825
  %1879 = vmatpush.msra.mxu0 %v1821
  %1880 = vmatpush.msra.mxu0 %v1817
  %1881 = vmatpush.msra.mxu0 %v1813
  %1882 = vmatpush.msra.mxu0 %v1809
  %1883 = vmatpush.msra.mxu0 %v1805
  %1884 = vmatpush.msra.mxu0 %v1801
  %1885 = vmatpush.msra.mxu0 %v1797
  %1886 = vmatpush.msra.mxu0 %v1793
  %1887 = vmatpush.msra.mxu0 %v1789
  %1888 = vmatmul.f32.gmra.mxu0 %v1503
  %v1889 = vpop.f32.mrf.mxu0
  %v1890 = vadd.f32 0.0, %v1889
  %1891 = vdwg.mxu0
  %1892 = vmatpush.msra.mxu0 %v1850
  %1893 = vmatpush.msra.mxu0 %v1846
  %1894 = vmatpush.msra.mxu0 %v1842
  %1895 = vmatpush.msra.mxu0 %v1838
  %1896 = vmatpush.msra.mxu0 %v1834
  %1897 = vmatpush.msra.mxu0 %v1830
  %1898 = vmatpush.msra.mxu0 %v1826
  %1899 = vmatpush.msra.mxu0 %v1822
  %1900 = vmatpush.msra.mxu0 %v1818
  %1901 = vmatpush.msra.mxu0 %v1814
  %1902 = vmatpush.msra.mxu0 %v1810
  %1903 = vmatpush.msra.mxu0 %v1806
  %1904 = vmatpush.msra.mxu0 %v1802
  %1905 = vmatpush.msra.mxu0 %v1798
  %1906 = vmatpush.msra.mxu0 %v1794
  %1907 = vmatpush.msra.mxu0 %v1790
  %1908 = vmatmul.f32.gmra.mxu0 %v1503
  %v1909 = vpop.f32.mrf.mxu0
  %v1910 = vadd.f32 0.0, %v1909
  %1911 = vdwg.mxu0
  %1912 = vmatpush.msra.mxu0 %v1851
  %1913 = vmatpush.msra.mxu0 %v1847
  %1914 = vmatpush.msra.mxu0 %v1843
  %1915 = vmatpush.msra.mxu0 %v1839
  %1916 = vmatpush.msra.mxu0 %v1835
  %1917 = vmatpush.msra.mxu0 %v1831
  %1918 = vmatpush.msra.mxu0 %v1827
  %1919 = vmatpush.msra.mxu0 %v1823
  %1920 = vmatpush.msra.mxu0 %v1819
  %1921 = vmatpush.msra.mxu0 %v1815
  %1922 = vmatpush.msra.mxu0 %v1811
  %1923 = vmatpush.msra.mxu0 %v1807
  %1924 = vmatpush.msra.mxu0 %v1803
  %1925 = vmatpush.msra.mxu0 %v1799
  %1926 = vmatpush.msra.mxu0 %v1795
  %1927 = vmatpush.msra.mxu0 %v1791
  %1928 = vmatmul.f32.gmra.mxu0 %v1503
  %v1929 = vpop.f32.mrf.mxu0
  %v1930 = vadd.f32 0.0, %v1929
  %1931 = vdwg.mxu0
  %v1936 = vrot.slane %v1890, 6
  %v1937 = vrot.slane %v1910, 4
  %v1938 = vrot.slane %v1930, 2
  %v1939 = vsel %vm178, %v1870, %v1936
  %v1940 = vsel %vm180, %v1937, %v1938
  %v1941 = vsel %vm182, %v1939, %v1940
  %v1943 = vadd.f32 %v1787, %v1941
  %v1944 = vxor.u32 %v1943, 2147483648
  %v1945 = vmul.f32 %v1944, 1.442695
  %v1946 = vpow.pop %v1945
  %v1947 = vadd.f32 %v1946, 1.0
  %v1948 = vrcp.pop %v1947
  %v1949 = vmul.f32 %v1947, %v1948
  %v1950 = vsub.f32 1.0, %v1949
  %v1951 = vmul.f32 %v1948, %v1950
  %v1952 = vadd.f32 %v1948, %v1951
  %vm1953 = vweird.f32 %v1947
  %vm1954 = vweird.f32 %v1948
  %vm1955 = vmor %vm1953, %vm1954
  %v1956 = vsel %vm1955, %v1948, %v1952
  %v1957 = vand.u32 2147483647, %v1947
  %vm1958 = vcmp.eq.f32.partialorder %v1957, 8.507059e+37
  %v1959 = vand.u32 %v1947, 2147483648
  %v1960 = vor.u32 1.1754944e-38, %v1959
  %v1961 = vsel %vm1958, %v1960, %v1956
  %v1962 = vmul.f32 1.0, %v1961
  %v1964 = vrot.slane %v1943, 2
  %v1966 = vxor.u32 %v1964, 2147483648
  %v1967 = vmul.f32 %v1966, 1.442695
  %v1968 = vpow.pop %v1967
  %v1969 = vadd.f32 %v1968, 1.0
  %v1970 = vrcp.pop %v1969
  %v1971 = vmul.f32 %v1969, %v1970
  %v1972 = vsub.f32 1.0, %v1971
  %v1973 = vmul.f32 %v1970, %v1972
  %v1974 = vadd.f32 %v1970, %v1973
  %vm1975 = vweird.f32 %v1969
  %vm1976 = vweird.f32 %v1970
  %vm1977 = vmor %vm1975, %vm1976
  %v1978 = vsel %vm1977, %v1970, %v1974
  %v1979 = vand.u32 2147483647, %v1969
  %vm1980 = vcmp.eq.f32.partialorder %v1979, 8.507059e+37
  %v1981 = vand.u32 %v1969, 2147483648
  %v1982 = vor.u32 1.1754944e-38, %v1981
  %v1983 = vsel %vm1980, %v1982, %v1978
  %v1984 = vmul.f32 1.0, %v1983
  %v1985 = vrot.slane %v1943, 4
  %v1987 = vtanh.pop %v1985
  %v1988 = vrot.slane %v1943, 6
  %v1990 = vxor.u32 %v1988, 2147483648
  %v1991 = vmul.f32 %v1990, 1.442695
  %v1992 = vpow.pop %v1991
  %v1993 = vadd.f32 %v1992, 1.0
  %v1994 = vrcp.pop %v1993
  %v1995 = vmul.f32 %v1993, %v1994
  %v1996 = vsub.f32 1.0, %v1995
  %v1997 = vmul.f32 %v1994, %v1996
  %v1998 = vadd.f32 %v1994, %v1997
  %vm1999 = vweird.f32 %v1993
  %vm2000 = vweird.f32 %v1994
  %vm2001 = vmor %vm1999, %vm2000
  %v2002 = vsel %vm2001, %v1994, %v1998
  %v2003 = vand.u32 2147483647, %v1993
  %vm2004 = vcmp.eq.f32.partialorder %v2003, 8.507059e+37
  %v2005 = vand.u32 %v1993, 2147483648
  %v2006 = vor.u32 1.1754944e-38, %v2005
  %v2007 = vsel %vm2004, %v2006, %v2002
  %v2008 = vmul.f32 1.0, %v2007
  %v2009 = vmul.f32 %v1984, %v1501
  %v2010 = vmul.f32 %v1962, %v1987
  %v2011 = vadd.f32 %v2009, %v2010
  %v2012 = vtanh.pop %v2011
  %v2013 = vmul.f32 %v2008, %v2012
  %2014 = vrot.lane.b32.xlu0 %v1785, 127
  %v2015 = vpop.permute.xlu0 %2014
  %2016 = vrot.lane.b32.xlu0 %v1785, 1
  %v2017 = vpop.permute.xlu0 %2016
  %v2018 = vsel %vm25, %v2015, %v2017
  %v2019 = vsub.f32 %v1785, %v2018
  %v2020 = vxor.u32 %v2019, 2147483648
  %v2021 = vmul.f32 %v2020, 1.442695
  %v2022 = vpow.pop %v2021
  %v2023 = vadd.f32 %v2022, 1.0
  %v2024 = vrcp.pop %v2023
  %v2025 = vmul.f32 %v2023, %v2024
  %v2026 = vsub.f32 1.0, %v2025
  %v2027 = vmul.f32 %v2024, %v2026
  %v2028 = vadd.f32 %v2024, %v2027
  %vm2029 = vweird.f32 %v2023
  %vm2030 = vweird.f32 %v2024
  %vm2031 = vmor %vm2029, %vm2030
  %v2032 = vsel %vm2031, %v2024, %v2028
  %v2033 = vand.u32 2147483647, %v2023
  %vm2034 = vcmp.eq.f32.partialorder %v2033, 8.507059e+37
  %v2035 = vand.u32 %v2023, 2147483648
  %v2036 = vor.u32 1.1754944e-38, %v2035
  %v2037 = vsel %vm2034, %v2036, %v2032
  %v2038 = vmul.f32 1.0, %v2037
  %s2039 = scalar_lea.vmem %s2, 6
  %2040 = vst [vmem:[%s2039] sm:$0x3] %v2038
  %2041 = vrot.lane.b32.xlu0 %v2013, 127
  %v2042 = vpop.permute.xlu0 %2041
  %2043 = vrot.lane.b32.xlu0 %v2013, 1
  %v2044 = vpop.permute.xlu0 %2043
  %v2045 = vsel %vm25, %v2042, %v2044
  %v2046 = vsub.f32 %v2013, %v2045
  %v2047 = vxor.u32 %v2046, 2147483648
  %v2048 = vmul.f32 %v2047, 1.442695
  %v2049 = vpow.pop %v2048
  %v2050 = vadd.f32 %v2049, 1.0
  %v2051 = vrcp.pop %v2050
  %v2052 = vmul.f32 %v2050, %v2051
  %v2053 = vsub.f32 1.0, %v2052
  %v2054 = vmul.f32 %v2051, %v2053
  %v2055 = vadd.f32 %v2051, %v2054
  %vm2056 = vweird.f32 %v2050
  %vm2057 = vweird.f32 %v2051
  %vm2058 = vmor %vm2056, %vm2057
  %v2059 = vsel %vm2058, %v2051, %v2055
  %v2060 = vand.u32 2147483647, %v2050
  %vm2061 = vcmp.eq.f32.partialorder %v2060, 8.507059e+37
  %v2062 = vand.u32 %v2050, 2147483648
  %v2063 = vor.u32 1.1754944e-38, %v2062
  %v2064 = vsel %vm2061, %v2063, %v2059
  %v2065 = vmul.f32 1.0, %v2064
  %s2066 = scalar_lea.vmem %s2, 24
  %2067 = vst [vmem:[%s2066] sm:$0x3] %v2065
  %s2068 = scalar_lea.vmem %s0, 32
  %v2069 = vld [vmem:[%s2068] sm:$0xff]
  %v2070 = vld [vmem:[%s1] sm:$0xff]
  %v2071 = vld [vmem:[%s1 + $0x8] sm:$0xff]
  %v2072 = vld [vmem:[%s1 + $0x10] sm:$0xff]
  %v2073 = vld [vmem:[%s1 + $0x18] sm:$0xff]
  %v2074 = vld [vmem:[%s1 + $0x20] sm:$0xff]
  %v2075 = vld [vmem:[%s1 + $0x28] sm:$0xff]
  %v2076 = vld [vmem:[%s1 + $0x30] sm:$0xff]
  %v2077 = vld [vmem:[%s1 + $0x38] sm:$0xff]
  %v2078 = vld [vmem:[%s1 + $0x40] sm:$0xff]
  %v2079 = vld [vmem:[%s1 + $0x48] sm:$0xff]
  %v2080 = vld [vmem:[%s1 + $0x50] sm:$0xff]
  %v2081 = vld [vmem:[%s1 + $0x58] sm:$0xff]
  %v2082 = vld [vmem:[%s1 + $0x60] sm:$0xff]
  %v2083 = vld [vmem:[%s1 + $0x68] sm:$0xff]
  %v2084 = vld [vmem:[%s1 + $0x70] sm:$0xff]
  %v2085 = vld [vmem:[%s1 + $0x78] sm:$0xff]
  %v2086 = vld [vmem:[%s1 + $0x80] sm:$0xff]
  %v2087 = vld [vmem:[%s1 + $0x88] sm:$0xff]
  %v2088 = vld [vmem:[%s1 + $0x90] sm:$0xff]
  %v2089 = vld [vmem:[%s1 + $0x98] sm:$0xff]
  %v2090 = vld [vmem:[%s1 + $0xa0] sm:$0xff]
  %v2091 = vld [vmem:[%s1 + $0xa8] sm:$0xff]
  %v2092 = vld [vmem:[%s1 + $0xb0] sm:$0xff]
  %v2093 = vld [vmem:[%s1 + $0xb8] sm:$0xff]
  %v2094 = vld [vmem:[%s1 + $0xc0] sm:$0xff]
  %v2095 = vld [vmem:[%s1 + $0xc8] sm:$0xff]
  %v2096 = vld [vmem:[%s1 + $0xd0] sm:$0xff]
  %v2097 = vld [vmem:[%s1 + $0xd8] sm:$0xff]
  %v2098 = vld [vmem:[%s1 + $0xe0] sm:$0xff]
  %v2099 = vld [vmem:[%s1 + $0xe8] sm:$0xff]
  %v2100 = vld [vmem:[%s1 + $0xf0] sm:$0xff]
  %v2101 = vld [vmem:[%s1 + $0xf8] sm:$0xff]
  %v2102 = vld [vmem:[%s1 + $0x100] sm:$0xff]
  %v2103 = vld [vmem:[%s1 + $0x108] sm:$0xff]
  %v2104 = vld [vmem:[%s1 + $0x110] sm:$0xff]
  %v2105 = vld [vmem:[%s1 + $0x118] sm:$0xff]
  %v2106 = vld [vmem:[%s1 + $0x120] sm:$0xff]
  %v2107 = vld [vmem:[%s1 + $0x128] sm:$0xff]
  %v2108 = vld [vmem:[%s1 + $0x130] sm:$0xff]
  %v2109 = vld [vmem:[%s1 + $0x138] sm:$0xff]
  %v2110 = vld [vmem:[%s1 + $0x140] sm:$0xff]
  %v2111 = vld [vmem:[%s1 + $0x148] sm:$0xff]
  %v2112 = vld [vmem:[%s1 + $0x150] sm:$0xff]
  %v2113 = vld [vmem:[%s1 + $0x158] sm:$0xff]
  %v2114 = vld [vmem:[%s1 + $0x160] sm:$0xff]
  %v2115 = vld [vmem:[%s1 + $0x168] sm:$0xff]
  %v2116 = vld [vmem:[%s1 + $0x170] sm:$0xff]
  %v2117 = vld [vmem:[%s1 + $0x178] sm:$0xff]
  %v2118 = vld [vmem:[%s1 + $0x180] sm:$0xff]
  %v2119 = vld [vmem:[%s1 + $0x188] sm:$0xff]
  %v2120 = vld [vmem:[%s1 + $0x190] sm:$0xff]
  %v2121 = vld [vmem:[%s1 + $0x198] sm:$0xff]
  %v2122 = vld [vmem:[%s1 + $0x1a0] sm:$0xff]
  %v2123 = vld [vmem:[%s1 + $0x1a8] sm:$0xff]
  %v2124 = vld [vmem:[%s1 + $0x1b0] sm:$0xff]
  %v2125 = vld [vmem:[%s1 + $0x1b8] sm:$0xff]
  %v2126 = vld [vmem:[%s1 + $0x1c0] sm:$0xff]
  %v2127 = vld [vmem:[%s1 + $0x1c8] sm:$0xff]
  %v2128 = vld [vmem:[%s1 + $0x1d0] sm:$0xff]
  %v2129 = vld [vmem:[%s1 + $0x1d8] sm:$0xff]
  %v2130 = vld [vmem:[%s1 + $0x1e0] sm:$0xff]
  %v2131 = vld [vmem:[%s1 + $0x1e8] sm:$0xff]
  %v2132 = vld [vmem:[%s1 + $0x1f0] sm:$0xff]
  %v2133 = vld [vmem:[%s1 + $0x1f8] sm:$0xff]
  %2134 = vmatpush.msra.mxu0 %v2130
  %2135 = vmatpush.msra.mxu0 %v2126
  %2136 = vmatpush.msra.mxu0 %v2122
  %2137 = vmatpush.msra.mxu0 %v2118
  %2138 = vmatpush.msra.mxu0 %v2114
  %2139 = vmatpush.msra.mxu0 %v2110
  %2140 = vmatpush.msra.mxu0 %v2106
  %2141 = vmatpush.msra.mxu0 %v2102
  %2142 = vmatpush.msra.mxu0 %v2098
  %2143 = vmatpush.msra.mxu0 %v2094
  %2144 = vmatpush.msra.mxu0 %v2090
  %2145 = vmatpush.msra.mxu0 %v2086
  %2146 = vmatpush.msra.mxu0 %v2082
  %2147 = vmatpush.msra.mxu0 %v2078
  %2148 = vmatpush.msra.mxu0 %v2074
  %2149 = vmatpush.msra.mxu0 %v2070
  %2150 = vmatmul.f32.gmra.mxu0 %v1785
  %v2151 = vpop.f32.mrf.mxu0
  %v2152 = vadd.f32 0.0, %v2151
  %2153 = vdwg.mxu0
  %2154 = vmatpush.msra.mxu0 %v2131
  %2155 = vmatpush.msra.mxu0 %v2127
  %2156 = vmatpush.msra.mxu0 %v2123
  %2157 = vmatpush.msra.mxu0 %v2119
  %2158 = vmatpush.msra.mxu0 %v2115
  %2159 = vmatpush.msra.mxu0 %v2111
  %2160 = vmatpush.msra.mxu0 %v2107
  %2161 = vmatpush.msra.mxu0 %v2103
  %2162 = vmatpush.msra.mxu0 %v2099
  %2163 = vmatpush.msra.mxu0 %v2095
  %2164 = vmatpush.msra.mxu0 %v2091
  %2165 = vmatpush.msra.mxu0 %v2087
  %2166 = vmatpush.msra.mxu0 %v2083
  %2167 = vmatpush.msra.mxu0 %v2079
  %2168 = vmatpush.msra.mxu0 %v2075
  %2169 = vmatpush.msra.mxu0 %v2071
  %2170 = vmatmul.f32.gmra.mxu0 %v1785
  %v2171 = vpop.f32.mrf.mxu0
  %v2172 = vadd.f32 0.0, %v2171
  %2173 = vdwg.mxu0
  %2174 = vmatpush.msra.mxu0 %v2132
  %2175 = vmatpush.msra.mxu0 %v2128
  %2176 = vmatpush.msra.mxu0 %v2124
  %2177 = vmatpush.msra.mxu0 %v2120
  %2178 = vmatpush.msra.mxu0 %v2116
  %2179 = vmatpush.msra.mxu0 %v2112
  %2180 = vmatpush.msra.mxu0 %v2108
  %2181 = vmatpush.msra.mxu0 %v2104
  %2182 = vmatpush.msra.mxu0 %v2100
  %2183 = vmatpush.msra.mxu0 %v2096
  %2184 = vmatpush.msra.mxu0 %v2092
  %2185 = vmatpush.msra.mxu0 %v2088
  %2186 = vmatpush.msra.mxu0 %v2084
  %2187 = vmatpush.msra.mxu0 %v2080
  %2188 = vmatpush.msra.mxu0 %v2076
  %2189 = vmatpush.msra.mxu0 %v2072
  %2190 = vmatmul.f32.gmra.mxu0 %v1785
  %v2191 = vpop.f32.mrf.mxu0
  %v2192 = vadd.f32 0.0, %v2191
  %2193 = vdwg.mxu0
  %2194 = vmatpush.msra.mxu0 %v2133
  %2195 = vmatpush.msra.mxu0 %v2129
  %2196 = vmatpush.msra.mxu0 %v2125
  %2197 = vmatpush.msra.mxu0 %v2121
  %2198 = vmatpush.msra.mxu0 %v2117
  %2199 = vmatpush.msra.mxu0 %v2113
  %2200 = vmatpush.msra.mxu0 %v2109
  %2201 = vmatpush.msra.mxu0 %v2105
  %2202 = vmatpush.msra.mxu0 %v2101
  %2203 = vmatpush.msra.mxu0 %v2097
  %2204 = vmatpush.msra.mxu0 %v2093
  %2205 = vmatpush.msra.mxu0 %v2089
  %2206 = vmatpush.msra.mxu0 %v2085
  %2207 = vmatpush.msra.mxu0 %v2081
  %2208 = vmatpush.msra.mxu0 %v2077
  %2209 = vmatpush.msra.mxu0 %v2073
  %2210 = vmatmul.f32.gmra.mxu0 %v1785
  %v2211 = vpop.f32.mrf.mxu0
  %v2212 = vadd.f32 0.0, %v2211
  %2213 = vdwg.mxu0
  %v2218 = vrot.slane %v2172, 6
  %v2219 = vrot.slane %v2192, 4
  %v2220 = vrot.slane %v2212, 2
  %v2221 = vsel %vm178, %v2152, %v2218
  %v2222 = vsel %vm180, %v2219, %v2220
  %v2223 = vsel %vm182, %v2221, %v2222
  %v2225 = vadd.f32 %v2069, %v2223
  %v2226 = vxor.u32 %v2225, 2147483648
  %v2227 = vmul.f32 %v2226, 1.442695
  %v2228 = vpow.pop %v2227
  %v2229 = vadd.f32 %v2228, 1.0
  %v2230 = vrcp.pop %v2229
  %v2231 = vmul.f32 %v2229, %v2230
  %v2232 = vsub.f32 1.0, %v2231
  %v2233 = vmul.f32 %v2230, %v2232
  %v2234 = vadd.f32 %v2230, %v2233
  %vm2235 = vweird.f32 %v2229
  %vm2236 = vweird.f32 %v2230
  %vm2237 = vmor %vm2235, %vm2236
  %v2238 = vsel %vm2237, %v2230, %v2234
  %v2239 = vand.u32 2147483647, %v2229
  %vm2240 = vcmp.eq.f32.partialorder %v2239, 8.507059e+37
  %v2241 = vand.u32 %v2229, 2147483648
  %v2242 = vor.u32 1.1754944e-38, %v2241
  %v2243 = vsel %vm2240, %v2242, %v2238
  %v2244 = vmul.f32 1.0, %v2243
  %v2246 = vrot.slane %v2225, 2
  %v2248 = vxor.u32 %v2246, 2147483648
  %v2249 = vmul.f32 %v2248, 1.442695
  %v2250 = vpow.pop %v2249
  %v2251 = vadd.f32 %v2250, 1.0
  %v2252 = vrcp.pop %v2251
  %v2253 = vmul.f32 %v2251, %v2252
  %v2254 = vsub.f32 1.0, %v2253
  %v2255 = vmul.f32 %v2252, %v2254
  %v2256 = vadd.f32 %v2252, %v2255
  %vm2257 = vweird.f32 %v2251
  %vm2258 = vweird.f32 %v2252
  %vm2259 = vmor %vm2257, %vm2258
  %v2260 = vsel %vm2259, %v2252, %v2256
  %v2261 = vand.u32 2147483647, %v2251
  %vm2262 = vcmp.eq.f32.partialorder %v2261, 8.507059e+37
  %v2263 = vand.u32 %v2251, 2147483648
  %v2264 = vor.u32 1.1754944e-38, %v2263
  %v2265 = vsel %vm2262, %v2264, %v2260
  %v2266 = vmul.f32 1.0, %v2265
  %v2267 = vrot.slane %v2225, 4
  %v2269 = vtanh.pop %v2267
  %v2270 = vrot.slane %v2225, 6
  %v2272 = vxor.u32 %v2270, 2147483648
  %v2273 = vmul.f32 %v2272, 1.442695
  %v2274 = vpow.pop %v2273
  %v2275 = vadd.f32 %v2274, 1.0
  %v2276 = vrcp.pop %v2275
  %v2277 = vmul.f32 %v2275, %v2276
  %v2278 = vsub.f32 1.0, %v2277
  %v2279 = vmul.f32 %v2276, %v2278
  %v2280 = vadd.f32 %v2276, %v2279
  %vm2281 = vweird.f32 %v2275
  %vm2282 = vweird.f32 %v2276
  %vm2283 = vmor %vm2281, %vm2282
  %v2284 = vsel %vm2283, %v2276, %v2280
  %v2285 = vand.u32 2147483647, %v2275
  %vm2286 = vcmp.eq.f32.partialorder %v2285, 8.507059e+37
  %v2287 = vand.u32 %v2275, 2147483648
  %v2288 = vor.u32 1.1754944e-38, %v2287
  %v2289 = vsel %vm2286, %v2288, %v2284
  %v2290 = vmul.f32 1.0, %v2289
  %v2291 = vmul.f32 %v2266, %v1783
  %v2292 = vmul.f32 %v2244, %v2269
  %v2293 = vadd.f32 %v2291, %v2292
  %v2294 = vtanh.pop %v2293
  %v2295 = vmul.f32 %v2290, %v2294
  %s2296 = scalar_lea.vmem %s0, 88
  %v2297 = vld [vmem:[%s2296] sm:$0xff]
  %v2298 = vld [vmem:[%s258] sm:$0xff]
  %v2299 = vld [vmem:[%s258 + $0x8] sm:$0xff]
  %v2300 = vld [vmem:[%s258 + $0x10] sm:$0xff]
  %v2301 = vld [vmem:[%s258 + $0x18] sm:$0xff]
  %v2302 = vld [vmem:[%s258 + $0x20] sm:$0xff]
  %v2303 = vld [vmem:[%s258 + $0x28] sm:$0xff]
  %v2304 = vld [vmem:[%s258 + $0x30] sm:$0xff]
  %v2305 = vld [vmem:[%s258 + $0x38] sm:$0xff]
  %v2306 = vld [vmem:[%s258 + $0x40] sm:$0xff]
  %v2307 = vld [vmem:[%s258 + $0x48] sm:$0xff]
  %v2308 = vld [vmem:[%s258 + $0x50] sm:$0xff]
  %v2309 = vld [vmem:[%s258 + $0x58] sm:$0xff]
  %v2310 = vld [vmem:[%s258 + $0x60] sm:$0xff]
  %v2311 = vld [vmem:[%s258 + $0x68] sm:$0xff]
  %v2312 = vld [vmem:[%s258 + $0x70] sm:$0xff]
  %v2313 = vld [vmem:[%s258 + $0x78] sm:$0xff]
  %v2314 = vld [vmem:[%s258 + $0x80] sm:$0xff]
  %v2315 = vld [vmem:[%s258 + $0x88] sm:$0xff]
  %v2316 = vld [vmem:[%s258 + $0x90] sm:$0xff]
  %v2317 = vld [vmem:[%s258 + $0x98] sm:$0xff]
  %v2318 = vld [vmem:[%s258 + $0xa0] sm:$0xff]
  %v2319 = vld [vmem:[%s258 + $0xa8] sm:$0xff]
  %v2320 = vld [vmem:[%s258 + $0xb0] sm:$0xff]
  %v2321 = vld [vmem:[%s258 + $0xb8] sm:$0xff]
  %v2322 = vld [vmem:[%s258 + $0xc0] sm:$0xff]
  %v2323 = vld [vmem:[%s258 + $0xc8] sm:$0xff]
  %v2324 = vld [vmem:[%s258 + $0xd0] sm:$0xff]
  %v2325 = vld [vmem:[%s258 + $0xd8] sm:$0xff]
  %v2326 = vld [vmem:[%s258 + $0xe0] sm:$0xff]
  %v2327 = vld [vmem:[%s258 + $0xe8] sm:$0xff]
  %v2328 = vld [vmem:[%s258 + $0xf0] sm:$0xff]
  %v2329 = vld [vmem:[%s258 + $0xf8] sm:$0xff]
  %v2330 = vld [vmem:[%s258 + $0x100] sm:$0xff]
  %v2331 = vld [vmem:[%s258 + $0x108] sm:$0xff]
  %v2332 = vld [vmem:[%s258 + $0x110] sm:$0xff]
  %v2333 = vld [vmem:[%s258 + $0x118] sm:$0xff]
  %v2334 = vld [vmem:[%s258 + $0x120] sm:$0xff]
  %v2335 = vld [vmem:[%s258 + $0x128] sm:$0xff]
  %v2336 = vld [vmem:[%s258 + $0x130] sm:$0xff]
  %v2337 = vld [vmem:[%s258 + $0x138] sm:$0xff]
  %v2338 = vld [vmem:[%s258 + $0x140] sm:$0xff]
  %v2339 = vld [vmem:[%s258 + $0x148] sm:$0xff]
  %v2340 = vld [vmem:[%s258 + $0x150] sm:$0xff]
  %v2341 = vld [vmem:[%s258 + $0x158] sm:$0xff]
  %v2342 = vld [vmem:[%s258 + $0x160] sm:$0xff]
  %v2343 = vld [vmem:[%s258 + $0x168] sm:$0xff]
  %v2344 = vld [vmem:[%s258 + $0x170] sm:$0xff]
  %v2345 = vld [vmem:[%s258 + $0x178] sm:$0xff]
  %v2346 = vld [vmem:[%s258 + $0x180] sm:$0xff]
  %v2347 = vld [vmem:[%s258 + $0x188] sm:$0xff]
  %v2348 = vld [vmem:[%s258 + $0x190] sm:$0xff]
  %v2349 = vld [vmem:[%s258 + $0x198] sm:$0xff]
  %v2350 = vld [vmem:[%s258 + $0x1a0] sm:$0xff]
  %v2351 = vld [vmem:[%s258 + $0x1a8] sm:$0xff]
  %v2352 = vld [vmem:[%s258 + $0x1b0] sm:$0xff]
  %v2353 = vld [vmem:[%s258 + $0x1b8] sm:$0xff]
  %v2354 = vld [vmem:[%s258 + $0x1c0] sm:$0xff]
  %v2355 = vld [vmem:[%s258 + $0x1c8] sm:$0xff]
  %v2356 = vld [vmem:[%s258 + $0x1d0] sm:$0xff]
  %v2357 = vld [vmem:[%s258 + $0x1d8] sm:$0xff]
  %v2358 = vld [vmem:[%s258 + $0x1e0] sm:$0xff]
  %v2359 = vld [vmem:[%s258 + $0x1e8] sm:$0xff]
  %v2360 = vld [vmem:[%s258 + $0x1f0] sm:$0xff]
  %v2361 = vld [vmem:[%s258 + $0x1f8] sm:$0xff]
  %2362 = vmatpush.msra.mxu0 %v2358
  %2363 = vmatpush.msra.mxu0 %v2354
  %2364 = vmatpush.msra.mxu0 %v2350
  %2365 = vmatpush.msra.mxu0 %v2346
  %2366 = vmatpush.msra.mxu0 %v2342
  %2367 = vmatpush.msra.mxu0 %v2338
  %2368 = vmatpush.msra.mxu0 %v2334
  %2369 = vmatpush.msra.mxu0 %v2330
  %2370 = vmatpush.msra.mxu0 %v2326
  %2371 = vmatpush.msra.mxu0 %v2322
  %2372 = vmatpush.msra.mxu0 %v2318
  %2373 = vmatpush.msra.mxu0 %v2314
  %2374 = vmatpush.msra.mxu0 %v2310
  %2375 = vmatpush.msra.mxu0 %v2306
  %2376 = vmatpush.msra.mxu0 %v2302
  %2377 = vmatpush.msra.mxu0 %v2298
  %2378 = vmatmul.f32.gmra.mxu0 %v2013
  %v2379 = vpop.f32.mrf.mxu0
  %v2380 = vadd.f32 0.0, %v2379
  %2381 = vdwg.mxu0
  %2382 = vmatpush.msra.mxu0 %v2359
  %2383 = vmatpush.msra.mxu0 %v2355
  %2384 = vmatpush.msra.mxu0 %v2351
  %2385 = vmatpush.msra.mxu0 %v2347
  %2386 = vmatpush.msra.mxu0 %v2343
  %2387 = vmatpush.msra.mxu0 %v2339
  %2388 = vmatpush.msra.mxu0 %v2335
  %2389 = vmatpush.msra.mxu0 %v2331
  %2390 = vmatpush.msra.mxu0 %v2327
  %2391 = vmatpush.msra.mxu0 %v2323
  %2392 = vmatpush.msra.mxu0 %v2319
  %2393 = vmatpush.msra.mxu0 %v2315
  %2394 = vmatpush.msra.mxu0 %v2311
  %2395 = vmatpush.msra.mxu0 %v2307
  %2396 = vmatpush.msra.mxu0 %v2303
  %2397 = vmatpush.msra.mxu0 %v2299
  %2398 = vmatmul.f32.gmra.mxu0 %v2013
  %v2399 = vpop.f32.mrf.mxu0
  %v2400 = vadd.f32 0.0, %v2399
  %2401 = vdwg.mxu0
  %2402 = vmatpush.msra.mxu0 %v2360
  %2403 = vmatpush.msra.mxu0 %v2356
  %2404 = vmatpush.msra.mxu0 %v2352
  %2405 = vmatpush.msra.mxu0 %v2348
  %2406 = vmatpush.msra.mxu0 %v2344
  %2407 = vmatpush.msra.mxu0 %v2340
  %2408 = vmatpush.msra.mxu0 %v2336
  %2409 = vmatpush.msra.mxu0 %v2332
  %2410 = vmatpush.msra.mxu0 %v2328
  %2411 = vmatpush.msra.mxu0 %v2324
  %2412 = vmatpush.msra.mxu0 %v2320
  %2413 = vmatpush.msra.mxu0 %v2316
  %2414 = vmatpush.msra.mxu0 %v2312
  %2415 = vmatpush.msra.mxu0 %v2308
  %2416 = vmatpush.msra.mxu0 %v2304
  %2417 = vmatpush.msra.mxu0 %v2300
  %2418 = vmatmul.f32.gmra.mxu0 %v2013
  %v2419 = vpop.f32.mrf.mxu0
  %v2420 = vadd.f32 0.0, %v2419
  %2421 = vdwg.mxu0
  %2422 = vmatpush.msra.mxu0 %v2361
  %2423 = vmatpush.msra.mxu0 %v2357
  %2424 = vmatpush.msra.mxu0 %v2353
  %2425 = vmatpush.msra.mxu0 %v2349
  %2426 = vmatpush.msra.mxu0 %v2345
  %2427 = vmatpush.msra.mxu0 %v2341
  %2428 = vmatpush.msra.mxu0 %v2337
  %2429 = vmatpush.msra.mxu0 %v2333
  %2430 = vmatpush.msra.mxu0 %v2329
  %2431 = vmatpush.msra.mxu0 %v2325
  %2432 = vmatpush.msra.mxu0 %v2321
  %2433 = vmatpush.msra.mxu0 %v2317
  %2434 = vmatpush.msra.mxu0 %v2313
  %2435 = vmatpush.msra.mxu0 %v2309
  %2436 = vmatpush.msra.mxu0 %v2305
  %2437 = vmatpush.msra.mxu0 %v2301
  %2438 = vmatmul.f32.gmra.mxu0 %v2013
  %v2439 = vpop.f32.mrf.mxu0
  %v2440 = vadd.f32 0.0, %v2439
  %2441 = vdwg.mxu0
  %v2446 = vrot.slane %v2400, 6
  %v2447 = vrot.slane %v2420, 4
  %v2448 = vrot.slane %v2440, 2
  %v2449 = vsel %vm178, %v2380, %v2446
  %v2450 = vsel %vm180, %v2447, %v2448
  %v2451 = vsel %vm182, %v2449, %v2450
  %v2453 = vadd.f32 %v2297, %v2451
  %v2454 = vxor.u32 %v2453, 2147483648
  %v2455 = vmul.f32 %v2454, 1.442695
  %v2456 = vpow.pop %v2455
  %v2457 = vadd.f32 %v2456, 1.0
  %v2458 = vrcp.pop %v2457
  %v2459 = vmul.f32 %v2457, %v2458
  %v2460 = vsub.f32 1.0, %v2459
  %v2461 = vmul.f32 %v2458, %v2460
  %v2462 = vadd.f32 %v2458, %v2461
  %vm2463 = vweird.f32 %v2457
  %vm2464 = vweird.f32 %v2458
  %vm2465 = vmor %vm2463, %vm2464
  %v2466 = vsel %vm2465, %v2458, %v2462
  %v2467 = vand.u32 2147483647, %v2457
  %vm2468 = vcmp.eq.f32.partialorder %v2467, 8.507059e+37
  %v2469 = vand.u32 %v2457, 2147483648
  %v2470 = vor.u32 1.1754944e-38, %v2469
  %v2471 = vsel %vm2468, %v2470, %v2466
  %v2472 = vmul.f32 1.0, %v2471
  %v2474 = vrot.slane %v2453, 2
  %v2476 = vxor.u32 %v2474, 2147483648
  %v2477 = vmul.f32 %v2476, 1.442695
  %v2478 = vpow.pop %v2477
  %v2479 = vadd.f32 %v2478, 1.0
  %v2480 = vrcp.pop %v2479
  %v2481 = vmul.f32 %v2479, %v2480
  %v2482 = vsub.f32 1.0, %v2481
  %v2483 = vmul.f32 %v2480, %v2482
  %v2484 = vadd.f32 %v2480, %v2483
  %vm2485 = vweird.f32 %v2479
  %vm2486 = vweird.f32 %v2480
  %vm2487 = vmor %vm2485, %vm2486
  %v2488 = vsel %vm2487, %v2480, %v2484
  %v2489 = vand.u32 2147483647, %v2479
  %vm2490 = vcmp.eq.f32.partialorder %v2489, 8.507059e+37
  %v2491 = vand.u32 %v2479, 2147483648
  %v2492 = vor.u32 1.1754944e-38, %v2491
  %v2493 = vsel %vm2490, %v2492, %v2488
  %v2494 = vmul.f32 1.0, %v2493
  %v2495 = vrot.slane %v2453, 4
  %v2497 = vtanh.pop %v2495
  %v2498 = vrot.slane %v2453, 6
  %v2500 = vxor.u32 %v2498, 2147483648
  %v2501 = vmul.f32 %v2500, 1.442695
  %v2502 = vpow.pop %v2501
  %v2503 = vadd.f32 %v2502, 1.0
  %v2504 = vrcp.pop %v2503
  %v2505 = vmul.f32 %v2503, %v2504
  %v2506 = vsub.f32 1.0, %v2505
  %v2507 = vmul.f32 %v2504, %v2506
  %v2508 = vadd.f32 %v2504, %v2507
  %vm2509 = vweird.f32 %v2503
  %vm2510 = vweird.f32 %v2504
  %vm2511 = vmor %vm2509, %vm2510
  %v2512 = vsel %vm2511, %v2504, %v2508
  %v2513 = vand.u32 2147483647, %v2503
  %vm2514 = vcmp.eq.f32.partialorder %v2513, 8.507059e+37
  %v2515 = vand.u32 %v2503, 2147483648
  %v2516 = vor.u32 1.1754944e-38, %v2515
  %v2517 = vsel %vm2514, %v2516, %v2512
  %v2518 = vmul.f32 1.0, %v2517
  %v2519 = vmul.f32 %v2494, %v2011
  %v2520 = vmul.f32 %v2472, %v2497
  %v2521 = vadd.f32 %v2519, %v2520
  %v2522 = vtanh.pop %v2521
  %v2523 = vmul.f32 %v2518, %v2522
  %2524 = vrot.lane.b32.xlu0 %v2295, 127
  %v2525 = vpop.permute.xlu0 %2524
  %2526 = vrot.lane.b32.xlu0 %v2295, 1
  %v2527 = vpop.permute.xlu0 %2526
  %v2528 = vsel %vm25, %v2525, %v2527
  %v2529 = vsub.f32 %v2295, %v2528
  %v2530 = vxor.u32 %v2529, 2147483648
  %v2531 = vmul.f32 %v2530, 1.442695
  %v2532 = vpow.pop %v2531
  %v2533 = vadd.f32 %v2532, 1.0
  %v2534 = vrcp.pop %v2533
  %v2535 = vmul.f32 %v2533, %v2534
  %v2536 = vsub.f32 1.0, %v2535
  %v2537 = vmul.f32 %v2534, %v2536
  %v2538 = vadd.f32 %v2534, %v2537
  %vm2539 = vweird.f32 %v2533
  %vm2540 = vweird.f32 %v2534
  %vm2541 = vmor %vm2539, %vm2540
  %v2542 = vsel %vm2541, %v2534, %v2538
  %v2543 = vand.u32 2147483647, %v2533
  %vm2544 = vcmp.eq.f32.partialorder %v2543, 8.507059e+37
  %v2545 = vand.u32 %v2533, 2147483648
  %v2546 = vor.u32 1.1754944e-38, %v2545
  %v2547 = vsel %vm2544, %v2546, %v2542
  %v2548 = vmul.f32 1.0, %v2547
  %s2549 = scalar_lea.vmem %s2, 8
  %2550 = vst [vmem:[%s2549] sm:$0x3] %v2548
  %2551 = vrot.lane.b32.xlu0 %v2523, 127
  %v2552 = vpop.permute.xlu0 %2551
  %2553 = vrot.lane.b32.xlu0 %v2523, 1
  %v2554 = vpop.permute.xlu0 %2553
  %v2555 = vsel %vm25, %v2552, %v2554
  %v2556 = vsub.f32 %v2523, %v2555
  %v2557 = vxor.u32 %v2556, 2147483648
  %v2558 = vmul.f32 %v2557, 1.442695
  %v2559 = vpow.pop %v2558
  %v2560 = vadd.f32 %v2559, 1.0
  %v2561 = vrcp.pop %v2560
  %v2562 = vmul.f32 %v2560, %v2561
  %v2563 = vsub.f32 1.0, %v2562
  %v2564 = vmul.f32 %v2561, %v2563
  %v2565 = vadd.f32 %v2561, %v2564
  %vm2566 = vweird.f32 %v2560
  %vm2567 = vweird.f32 %v2561
  %vm2568 = vmor %vm2566, %vm2567
  %v2569 = vsel %vm2568, %v2561, %v2565
  %v2570 = vand.u32 2147483647, %v2560
  %vm2571 = vcmp.eq.f32.partialorder %v2570, 8.507059e+37
  %v2572 = vand.u32 %v2560, 2147483648
  %v2573 = vor.u32 1.1754944e-38, %v2572
  %v2574 = vsel %vm2571, %v2573, %v2569
  %v2575 = vmul.f32 1.0, %v2574
  %s2576 = scalar_lea.vmem %s2, 22
  %2577 = vst [vmem:[%s2576] sm:$0x3] %v2575
  %s2578 = scalar_lea.vmem %s0, 40
  %v2579 = vld [vmem:[%s2578] sm:$0xff]
  %v2580 = vld [vmem:[%s1] sm:$0xff]
  %v2581 = vld [vmem:[%s1 + $0x8] sm:$0xff]
  %v2582 = vld [vmem:[%s1 + $0x10] sm:$0xff]
  %v2583 = vld [vmem:[%s1 + $0x18] sm:$0xff]
  %v2584 = vld [vmem:[%s1 + $0x20] sm:$0xff]
  %v2585 = vld [vmem:[%s1 + $0x28] sm:$0xff]
  %v2586 = vld [vmem:[%s1 + $0x30] sm:$0xff]
  %v2587 = vld [vmem:[%s1 + $0x38] sm:$0xff]
  %v2588 = vld [vmem:[%s1 + $0x40] sm:$0xff]
  %v2589 = vld [vmem:[%s1 + $0x48] sm:$0xff]
  %v2590 = vld [vmem:[%s1 + $0x50] sm:$0xff]
  %v2591 = vld [vmem:[%s1 + $0x58] sm:$0xff]
  %v2592 = vld [vmem:[%s1 + $0x60] sm:$0xff]
  %v2593 = vld [vmem:[%s1 + $0x68] sm:$0xff]
  %v2594 = vld [vmem:[%s1 + $0x70] sm:$0xff]
  %v2595 = vld [vmem:[%s1 + $0x78] sm:$0xff]
  %v2596 = vld [vmem:[%s1 + $0x80] sm:$0xff]
  %v2597 = vld [vmem:[%s1 + $0x88] sm:$0xff]
  %v2598 = vld [vmem:[%s1 + $0x90] sm:$0xff]
  %v2599 = vld [vmem:[%s1 + $0x98] sm:$0xff]
  %v2600 = vld [vmem:[%s1 + $0xa0] sm:$0xff]
  %v2601 = vld [vmem:[%s1 + $0xa8] sm:$0xff]
  %v2602 = vld [vmem:[%s1 + $0xb0] sm:$0xff]
  %v2603 = vld [vmem:[%s1 + $0xb8] sm:$0xff]
  %v2604 = vld [vmem:[%s1 + $0xc0] sm:$0xff]
  %v2605 = vld [vmem:[%s1 + $0xc8] sm:$0xff]
  %v2606 = vld [vmem:[%s1 + $0xd0] sm:$0xff]
  %v2607 = vld [vmem:[%s1 + $0xd8] sm:$0xff]
  %v2608 = vld [vmem:[%s1 + $0xe0] sm:$0xff]
  %v2609 = vld [vmem:[%s1 + $0xe8] sm:$0xff]
  %v2610 = vld [vmem:[%s1 + $0xf0] sm:$0xff]
  %v2611 = vld [vmem:[%s1 + $0xf8] sm:$0xff]
  %v2612 = vld [vmem:[%s1 + $0x100] sm:$0xff]
  %v2613 = vld [vmem:[%s1 + $0x108] sm:$0xff]
  %v2614 = vld [vmem:[%s1 + $0x110] sm:$0xff]
  %v2615 = vld [vmem:[%s1 + $0x118] sm:$0xff]
  %v2616 = vld [vmem:[%s1 + $0x120] sm:$0xff]
  %v2617 = vld [vmem:[%s1 + $0x128] sm:$0xff]
  %v2618 = vld [vmem:[%s1 + $0x130] sm:$0xff]
  %v2619 = vld [vmem:[%s1 + $0x138] sm:$0xff]
  %v2620 = vld [vmem:[%s1 + $0x140] sm:$0xff]
  %v2621 = vld [vmem:[%s1 + $0x148] sm:$0xff]
  %v2622 = vld [vmem:[%s1 + $0x150] sm:$0xff]
  %v2623 = vld [vmem:[%s1 + $0x158] sm:$0xff]
  %v2624 = vld [vmem:[%s1 + $0x160] sm:$0xff]
  %v2625 = vld [vmem:[%s1 + $0x168] sm:$0xff]
  %v2626 = vld [vmem:[%s1 + $0x170] sm:$0xff]
  %v2627 = vld [vmem:[%s1 + $0x178] sm:$0xff]
  %v2628 = vld [vmem:[%s1 + $0x180] sm:$0xff]
  %v2629 = vld [vmem:[%s1 + $0x188] sm:$0xff]
  %v2630 = vld [vmem:[%s1 + $0x190] sm:$0xff]
  %v2631 = vld [vmem:[%s1 + $0x198] sm:$0xff]
  %v2632 = vld [vmem:[%s1 + $0x1a0] sm:$0xff]
  %v2633 = vld [vmem:[%s1 + $0x1a8] sm:$0xff]
  %v2634 = vld [vmem:[%s1 + $0x1b0] sm:$0xff]
  %v2635 = vld [vmem:[%s1 + $0x1b8] sm:$0xff]
  %v2636 = vld [vmem:[%s1 + $0x1c0] sm:$0xff]
  %v2637 = vld [vmem:[%s1 + $0x1c8] sm:$0xff]
  %v2638 = vld [vmem:[%s1 + $0x1d0] sm:$0xff]
  %v2639 = vld [vmem:[%s1 + $0x1d8] sm:$0xff]
  %v2640 = vld [vmem:[%s1 + $0x1e0] sm:$0xff]
  %v2641 = vld [vmem:[%s1 + $0x1e8] sm:$0xff]
  %v2642 = vld [vmem:[%s1 + $0x1f0] sm:$0xff]
  %v2643 = vld [vmem:[%s1 + $0x1f8] sm:$0xff]
  %2644 = vmatpush.msra.mxu0 %v2640
  %2645 = vmatpush.msra.mxu0 %v2636
  %2646 = vmatpush.msra.mxu0 %v2632
  %2647 = vmatpush.msra.mxu0 %v2628
  %2648 = vmatpush.msra.mxu0 %v2624
  %2649 = vmatpush.msra.mxu0 %v2620
  %2650 = vmatpush.msra.mxu0 %v2616
  %2651 = vmatpush.msra.mxu0 %v2612
  %2652 = vmatpush.msra.mxu0 %v2608
  %2653 = vmatpush.msra.mxu0 %v2604
  %2654 = vmatpush.msra.mxu0 %v2600
  %2655 = vmatpush.msra.mxu0 %v2596
  %2656 = vmatpush.msra.mxu0 %v2592
  %2657 = vmatpush.msra.mxu0 %v2588
  %2658 = vmatpush.msra.mxu0 %v2584
  %2659 = vmatpush.msra.mxu0 %v2580
  %2660 = vmatmul.f32.gmra.mxu0 %v2295
  %v2661 = vpop.f32.mrf.mxu0
  %v2662 = vadd.f32 0.0, %v2661
  %2663 = vdwg.mxu0
  %2664 = vmatpush.msra.mxu0 %v2641
  %2665 = vmatpush.msra.mxu0 %v2637
  %2666 = vmatpush.msra.mxu0 %v2633
  %2667 = vmatpush.msra.mxu0 %v2629
  %2668 = vmatpush.msra.mxu0 %v2625
  %2669 = vmatpush.msra.mxu0 %v2621
  %2670 = vmatpush.msra.mxu0 %v2617
  %2671 = vmatpush.msra.mxu0 %v2613
  %2672 = vmatpush.msra.mxu0 %v2609
  %2673 = vmatpush.msra.mxu0 %v2605
  %2674 = vmatpush.msra.mxu0 %v2601
  %2675 = vmatpush.msra.mxu0 %v2597
  %2676 = vmatpush.msra.mxu0 %v2593
  %2677 = vmatpush.msra.mxu0 %v2589
  %2678 = vmatpush.msra.mxu0 %v2585
  %2679 = vmatpush.msra.mxu0 %v2581
  %2680 = vmatmul.f32.gmra.mxu0 %v2295
  %v2681 = vpop.f32.mrf.mxu0
  %v2682 = vadd.f32 0.0, %v2681
  %2683 = vdwg.mxu0
  %2684 = vmatpush.msra.mxu0 %v2642
  %2685 = vmatpush.msra.mxu0 %v2638
  %2686 = vmatpush.msra.mxu0 %v2634
  %2687 = vmatpush.msra.mxu0 %v2630
  %2688 = vmatpush.msra.mxu0 %v2626
  %2689 = vmatpush.msra.mxu0 %v2622
  %2690 = vmatpush.msra.mxu0 %v2618
  %2691 = vmatpush.msra.mxu0 %v2614
  %2692 = vmatpush.msra.mxu0 %v2610
  %2693 = vmatpush.msra.mxu0 %v2606
  %2694 = vmatpush.msra.mxu0 %v2602
  %2695 = vmatpush.msra.mxu0 %v2598
  %2696 = vmatpush.msra.mxu0 %v2594
  %2697 = vmatpush.msra.mxu0 %v2590
  %2698 = vmatpush.msra.mxu0 %v2586
  %2699 = vmatpush.msra.mxu0 %v2582
  %2700 = vmatmul.f32.gmra.mxu0 %v2295
  %v2701 = vpop.f32.mrf.mxu0
  %v2702 = vadd.f32 0.0, %v2701
  %2703 = vdwg.mxu0
  %2704 = vmatpush.msra.mxu0 %v2643
  %2705 = vmatpush.msra.mxu0 %v2639
  %2706 = vmatpush.msra.mxu0 %v2635
  %2707 = vmatpush.msra.mxu0 %v2631
  %2708 = vmatpush.msra.mxu0 %v2627
  %2709 = vmatpush.msra.mxu0 %v2623
  %2710 = vmatpush.msra.mxu0 %v2619
  %2711 = vmatpush.msra.mxu0 %v2615
  %2712 = vmatpush.msra.mxu0 %v2611
  %2713 = vmatpush.msra.mxu0 %v2607
  %2714 = vmatpush.msra.mxu0 %v2603
  %2715 = vmatpush.msra.mxu0 %v2599
  %2716 = vmatpush.msra.mxu0 %v2595
  %2717 = vmatpush.msra.mxu0 %v2591
  %2718 = vmatpush.msra.mxu0 %v2587
  %2719 = vmatpush.msra.mxu0 %v2583
  %2720 = vmatmul.f32.gmra.mxu0 %v2295
  %v2721 = vpop.f32.mrf.mxu0
  %v2722 = vadd.f32 0.0, %v2721
  %2723 = vdwg.mxu0
  %v2728 = vrot.slane %v2682, 6
  %v2729 = vrot.slane %v2702, 4
  %v2730 = vrot.slane %v2722, 2
  %v2731 = vsel %vm178, %v2662, %v2728
  %v2732 = vsel %vm180, %v2729, %v2730
  %v2733 = vsel %vm182, %v2731, %v2732
  %v2735 = vadd.f32 %v2579, %v2733
  %v2736 = vxor.u32 %v2735, 2147483648
  %v2737 = vmul.f32 %v2736, 1.442695
  %v2738 = vpow.pop %v2737
  %v2739 = vadd.f32 %v2738, 1.0
  %v2740 = vrcp.pop %v2739
  %v2741 = vmul.f32 %v2739, %v2740
  %v2742 = vsub.f32 1.0, %v2741
  %v2743 = vmul.f32 %v2740, %v2742
  %v2744 = vadd.f32 %v2740, %v2743
  %vm2745 = vweird.f32 %v2739
  %vm2746 = vweird.f32 %v2740
  %vm2747 = vmor %vm2745, %vm2746
  %v2748 = vsel %vm2747, %v2740, %v2744
  %v2749 = vand.u32 2147483647, %v2739
  %vm2750 = vcmp.eq.f32.partialorder %v2749, 8.507059e+37
  %v2751 = vand.u32 %v2739, 2147483648
  %v2752 = vor.u32 1.1754944e-38, %v2751
  %v2753 = vsel %vm2750, %v2752, %v2748
  %v2754 = vmul.f32 1.0, %v2753
  %v2756 = vrot.slane %v2735, 2
  %v2758 = vxor.u32 %v2756, 2147483648
  %v2759 = vmul.f32 %v2758, 1.442695
  %v2760 = vpow.pop %v2759
  %v2761 = vadd.f32 %v2760, 1.0
  %v2762 = vrcp.pop %v2761
  %v2763 = vmul.f32 %v2761, %v2762
  %v2764 = vsub.f32 1.0, %v2763
  %v2765 = vmul.f32 %v2762, %v2764
  %v2766 = vadd.f32 %v2762, %v2765
  %vm2767 = vweird.f32 %v2761
  %vm2768 = vweird.f32 %v2762
  %vm2769 = vmor %vm2767, %vm2768
  %v2770 = vsel %vm2769, %v2762, %v2766
  %v2771 = vand.u32 2147483647, %v2761
  %vm2772 = vcmp.eq.f32.partialorder %v2771, 8.507059e+37
  %v2773 = vand.u32 %v2761, 2147483648
  %v2774 = vor.u32 1.1754944e-38, %v2773
  %v2775 = vsel %vm2772, %v2774, %v2770
  %v2776 = vmul.f32 1.0, %v2775
  %v2777 = vrot.slane %v2735, 4
  %v2779 = vtanh.pop %v2777
  %v2780 = vrot.slane %v2735, 6
  %v2782 = vxor.u32 %v2780, 2147483648
  %v2783 = vmul.f32 %v2782, 1.442695
  %v2784 = vpow.pop %v2783
  %v2785 = vadd.f32 %v2784, 1.0
  %v2786 = vrcp.pop %v2785
  %v2787 = vmul.f32 %v2785, %v2786
  %v2788 = vsub.f32 1.0, %v2787
  %v2789 = vmul.f32 %v2786, %v2788
  %v2790 = vadd.f32 %v2786, %v2789
  %vm2791 = vweird.f32 %v2785
  %vm2792 = vweird.f32 %v2786
  %vm2793 = vmor %vm2791, %vm2792
  %v2794 = vsel %vm2793, %v2786, %v2790
  %v2795 = vand.u32 2147483647, %v2785
  %vm2796 = vcmp.eq.f32.partialorder %v2795, 8.507059e+37
  %v2797 = vand.u32 %v2785, 2147483648
  %v2798 = vor.u32 1.1754944e-38, %v2797
  %v2799 = vsel %vm2796, %v2798, %v2794
  %v2800 = vmul.f32 1.0, %v2799
  %v2801 = vmul.f32 %v2776, %v2293
  %v2802 = vmul.f32 %v2754, %v2779
  %v2803 = vadd.f32 %v2801, %v2802
  %v2804 = vtanh.pop %v2803
  %v2805 = vmul.f32 %v2800, %v2804
  %s2806 = scalar_lea.vmem %s0, 80
  %v2807 = vld [vmem:[%s2806] sm:$0xff]
  %v2808 = vld [vmem:[%s258] sm:$0xff]
  %v2809 = vld [vmem:[%s258 + $0x8] sm:$0xff]
  %v2810 = vld [vmem:[%s258 + $0x10] sm:$0xff]
  %v2811 = vld [vmem:[%s258 + $0x18] sm:$0xff]
  %v2812 = vld [vmem:[%s258 + $0x20] sm:$0xff]
  %v2813 = vld [vmem:[%s258 + $0x28] sm:$0xff]
  %v2814 = vld [vmem:[%s258 + $0x30] sm:$0xff]
  %v2815 = vld [vmem:[%s258 + $0x38] sm:$0xff]
  %v2816 = vld [vmem:[%s258 + $0x40] sm:$0xff]
  %v2817 = vld [vmem:[%s258 + $0x48] sm:$0xff]
  %v2818 = vld [vmem:[%s258 + $0x50] sm:$0xff]
  %v2819 = vld [vmem:[%s258 + $0x58] sm:$0xff]
  %v2820 = vld [vmem:[%s258 + $0x60] sm:$0xff]
  %v2821 = vld [vmem:[%s258 + $0x68] sm:$0xff]
  %v2822 = vld [vmem:[%s258 + $0x70] sm:$0xff]
  %v2823 = vld [vmem:[%s258 + $0x78] sm:$0xff]
  %v2824 = vld [vmem:[%s258 + $0x80] sm:$0xff]
  %v2825 = vld [vmem:[%s258 + $0x88] sm:$0xff]
  %v2826 = vld [vmem:[%s258 + $0x90] sm:$0xff]
  %v2827 = vld [vmem:[%s258 + $0x98] sm:$0xff]
  %v2828 = vld [vmem:[%s258 + $0xa0] sm:$0xff]
  %v2829 = vld [vmem:[%s258 + $0xa8] sm:$0xff]
  %v2830 = vld [vmem:[%s258 + $0xb0] sm:$0xff]
  %v2831 = vld [vmem:[%s258 + $0xb8] sm:$0xff]
  %v2832 = vld [vmem:[%s258 + $0xc0] sm:$0xff]
  %v2833 = vld [vmem:[%s258 + $0xc8] sm:$0xff]
  %v2834 = vld [vmem:[%s258 + $0xd0] sm:$0xff]
  %v2835 = vld [vmem:[%s258 + $0xd8] sm:$0xff]
  %v2836 = vld [vmem:[%s258 + $0xe0] sm:$0xff]
  %v2837 = vld [vmem:[%s258 + $0xe8] sm:$0xff]
  %v2838 = vld [vmem:[%s258 + $0xf0] sm:$0xff]
  %v2839 = vld [vmem:[%s258 + $0xf8] sm:$0xff]
  %v2840 = vld [vmem:[%s258 + $0x100] sm:$0xff]
  %v2841 = vld [vmem:[%s258 + $0x108] sm:$0xff]
  %v2842 = vld [vmem:[%s258 + $0x110] sm:$0xff]
  %v2843 = vld [vmem:[%s258 + $0x118] sm:$0xff]
  %v2844 = vld [vmem:[%s258 + $0x120] sm:$0xff]
  %v2845 = vld [vmem:[%s258 + $0x128] sm:$0xff]
  %v2846 = vld [vmem:[%s258 + $0x130] sm:$0xff]
  %v2847 = vld [vmem:[%s258 + $0x138] sm:$0xff]
  %v2848 = vld [vmem:[%s258 + $0x140] sm:$0xff]
  %v2849 = vld [vmem:[%s258 + $0x148] sm:$0xff]
  %v2850 = vld [vmem:[%s258 + $0x150] sm:$0xff]
  %v2851 = vld [vmem:[%s258 + $0x158] sm:$0xff]
  %v2852 = vld [vmem:[%s258 + $0x160] sm:$0xff]
  %v2853 = vld [vmem:[%s258 + $0x168] sm:$0xff]
  %v2854 = vld [vmem:[%s258 + $0x170] sm:$0xff]
  %v2855 = vld [vmem:[%s258 + $0x178] sm:$0xff]
  %v2856 = vld [vmem:[%s258 + $0x180] sm:$0xff]
  %v2857 = vld [vmem:[%s258 + $0x188] sm:$0xff]
  %v2858 = vld [vmem:[%s258 + $0x190] sm:$0xff]
  %v2859 = vld [vmem:[%s258 + $0x198] sm:$0xff]
  %v2860 = vld [vmem:[%s258 + $0x1a0] sm:$0xff]
  %v2861 = vld [vmem:[%s258 + $0x1a8] sm:$0xff]
  %v2862 = vld [vmem:[%s258 + $0x1b0] sm:$0xff]
  %v2863 = vld [vmem:[%s258 + $0x1b8] sm:$0xff]
  %v2864 = vld [vmem:[%s258 + $0x1c0] sm:$0xff]
  %v2865 = vld [vmem:[%s258 + $0x1c8] sm:$0xff]
  %v2866 = vld [vmem:[%s258 + $0x1d0] sm:$0xff]
  %v2867 = vld [vmem:[%s258 + $0x1d8] sm:$0xff]
  %v2868 = vld [vmem:[%s258 + $0x1e0] sm:$0xff]
  %v2869 = vld [vmem:[%s258 + $0x1e8] sm:$0xff]
  %v2870 = vld [vmem:[%s258 + $0x1f0] sm:$0xff]
  %v2871 = vld [vmem:[%s258 + $0x1f8] sm:$0xff]
  %2872 = vmatpush.msra.mxu0 %v2868
  %2873 = vmatpush.msra.mxu0 %v2864
  %2874 = vmatpush.msra.mxu0 %v2860
  %2875 = vmatpush.msra.mxu0 %v2856
  %2876 = vmatpush.msra.mxu0 %v2852
  %2877 = vmatpush.msra.mxu0 %v2848
  %2878 = vmatpush.msra.mxu0 %v2844
  %2879 = vmatpush.msra.mxu0 %v2840
  %2880 = vmatpush.msra.mxu0 %v2836
  %2881 = vmatpush.msra.mxu0 %v2832
  %2882 = vmatpush.msra.mxu0 %v2828
  %2883 = vmatpush.msra.mxu0 %v2824
  %2884 = vmatpush.msra.mxu0 %v2820
  %2885 = vmatpush.msra.mxu0 %v2816
  %2886 = vmatpush.msra.mxu0 %v2812
  %2887 = vmatpush.msra.mxu0 %v2808
  %2888 = vmatmul.f32.gmra.mxu0 %v2523
  %v2889 = vpop.f32.mrf.mxu0
  %v2890 = vadd.f32 0.0, %v2889
  %2891 = vdwg.mxu0
  %2892 = vmatpush.msra.mxu0 %v2869
  %2893 = vmatpush.msra.mxu0 %v2865
  %2894 = vmatpush.msra.mxu0 %v2861
  %2895 = vmatpush.msra.mxu0 %v2857
  %2896 = vmatpush.msra.mxu0 %v2853
  %2897 = vmatpush.msra.mxu0 %v2849
  %2898 = vmatpush.msra.mxu0 %v2845
  %2899 = vmatpush.msra.mxu0 %v2841
  %2900 = vmatpush.msra.mxu0 %v2837
  %2901 = vmatpush.msra.mxu0 %v2833
  %2902 = vmatpush.msra.mxu0 %v2829
  %2903 = vmatpush.msra.mxu0 %v2825
  %2904 = vmatpush.msra.mxu0 %v2821
  %2905 = vmatpush.msra.mxu0 %v2817
  %2906 = vmatpush.msra.mxu0 %v2813
  %2907 = vmatpush.msra.mxu0 %v2809
  %2908 = vmatmul.f32.gmra.mxu0 %v2523
  %v2909 = vpop.f32.mrf.mxu0
  %v2910 = vadd.f32 0.0, %v2909
  %2911 = vdwg.mxu0
  %2912 = vmatpush.msra.mxu0 %v2870
  %2913 = vmatpush.msra.mxu0 %v2866
  %2914 = vmatpush.msra.mxu0 %v2862
  %2915 = vmatpush.msra.mxu0 %v2858
  %2916 = vmatpush.msra.mxu0 %v2854
  %2917 = vmatpush.msra.mxu0 %v2850
  %2918 = vmatpush.msra.mxu0 %v2846
  %2919 = vmatpush.msra.mxu0 %v2842
  %2920 = vmatpush.msra.mxu0 %v2838
  %2921 = vmatpush.msra.mxu0 %v2834
  %2922 = vmatpush.msra.mxu0 %v2830
  %2923 = vmatpush.msra.mxu0 %v2826
  %2924 = vmatpush.msra.mxu0 %v2822
  %2925 = vmatpush.msra.mxu0 %v2818
  %2926 = vmatpush.msra.mxu0 %v2814
  %2927 = vmatpush.msra.mxu0 %v2810
  %2928 = vmatmul.f32.gmra.mxu0 %v2523
  %v2929 = vpop.f32.mrf.mxu0
  %v2930 = vadd.f32 0.0, %v2929
  %2931 = vdwg.mxu0
  %2932 = vmatpush.msra.mxu0 %v2871
  %2933 = vmatpush.msra.mxu0 %v2867
  %2934 = vmatpush.msra.mxu0 %v2863
  %2935 = vmatpush.msra.mxu0 %v2859
  %2936 = vmatpush.msra.mxu0 %v2855
  %2937 = vmatpush.msra.mxu0 %v2851
  %2938 = vmatpush.msra.mxu0 %v2847
  %2939 = vmatpush.msra.mxu0 %v2843
  %2940 = vmatpush.msra.mxu0 %v2839
  %2941 = vmatpush.msra.mxu0 %v2835
  %2942 = vmatpush.msra.mxu0 %v2831
  %2943 = vmatpush.msra.mxu0 %v2827
  %2944 = vmatpush.msra.mxu0 %v2823
  %2945 = vmatpush.msra.mxu0 %v2819
  %2946 = vmatpush.msra.mxu0 %v2815
  %2947 = vmatpush.msra.mxu0 %v2811
  %2948 = vmatmul.f32.gmra.mxu0 %v2523
  %v2949 = vpop.f32.mrf.mxu0
  %v2950 = vadd.f32 0.0, %v2949
  %2951 = vdwg.mxu0
  %v2956 = vrot.slane %v2910, 6
  %v2957 = vrot.slane %v2930, 4
  %v2958 = vrot.slane %v2950, 2
  %v2959 = vsel %vm178, %v2890, %v2956
  %v2960 = vsel %vm180, %v2957, %v2958
  %v2961 = vsel %vm182, %v2959, %v2960
  %v2963 = vadd.f32 %v2807, %v2961
  %v2964 = vxor.u32 %v2963, 2147483648
  %v2965 = vmul.f32 %v2964, 1.442695
  %v2966 = vpow.pop %v2965
  %v2967 = vadd.f32 %v2966, 1.0
  %v2968 = vrcp.pop %v2967
  %v2969 = vmul.f32 %v2967, %v2968
  %v2970 = vsub.f32 1.0, %v2969
  %v2971 = vmul.f32 %v2968, %v2970
  %v2972 = vadd.f32 %v2968, %v2971
  %vm2973 = vweird.f32 %v2967
  %vm2974 = vweird.f32 %v2968
  %vm2975 = vmor %vm2973, %vm2974
  %v2976 = vsel %vm2975, %v2968, %v2972
  %v2977 = vand.u32 2147483647, %v2967
  %vm2978 = vcmp.eq.f32.partialorder %v2977, 8.507059e+37
  %v2979 = vand.u32 %v2967, 2147483648
  %v2980 = vor.u32 1.1754944e-38, %v2979
  %v2981 = vsel %vm2978, %v2980, %v2976
  %v2982 = vmul.f32 1.0, %v2981
  %v2984 = vrot.slane %v2963, 2
  %v2986 = vxor.u32 %v2984, 2147483648
  %v2987 = vmul.f32 %v2986, 1.442695
  %v2988 = vpow.pop %v2987
  %v2989 = vadd.f32 %v2988, 1.0
  %v2990 = vrcp.pop %v2989
  %v2991 = vmul.f32 %v2989, %v2990
  %v2992 = vsub.f32 1.0, %v2991
  %v2993 = vmul.f32 %v2990, %v2992
  %v2994 = vadd.f32 %v2990, %v2993
  %vm2995 = vweird.f32 %v2989
  %vm2996 = vweird.f32 %v2990
  %vm2997 = vmor %vm2995, %vm2996
  %v2998 = vsel %vm2997, %v2990, %v2994
  %v2999 = vand.u32 2147483647, %v2989
  %vm3000 = vcmp.eq.f32.partialorder %v2999, 8.507059e+37
  %v3001 = vand.u32 %v2989, 2147483648
  %v3002 = vor.u32 1.1754944e-38, %v3001
  %v3003 = vsel %vm3000, %v3002, %v2998
  %v3004 = vmul.f32 1.0, %v3003
  %v3005 = vrot.slane %v2963, 4
  %v3007 = vtanh.pop %v3005
  %v3008 = vrot.slane %v2963, 6
  %v3010 = vxor.u32 %v3008, 2147483648
  %v3011 = vmul.f32 %v3010, 1.442695
  %v3012 = vpow.pop %v3011
  %v3013 = vadd.f32 %v3012, 1.0
  %v3014 = vrcp.pop %v3013
  %v3015 = vmul.f32 %v3013, %v3014
  %v3016 = vsub.f32 1.0, %v3015
  %v3017 = vmul.f32 %v3014, %v3016
  %v3018 = vadd.f32 %v3014, %v3017
  %vm3019 = vweird.f32 %v3013
  %vm3020 = vweird.f32 %v3014
  %vm3021 = vmor %vm3019, %vm3020
  %v3022 = vsel %vm3021, %v3014, %v3018
  %v3023 = vand.u32 2147483647, %v3013
  %vm3024 = vcmp.eq.f32.partialorder %v3023, 8.507059e+37
  %v3025 = vand.u32 %v3013, 2147483648
  %v3026 = vor.u32 1.1754944e-38, %v3025
  %v3027 = vsel %vm3024, %v3026, %v3022
  %v3028 = vmul.f32 1.0, %v3027
  %v3029 = vmul.f32 %v3004, %v2521
  %v3030 = vmul.f32 %v2982, %v3007
  %v3031 = vadd.f32 %v3029, %v3030
  %v3032 = vtanh.pop %v3031
  %v3033 = vmul.f32 %v3028, %v3032
  %3034 = vrot.lane.b32.xlu0 %v2805, 127
  %v3035 = vpop.permute.xlu0 %3034
  %3036 = vrot.lane.b32.xlu0 %v2805, 1
  %v3037 = vpop.permute.xlu0 %3036
  %v3038 = vsel %vm25, %v3035, %v3037
  %v3039 = vsub.f32 %v2805, %v3038
  %v3040 = vxor.u32 %v3039, 2147483648
  %v3041 = vmul.f32 %v3040, 1.442695
  %v3042 = vpow.pop %v3041
  %v3043 = vadd.f32 %v3042, 1.0
  %v3044 = vrcp.pop %v3043
  %v3045 = vmul.f32 %v3043, %v3044
  %v3046 = vsub.f32 1.0, %v3045
  %v3047 = vmul.f32 %v3044, %v3046
  %v3048 = vadd.f32 %v3044, %v3047
  %vm3049 = vweird.f32 %v3043
  %vm3050 = vweird.f32 %v3044
  %vm3051 = vmor %vm3049, %vm3050
  %v3052 = vsel %vm3051, %v3044, %v3048
  %v3053 = vand.u32 2147483647, %v3043
  %vm3054 = vcmp.eq.f32.partialorder %v3053, 8.507059e+37
  %v3055 = vand.u32 %v3043, 2147483648
  %v3056 = vor.u32 1.1754944e-38, %v3055
  %v3057 = vsel %vm3054, %v3056, %v3052
  %v3058 = vmul.f32 1.0, %v3057
  %s3059 = scalar_lea.vmem %s2, 10
  %3060 = vst [vmem:[%s3059] sm:$0x3] %v3058
  %3061 = vrot.lane.b32.xlu0 %v3033, 127
  %v3062 = vpop.permute.xlu0 %3061
  %3063 = vrot.lane.b32.xlu0 %v3033, 1
  %v3064 = vpop.permute.xlu0 %3063
  %v3065 = vsel %vm25, %v3062, %v3064
  %v3066 = vsub.f32 %v3033, %v3065
  %v3067 = vxor.u32 %v3066, 2147483648
  %v3068 = vmul.f32 %v3067, 1.442695
  %v3069 = vpow.pop %v3068
  %v3070 = vadd.f32 %v3069, 1.0
  %v3071 = vrcp.pop %v3070
  %v3072 = vmul.f32 %v3070, %v3071
  %v3073 = vsub.f32 1.0, %v3072
  %v3074 = vmul.f32 %v3071, %v3073
  %v3075 = vadd.f32 %v3071, %v3074
  %vm3076 = vweird.f32 %v3070
  %vm3077 = vweird.f32 %v3071
  %vm3078 = vmor %vm3076, %vm3077
  %v3079 = vsel %vm3078, %v3071, %v3075
  %v3080 = vand.u32 2147483647, %v3070
  %vm3081 = vcmp.eq.f32.partialorder %v3080, 8.507059e+37
  %v3082 = vand.u32 %v3070, 2147483648
  %v3083 = vor.u32 1.1754944e-38, %v3082
  %v3084 = vsel %vm3081, %v3083, %v3079
  %v3085 = vmul.f32 1.0, %v3084
  %s3086 = scalar_lea.vmem %s2, 20
  %3087 = vst [vmem:[%s3086] sm:$0x3] %v3085
  %s3088 = scalar_lea.vmem %s0, 48
  %v3089 = vld [vmem:[%s3088] sm:$0xff]
  %v3090 = vld [vmem:[%s1] sm:$0xff]
  %v3091 = vld [vmem:[%s1 + $0x8] sm:$0xff]
  %v3092 = vld [vmem:[%s1 + $0x10] sm:$0xff]
  %v3093 = vld [vmem:[%s1 + $0x18] sm:$0xff]
  %v3094 = vld [vmem:[%s1 + $0x20] sm:$0xff]
  %v3095 = vld [vmem:[%s1 + $0x28] sm:$0xff]
  %v3096 = vld [vmem:[%s1 + $0x30] sm:$0xff]
  %v3097 = vld [vmem:[%s1 + $0x38] sm:$0xff]
  %v3098 = vld [vmem:[%s1 + $0x40] sm:$0xff]
  %v3099 = vld [vmem:[%s1 + $0x48] sm:$0xff]
  %v3100 = vld [vmem:[%s1 + $0x50] sm:$0xff]
  %v3101 = vld [vmem:[%s1 + $0x58] sm:$0xff]
  %v3102 = vld [vmem:[%s1 + $0x60] sm:$0xff]
  %v3103 = vld [vmem:[%s1 + $0x68] sm:$0xff]
  %v3104 = vld [vmem:[%s1 + $0x70] sm:$0xff]
  %v3105 = vld [vmem:[%s1 + $0x78] sm:$0xff]
  %v3106 = vld [vmem:[%s1 + $0x80] sm:$0xff]
  %v3107 = vld [vmem:[%s1 + $0x88] sm:$0xff]
  %v3108 = vld [vmem:[%s1 + $0x90] sm:$0xff]
  %v3109 = vld [vmem:[%s1 + $0x98] sm:$0xff]
  %v3110 = vld [vmem:[%s1 + $0xa0] sm:$0xff]
  %v3111 = vld [vmem:[%s1 + $0xa8] sm:$0xff]
  %v3112 = vld [vmem:[%s1 + $0xb0] sm:$0xff]
  %v3113 = vld [vmem:[%s1 + $0xb8] sm:$0xff]
  %v3114 = vld [vmem:[%s1 + $0xc0] sm:$0xff]
  %v3115 = vld [vmem:[%s1 + $0xc8] sm:$0xff]
  %v3116 = vld [vmem:[%s1 + $0xd0] sm:$0xff]
  %v3117 = vld [vmem:[%s1 + $0xd8] sm:$0xff]
  %v3118 = vld [vmem:[%s1 + $0xe0] sm:$0xff]
  %v3119 = vld [vmem:[%s1 + $0xe8] sm:$0xff]
  %v3120 = vld [vmem:[%s1 + $0xf0] sm:$0xff]
  %v3121 = vld [vmem:[%s1 + $0xf8] sm:$0xff]
  %v3122 = vld [vmem:[%s1 + $0x100] sm:$0xff]
  %v3123 = vld [vmem:[%s1 + $0x108] sm:$0xff]
  %v3124 = vld [vmem:[%s1 + $0x110] sm:$0xff]
  %v3125 = vld [vmem:[%s1 + $0x118] sm:$0xff]
  %v3126 = vld [vmem:[%s1 + $0x120] sm:$0xff]
  %v3127 = vld [vmem:[%s1 + $0x128] sm:$0xff]
  %v3128 = vld [vmem:[%s1 + $0x130] sm:$0xff]
  %v3129 = vld [vmem:[%s1 + $0x138] sm:$0xff]
  %v3130 = vld [vmem:[%s1 + $0x140] sm:$0xff]
  %v3131 = vld [vmem:[%s1 + $0x148] sm:$0xff]
  %v3132 = vld [vmem:[%s1 + $0x150] sm:$0xff]
  %v3133 = vld [vmem:[%s1 + $0x158] sm:$0xff]
  %v3134 = vld [vmem:[%s1 + $0x160] sm:$0xff]
  %v3135 = vld [vmem:[%s1 + $0x168] sm:$0xff]
  %v3136 = vld [vmem:[%s1 + $0x170] sm:$0xff]
  %v3137 = vld [vmem:[%s1 + $0x178] sm:$0xff]
  %v3138 = vld [vmem:[%s1 + $0x180] sm:$0xff]
  %v3139 = vld [vmem:[%s1 + $0x188] sm:$0xff]
  %v3140 = vld [vmem:[%s1 + $0x190] sm:$0xff]
  %v3141 = vld [vmem:[%s1 + $0x198] sm:$0xff]
  %v3142 = vld [vmem:[%s1 + $0x1a0] sm:$0xff]
  %v3143 = vld [vmem:[%s1 + $0x1a8] sm:$0xff]
  %v3144 = vld [vmem:[%s1 + $0x1b0] sm:$0xff]
  %v3145 = vld [vmem:[%s1 + $0x1b8] sm:$0xff]
  %v3146 = vld [vmem:[%s1 + $0x1c0] sm:$0xff]
  %v3147 = vld [vmem:[%s1 + $0x1c8] sm:$0xff]
  %v3148 = vld [vmem:[%s1 + $0x1d0] sm:$0xff]
  %v3149 = vld [vmem:[%s1 + $0x1d8] sm:$0xff]
  %v3150 = vld [vmem:[%s1 + $0x1e0] sm:$0xff]
  %v3151 = vld [vmem:[%s1 + $0x1e8] sm:$0xff]
  %v3152 = vld [vmem:[%s1 + $0x1f0] sm:$0xff]
  %v3153 = vld [vmem:[%s1 + $0x1f8] sm:$0xff]
  %3154 = vmatpush.msra.mxu0 %v3150
  %3155 = vmatpush.msra.mxu0 %v3146
  %3156 = vmatpush.msra.mxu0 %v3142
  %3157 = vmatpush.msra.mxu0 %v3138
  %3158 = vmatpush.msra.mxu0 %v3134
  %3159 = vmatpush.msra.mxu0 %v3130
  %3160 = vmatpush.msra.mxu0 %v3126
  %3161 = vmatpush.msra.mxu0 %v3122
  %3162 = vmatpush.msra.mxu0 %v3118
  %3163 = vmatpush.msra.mxu0 %v3114
  %3164 = vmatpush.msra.mxu0 %v3110
  %3165 = vmatpush.msra.mxu0 %v3106
  %3166 = vmatpush.msra.mxu0 %v3102
  %3167 = vmatpush.msra.mxu0 %v3098
  %3168 = vmatpush.msra.mxu0 %v3094
  %3169 = vmatpush.msra.mxu0 %v3090
  %3170 = vmatmul.f32.gmra.mxu0 %v2805
  %v3171 = vpop.f32.mrf.mxu0
  %v3172 = vadd.f32 0.0, %v3171
  %3173 = vdwg.mxu0
  %3174 = vmatpush.msra.mxu0 %v3151
  %3175 = vmatpush.msra.mxu0 %v3147
  %3176 = vmatpush.msra.mxu0 %v3143
  %3177 = vmatpush.msra.mxu0 %v3139
  %3178 = vmatpush.msra.mxu0 %v3135
  %3179 = vmatpush.msra.mxu0 %v3131
  %3180 = vmatpush.msra.mxu0 %v3127
  %3181 = vmatpush.msra.mxu0 %v3123
  %3182 = vmatpush.msra.mxu0 %v3119
  %3183 = vmatpush.msra.mxu0 %v3115
  %3184 = vmatpush.msra.mxu0 %v3111
  %3185 = vmatpush.msra.mxu0 %v3107
  %3186 = vmatpush.msra.mxu0 %v3103
  %3187 = vmatpush.msra.mxu0 %v3099
  %3188 = vmatpush.msra.mxu0 %v3095
  %3189 = vmatpush.msra.mxu0 %v3091
  %3190 = vmatmul.f32.gmra.mxu0 %v2805
  %v3191 = vpop.f32.mrf.mxu0
  %v3192 = vadd.f32 0.0, %v3191
  %3193 = vdwg.mxu0
  %3194 = vmatpush.msra.mxu0 %v3152
  %3195 = vmatpush.msra.mxu0 %v3148
  %3196 = vmatpush.msra.mxu0 %v3144
  %3197 = vmatpush.msra.mxu0 %v3140
  %3198 = vmatpush.msra.mxu0 %v3136
  %3199 = vmatpush.msra.mxu0 %v3132
  %3200 = vmatpush.msra.mxu0 %v3128
  %3201 = vmatpush.msra.mxu0 %v3124
  %3202 = vmatpush.msra.mxu0 %v3120
  %3203 = vmatpush.msra.mxu0 %v3116
  %3204 = vmatpush.msra.mxu0 %v3112
  %3205 = vmatpush.msra.mxu0 %v3108
  %3206 = vmatpush.msra.mxu0 %v3104
  %3207 = vmatpush.msra.mxu0 %v3100
  %3208 = vmatpush.msra.mxu0 %v3096
  %3209 = vmatpush.msra.mxu0 %v3092
  %3210 = vmatmul.f32.gmra.mxu0 %v2805
  %v3211 = vpop.f32.mrf.mxu0
  %v3212 = vadd.f32 0.0, %v3211
  %3213 = vdwg.mxu0
  %3214 = vmatpush.msra.mxu0 %v3153
  %3215 = vmatpush.msra.mxu0 %v3149
  %3216 = vmatpush.msra.mxu0 %v3145
  %3217 = vmatpush.msra.mxu0 %v3141
  %3218 = vmatpush.msra.mxu0 %v3137
  %3219 = vmatpush.msra.mxu0 %v3133
  %3220 = vmatpush.msra.mxu0 %v3129
  %3221 = vmatpush.msra.mxu0 %v3125
  %3222 = vmatpush.msra.mxu0 %v3121
  %3223 = vmatpush.msra.mxu0 %v3117
  %3224 = vmatpush.msra.mxu0 %v3113
  %3225 = vmatpush.msra.mxu0 %v3109
  %3226 = vmatpush.msra.mxu0 %v3105
  %3227 = vmatpush.msra.mxu0 %v3101
  %3228 = vmatpush.msra.mxu0 %v3097
  %3229 = vmatpush.msra.mxu0 %v3093
  %3230 = vmatmul.f32.gmra.mxu0 %v2805
  %v3231 = vpop.f32.mrf.mxu0
  %v3232 = vadd.f32 0.0, %v3231
  %3233 = vdwg.mxu0
  %v3238 = vrot.slane %v3192, 6
  %v3239 = vrot.slane %v3212, 4
  %v3240 = vrot.slane %v3232, 2
  %v3241 = vsel %vm178, %v3172, %v3238
  %v3242 = vsel %vm180, %v3239, %v3240
  %v3243 = vsel %vm182, %v3241, %v3242
  %v3245 = vadd.f32 %v3089, %v3243
  %v3246 = vxor.u32 %v3245, 2147483648
  %v3247 = vmul.f32 %v3246, 1.442695
  %v3248 = vpow.pop %v3247
  %v3249 = vadd.f32 %v3248, 1.0
  %v3250 = vrcp.pop %v3249
  %v3251 = vmul.f32 %v3249, %v3250
  %v3252 = vsub.f32 1.0, %v3251
  %v3253 = vmul.f32 %v3250, %v3252
  %v3254 = vadd.f32 %v3250, %v3253
  %vm3255 = vweird.f32 %v3249
  %vm3256 = vweird.f32 %v3250
  %vm3257 = vmor %vm3255, %vm3256
  %v3258 = vsel %vm3257, %v3250, %v3254
  %v3259 = vand.u32 2147483647, %v3249
  %vm3260 = vcmp.eq.f32.partialorder %v3259, 8.507059e+37
  %v3261 = vand.u32 %v3249, 2147483648
  %v3262 = vor.u32 1.1754944e-38, %v3261
  %v3263 = vsel %vm3260, %v3262, %v3258
  %v3264 = vmul.f32 1.0, %v3263
  %v3266 = vrot.slane %v3245, 2
  %v3268 = vxor.u32 %v3266, 2147483648
  %v3269 = vmul.f32 %v3268, 1.442695
  %v3270 = vpow.pop %v3269
  %v3271 = vadd.f32 %v3270, 1.0
  %v3272 = vrcp.pop %v3271
  %v3273 = vmul.f32 %v3271, %v3272
  %v3274 = vsub.f32 1.0, %v3273
  %v3275 = vmul.f32 %v3272, %v3274
  %v3276 = vadd.f32 %v3272, %v3275
  %vm3277 = vweird.f32 %v3271
  %vm3278 = vweird.f32 %v3272
  %vm3279 = vmor %vm3277, %vm3278
  %v3280 = vsel %vm3279, %v3272, %v3276
  %v3281 = vand.u32 2147483647, %v3271
  %vm3282 = vcmp.eq.f32.partialorder %v3281, 8.507059e+37
  %v3283 = vand.u32 %v3271, 2147483648
  %v3284 = vor.u32 1.1754944e-38, %v3283
  %v3285 = vsel %vm3282, %v3284, %v3280
  %v3286 = vmul.f32 1.0, %v3285
  %v3287 = vrot.slane %v3245, 4
  %v3289 = vtanh.pop %v3287
  %v3290 = vrot.slane %v3245, 6
  %v3292 = vxor.u32 %v3290, 2147483648
  %v3293 = vmul.f32 %v3292, 1.442695
  %v3294 = vpow.pop %v3293
  %v3295 = vadd.f32 %v3294, 1.0
  %v3296 = vrcp.pop %v3295
  %v3297 = vmul.f32 %v3295, %v3296
  %v3298 = vsub.f32 1.0, %v3297
  %v3299 = vmul.f32 %v3296, %v3298
  %v3300 = vadd.f32 %v3296, %v3299
  %vm3301 = vweird.f32 %v3295
  %vm3302 = vweird.f32 %v3296
  %vm3303 = vmor %vm3301, %vm3302
  %v3304 = vsel %vm3303, %v3296, %v3300
  %v3305 = vand.u32 2147483647, %v3295
  %vm3306 = vcmp.eq.f32.partialorder %v3305, 8.507059e+37
  %v3307 = vand.u32 %v3295, 2147483648
  %v3308 = vor.u32 1.1754944e-38, %v3307
  %v3309 = vsel %vm3306, %v3308, %v3304
  %v3310 = vmul.f32 1.0, %v3309
  %v3311 = vmul.f32 %v3286, %v2803
  %v3312 = vmul.f32 %v3264, %v3289
  %v3313 = vadd.f32 %v3311, %v3312
  %v3314 = vtanh.pop %v3313
  %v3315 = vmul.f32 %v3310, %v3314
  %s3316 = scalar_lea.vmem %s0, 72
  %v3317 = vld [vmem:[%s3316] sm:$0xff]
  %v3318 = vld [vmem:[%s258] sm:$0xff]
  %v3319 = vld [vmem:[%s258 + $0x8] sm:$0xff]
  %v3320 = vld [vmem:[%s258 + $0x10] sm:$0xff]
  %v3321 = vld [vmem:[%s258 + $0x18] sm:$0xff]
  %v3322 = vld [vmem:[%s258 + $0x20] sm:$0xff]
  %v3323 = vld [vmem:[%s258 + $0x28] sm:$0xff]
  %v3324 = vld [vmem:[%s258 + $0x30] sm:$0xff]
  %v3325 = vld [vmem:[%s258 + $0x38] sm:$0xff]
  %v3326 = vld [vmem:[%s258 + $0x40] sm:$0xff]
  %v3327 = vld [vmem:[%s258 + $0x48] sm:$0xff]
  %v3328 = vld [vmem:[%s258 + $0x50] sm:$0xff]
  %v3329 = vld [vmem:[%s258 + $0x58] sm:$0xff]
  %v3330 = vld [vmem:[%s258 + $0x60] sm:$0xff]
  %v3331 = vld [vmem:[%s258 + $0x68] sm:$0xff]
  %v3332 = vld [vmem:[%s258 + $0x70] sm:$0xff]
  %v3333 = vld [vmem:[%s258 + $0x78] sm:$0xff]
  %v3334 = vld [vmem:[%s258 + $0x80] sm:$0xff]
  %v3335 = vld [vmem:[%s258 + $0x88] sm:$0xff]
  %v3336 = vld [vmem:[%s258 + $0x90] sm:$0xff]
  %v3337 = vld [vmem:[%s258 + $0x98] sm:$0xff]
  %v3338 = vld [vmem:[%s258 + $0xa0] sm:$0xff]
  %v3339 = vld [vmem:[%s258 + $0xa8] sm:$0xff]
  %v3340 = vld [vmem:[%s258 + $0xb0] sm:$0xff]
  %v3341 = vld [vmem:[%s258 + $0xb8] sm:$0xff]
  %v3342 = vld [vmem:[%s258 + $0xc0] sm:$0xff]
  %v3343 = vld [vmem:[%s258 + $0xc8] sm:$0xff]
  %v3344 = vld [vmem:[%s258 + $0xd0] sm:$0xff]
  %v3345 = vld [vmem:[%s258 + $0xd8] sm:$0xff]
  %v3346 = vld [vmem:[%s258 + $0xe0] sm:$0xff]
  %v3347 = vld [vmem:[%s258 + $0xe8] sm:$0xff]
  %v3348 = vld [vmem:[%s258 + $0xf0] sm:$0xff]
  %v3349 = vld [vmem:[%s258 + $0xf8] sm:$0xff]
  %v3350 = vld [vmem:[%s258 + $0x100] sm:$0xff]
  %v3351 = vld [vmem:[%s258 + $0x108] sm:$0xff]
  %v3352 = vld [vmem:[%s258 + $0x110] sm:$0xff]
  %v3353 = vld [vmem:[%s258 + $0x118] sm:$0xff]
  %v3354 = vld [vmem:[%s258 + $0x120] sm:$0xff]
  %v3355 = vld [vmem:[%s258 + $0x128] sm:$0xff]
  %v3356 = vld [vmem:[%s258 + $0x130] sm:$0xff]
  %v3357 = vld [vmem:[%s258 + $0x138] sm:$0xff]
  %v3358 = vld [vmem:[%s258 + $0x140] sm:$0xff]
  %v3359 = vld [vmem:[%s258 + $0x148] sm:$0xff]
  %v3360 = vld [vmem:[%s258 + $0x150] sm:$0xff]
  %v3361 = vld [vmem:[%s258 + $0x158] sm:$0xff]
  %v3362 = vld [vmem:[%s258 + $0x160] sm:$0xff]
  %v3363 = vld [vmem:[%s258 + $0x168] sm:$0xff]
  %v3364 = vld [vmem:[%s258 + $0x170] sm:$0xff]
  %v3365 = vld [vmem:[%s258 + $0x178] sm:$0xff]
  %v3366 = vld [vmem:[%s258 + $0x180] sm:$0xff]
  %v3367 = vld [vmem:[%s258 + $0x188] sm:$0xff]
  %v3368 = vld [vmem:[%s258 + $0x190] sm:$0xff]
  %v3369 = vld [vmem:[%s258 + $0x198] sm:$0xff]
  %v3370 = vld [vmem:[%s258 + $0x1a0] sm:$0xff]
  %v3371 = vld [vmem:[%s258 + $0x1a8] sm:$0xff]
  %v3372 = vld [vmem:[%s258 + $0x1b0] sm:$0xff]
  %v3373 = vld [vmem:[%s258 + $0x1b8] sm:$0xff]
  %v3374 = vld [vmem:[%s258 + $0x1c0] sm:$0xff]
  %v3375 = vld [vmem:[%s258 + $0x1c8] sm:$0xff]
  %v3376 = vld [vmem:[%s258 + $0x1d0] sm:$0xff]
  %v3377 = vld [vmem:[%s258 + $0x1d8] sm:$0xff]
  %v3378 = vld [vmem:[%s258 + $0x1e0] sm:$0xff]
  %v3379 = vld [vmem:[%s258 + $0x1e8] sm:$0xff]
  %v3380 = vld [vmem:[%s258 + $0x1f0] sm:$0xff]
  %v3381 = vld [vmem:[%s258 + $0x1f8] sm:$0xff]
  %3382 = vmatpush.msra.mxu0 %v3378
  %3383 = vmatpush.msra.mxu0 %v3374
  %3384 = vmatpush.msra.mxu0 %v3370
  %3385 = vmatpush.msra.mxu0 %v3366
  %3386 = vmatpush.msra.mxu0 %v3362
  %3387 = vmatpush.msra.mxu0 %v3358
  %3388 = vmatpush.msra.mxu0 %v3354
  %3389 = vmatpush.msra.mxu0 %v3350
  %3390 = vmatpush.msra.mxu0 %v3346
  %3391 = vmatpush.msra.mxu0 %v3342
  %3392 = vmatpush.msra.mxu0 %v3338
  %3393 = vmatpush.msra.mxu0 %v3334
  %3394 = vmatpush.msra.mxu0 %v3330
  %3395 = vmatpush.msra.mxu0 %v3326
  %3396 = vmatpush.msra.mxu0 %v3322
  %3397 = vmatpush.msra.mxu0 %v3318
  %3398 = vmatmul.f32.gmra.mxu0 %v3033
  %v3399 = vpop.f32.mrf.mxu0
  %v3400 = vadd.f32 0.0, %v3399
  %3401 = vdwg.mxu0
  %3402 = vmatpush.msra.mxu0 %v3379
  %3403 = vmatpush.msra.mxu0 %v3375
  %3404 = vmatpush.msra.mxu0 %v3371
  %3405 = vmatpush.msra.mxu0 %v3367
  %3406 = vmatpush.msra.mxu0 %v3363
  %3407 = vmatpush.msra.mxu0 %v3359
  %3408 = vmatpush.msra.mxu0 %v3355
  %3409 = vmatpush.msra.mxu0 %v3351
  %3410 = vmatpush.msra.mxu0 %v3347
  %3411 = vmatpush.msra.mxu0 %v3343
  %3412 = vmatpush.msra.mxu0 %v3339
  %3413 = vmatpush.msra.mxu0 %v3335
  %3414 = vmatpush.msra.mxu0 %v3331
  %3415 = vmatpush.msra.mxu0 %v3327
  %3416 = vmatpush.msra.mxu0 %v3323
  %3417 = vmatpush.msra.mxu0 %v3319
  %3418 = vmatmul.f32.gmra.mxu0 %v3033
  %v3419 = vpop.f32.mrf.mxu0
  %v3420 = vadd.f32 0.0, %v3419
  %3421 = vdwg.mxu0
  %3422 = vmatpush.msra.mxu0 %v3380
  %3423 = vmatpush.msra.mxu0 %v3376
  %3424 = vmatpush.msra.mxu0 %v3372
  %3425 = vmatpush.msra.mxu0 %v3368
  %3426 = vmatpush.msra.mxu0 %v3364
  %3427 = vmatpush.msra.mxu0 %v3360
  %3428 = vmatpush.msra.mxu0 %v3356
  %3429 = vmatpush.msra.mxu0 %v3352
  %3430 = vmatpush.msra.mxu0 %v3348
  %3431 = vmatpush.msra.mxu0 %v3344
  %3432 = vmatpush.msra.mxu0 %v3340
  %3433 = vmatpush.msra.mxu0 %v3336
  %3434 = vmatpush.msra.mxu0 %v3332
  %3435 = vmatpush.msra.mxu0 %v3328
  %3436 = vmatpush.msra.mxu0 %v3324
  %3437 = vmatpush.msra.mxu0 %v3320
  %3438 = vmatmul.f32.gmra.mxu0 %v3033
  %v3439 = vpop.f32.mrf.mxu0
  %v3440 = vadd.f32 0.0, %v3439
  %3441 = vdwg.mxu0
  %3442 = vmatpush.msra.mxu0 %v3381
  %3443 = vmatpush.msra.mxu0 %v3377
  %3444 = vmatpush.msra.mxu0 %v3373
  %3445 = vmatpush.msra.mxu0 %v3369
  %3446 = vmatpush.msra.mxu0 %v3365
  %3447 = vmatpush.msra.mxu0 %v3361
  %3448 = vmatpush.msra.mxu0 %v3357
  %3449 = vmatpush.msra.mxu0 %v3353
  %3450 = vmatpush.msra.mxu0 %v3349
  %3451 = vmatpush.msra.mxu0 %v3345
  %3452 = vmatpush.msra.mxu0 %v3341
  %3453 = vmatpush.msra.mxu0 %v3337
  %3454 = vmatpush.msra.mxu0 %v3333
  %3455 = vmatpush.msra.mxu0 %v3329
  %3456 = vmatpush.msra.mxu0 %v3325
  %3457 = vmatpush.msra.mxu0 %v3321
  %3458 = vmatmul.f32.gmra.mxu0 %v3033
  %v3459 = vpop.f32.mrf.mxu0
  %v3460 = vadd.f32 0.0, %v3459
  %3461 = vdwg.mxu0
  %v3466 = vrot.slane %v3420, 6
  %v3467 = vrot.slane %v3440, 4
  %v3468 = vrot.slane %v3460, 2
  %v3469 = vsel %vm178, %v3400, %v3466
  %v3470 = vsel %vm180, %v3467, %v3468
  %v3471 = vsel %vm182, %v3469, %v3470
  %v3473 = vadd.f32 %v3317, %v3471
  %v3474 = vxor.u32 %v3473, 2147483648
  %v3475 = vmul.f32 %v3474, 1.442695
  %v3476 = vpow.pop %v3475
  %v3477 = vadd.f32 %v3476, 1.0
  %v3478 = vrcp.pop %v3477
  %v3479 = vmul.f32 %v3477, %v3478
  %v3480 = vsub.f32 1.0, %v3479
  %v3481 = vmul.f32 %v3478, %v3480
  %v3482 = vadd.f32 %v3478, %v3481
  %vm3483 = vweird.f32 %v3477
  %vm3484 = vweird.f32 %v3478
  %vm3485 = vmor %vm3483, %vm3484
  %v3486 = vsel %vm3485, %v3478, %v3482
  %v3487 = vand.u32 2147483647, %v3477
  %vm3488 = vcmp.eq.f32.partialorder %v3487, 8.507059e+37
  %v3489 = vand.u32 %v3477, 2147483648
  %v3490 = vor.u32 1.1754944e-38, %v3489
  %v3491 = vsel %vm3488, %v3490, %v3486
  %v3492 = vmul.f32 1.0, %v3491
  %v3494 = vrot.slane %v3473, 2
  %v3496 = vxor.u32 %v3494, 2147483648
  %v3497 = vmul.f32 %v3496, 1.442695
  %v3498 = vpow.pop %v3497
  %v3499 = vadd.f32 %v3498, 1.0
  %v3500 = vrcp.pop %v3499
  %v3501 = vmul.f32 %v3499, %v3500
  %v3502 = vsub.f32 1.0, %v3501
  %v3503 = vmul.f32 %v3500, %v3502
  %v3504 = vadd.f32 %v3500, %v3503
  %vm3505 = vweird.f32 %v3499
  %vm3506 = vweird.f32 %v3500
  %vm3507 = vmor %vm3505, %vm3506
  %v3508 = vsel %vm3507, %v3500, %v3504
  %v3509 = vand.u32 2147483647, %v3499
  %vm3510 = vcmp.eq.f32.partialorder %v3509, 8.507059e+37
  %v3511 = vand.u32 %v3499, 2147483648
  %v3512 = vor.u32 1.1754944e-38, %v3511
  %v3513 = vsel %vm3510, %v3512, %v3508
  %v3514 = vmul.f32 1.0, %v3513
  %v3515 = vrot.slane %v3473, 4
  %v3517 = vtanh.pop %v3515
  %v3518 = vrot.slane %v3473, 6
  %v3520 = vxor.u32 %v3518, 2147483648
  %v3521 = vmul.f32 %v3520, 1.442695
  %v3522 = vpow.pop %v3521
  %v3523 = vadd.f32 %v3522, 1.0
  %v3524 = vrcp.pop %v3523
  %v3525 = vmul.f32 %v3523, %v3524
  %v3526 = vsub.f32 1.0, %v3525
  %v3527 = vmul.f32 %v3524, %v3526
  %v3528 = vadd.f32 %v3524, %v3527
  %vm3529 = vweird.f32 %v3523
  %vm3530 = vweird.f32 %v3524
  %vm3531 = vmor %vm3529, %vm3530
  %v3532 = vsel %vm3531, %v3524, %v3528
  %v3533 = vand.u32 2147483647, %v3523
  %vm3534 = vcmp.eq.f32.partialorder %v3533, 8.507059e+37
  %v3535 = vand.u32 %v3523, 2147483648
  %v3536 = vor.u32 1.1754944e-38, %v3535
  %v3537 = vsel %vm3534, %v3536, %v3532
  %v3538 = vmul.f32 1.0, %v3537
  %v3539 = vmul.f32 %v3514, %v3031
  %v3540 = vmul.f32 %v3492, %v3517
  %v3541 = vadd.f32 %v3539, %v3540
  %v3542 = vtanh.pop %v3541
  %v3543 = vmul.f32 %v3538, %v3542
  %3544 = vrot.lane.b32.xlu0 %v3315, 127
  %v3545 = vpop.permute.xlu0 %3544
  %3546 = vrot.lane.b32.xlu0 %v3315, 1
  %v3547 = vpop.permute.xlu0 %3546
  %v3548 = vsel %vm25, %v3545, %v3547
  %v3549 = vsub.f32 %v3315, %v3548
  %v3550 = vxor.u32 %v3549, 2147483648
  %v3551 = vmul.f32 %v3550, 1.442695
  %v3552 = vpow.pop %v3551
  %v3553 = vadd.f32 %v3552, 1.0
  %v3554 = vrcp.pop %v3553
  %v3555 = vmul.f32 %v3553, %v3554
  %v3556 = vsub.f32 1.0, %v3555
  %v3557 = vmul.f32 %v3554, %v3556
  %v3558 = vadd.f32 %v3554, %v3557
  %vm3559 = vweird.f32 %v3553
  %vm3560 = vweird.f32 %v3554
  %vm3561 = vmor %vm3559, %vm3560
  %v3562 = vsel %vm3561, %v3554, %v3558
  %v3563 = vand.u32 2147483647, %v3553
  %vm3564 = vcmp.eq.f32.partialorder %v3563, 8.507059e+37
  %v3565 = vand.u32 %v3553, 2147483648
  %v3566 = vor.u32 1.1754944e-38, %v3565
  %v3567 = vsel %vm3564, %v3566, %v3562
  %v3568 = vmul.f32 1.0, %v3567
  %s3569 = scalar_lea.vmem %s2, 12
  %3570 = vst [vmem:[%s3569] sm:$0x3] %v3568
  %3571 = vrot.lane.b32.xlu0 %v3543, 127
  %v3572 = vpop.permute.xlu0 %3571
  %3573 = vrot.lane.b32.xlu0 %v3543, 1
  %v3574 = vpop.permute.xlu0 %3573
  %v3575 = vsel %vm25, %v3572, %v3574
  %v3576 = vsub.f32 %v3543, %v3575
  %v3577 = vxor.u32 %v3576, 2147483648
  %v3578 = vmul.f32 %v3577, 1.442695
  %v3579 = vpow.pop %v3578
  %v3580 = vadd.f32 %v3579, 1.0
  %v3581 = vrcp.pop %v3580
  %v3582 = vmul.f32 %v3580, %v3581
  %v3583 = vsub.f32 1.0, %v3582
  %v3584 = vmul.f32 %v3581, %v3583
  %v3585 = vadd.f32 %v3581, %v3584
  %vm3586 = vweird.f32 %v3580
  %vm3587 = vweird.f32 %v3581
  %vm3588 = vmor %vm3586, %vm3587
  %v3589 = vsel %vm3588, %v3581, %v3585
  %v3590 = vand.u32 2147483647, %v3580
  %vm3591 = vcmp.eq.f32.partialorder %v3590, 8.507059e+37
  %v3592 = vand.u32 %v3580, 2147483648
  %v3593 = vor.u32 1.1754944e-38, %v3592
  %v3594 = vsel %vm3591, %v3593, %v3589
  %v3595 = vmul.f32 1.0, %v3594
  %s3596 = scalar_lea.vmem %s2, 18
  %3597 = vst [vmem:[%s3596] sm:$0x3] %v3595
  %s3598 = scalar_lea.vmem %s0, 56
  %v3599 = vld [vmem:[%s3598] sm:$0xff]
  %v3600 = vld [vmem:[%s1] sm:$0xff]
  %v3601 = vld [vmem:[%s1 + $0x8] sm:$0xff]
  %v3602 = vld [vmem:[%s1 + $0x10] sm:$0xff]
  %v3603 = vld [vmem:[%s1 + $0x18] sm:$0xff]
  %v3604 = vld [vmem:[%s1 + $0x20] sm:$0xff]
  %v3605 = vld [vmem:[%s1 + $0x28] sm:$0xff]
  %v3606 = vld [vmem:[%s1 + $0x30] sm:$0xff]
  %v3607 = vld [vmem:[%s1 + $0x38] sm:$0xff]
  %v3608 = vld [vmem:[%s1 + $0x40] sm:$0xff]
  %v3609 = vld [vmem:[%s1 + $0x48] sm:$0xff]
  %v3610 = vld [vmem:[%s1 + $0x50] sm:$0xff]
  %v3611 = vld [vmem:[%s1 + $0x58] sm:$0xff]
  %v3612 = vld [vmem:[%s1 + $0x60] sm:$0xff]
  %v3613 = vld [vmem:[%s1 + $0x68] sm:$0xff]
  %v3614 = vld [vmem:[%s1 + $0x70] sm:$0xff]
  %v3615 = vld [vmem:[%s1 + $0x78] sm:$0xff]
  %v3616 = vld [vmem:[%s1 + $0x80] sm:$0xff]
  %v3617 = vld [vmem:[%s1 + $0x88] sm:$0xff]
  %v3618 = vld [vmem:[%s1 + $0x90] sm:$0xff]
  %v3619 = vld [vmem:[%s1 + $0x98] sm:$0xff]
  %v3620 = vld [vmem:[%s1 + $0xa0] sm:$0xff]
  %v3621 = vld [vmem:[%s1 + $0xa8] sm:$0xff]
  %v3622 = vld [vmem:[%s1 + $0xb0] sm:$0xff]
  %v3623 = vld [vmem:[%s1 + $0xb8] sm:$0xff]
  %v3624 = vld [vmem:[%s1 + $0xc0] sm:$0xff]
  %v3625 = vld [vmem:[%s1 + $0xc8] sm:$0xff]
  %v3626 = vld [vmem:[%s1 + $0xd0] sm:$0xff]
  %v3627 = vld [vmem:[%s1 + $0xd8] sm:$0xff]
  %v3628 = vld [vmem:[%s1 + $0xe0] sm:$0xff]
  %v3629 = vld [vmem:[%s1 + $0xe8] sm:$0xff]
  %v3630 = vld [vmem:[%s1 + $0xf0] sm:$0xff]
  %v3631 = vld [vmem:[%s1 + $0xf8] sm:$0xff]
  %v3632 = vld [vmem:[%s1 + $0x100] sm:$0xff]
  %v3633 = vld [vmem:[%s1 + $0x108] sm:$0xff]
  %v3634 = vld [vmem:[%s1 + $0x110] sm:$0xff]
  %v3635 = vld [vmem:[%s1 + $0x118] sm:$0xff]
  %v3636 = vld [vmem:[%s1 + $0x120] sm:$0xff]
  %v3637 = vld [vmem:[%s1 + $0x128] sm:$0xff]
  %v3638 = vld [vmem:[%s1 + $0x130] sm:$0xff]
  %v3639 = vld [vmem:[%s1 + $0x138] sm:$0xff]
  %v3640 = vld [vmem:[%s1 + $0x140] sm:$0xff]
  %v3641 = vld [vmem:[%s1 + $0x148] sm:$0xff]
  %v3642 = vld [vmem:[%s1 + $0x150] sm:$0xff]
  %v3643 = vld [vmem:[%s1 + $0x158] sm:$0xff]
  %v3644 = vld [vmem:[%s1 + $0x160] sm:$0xff]
  %v3645 = vld [vmem:[%s1 + $0x168] sm:$0xff]
  %v3646 = vld [vmem:[%s1 + $0x170] sm:$0xff]
  %v3647 = vld [vmem:[%s1 + $0x178] sm:$0xff]
  %v3648 = vld [vmem:[%s1 + $0x180] sm:$0xff]
  %v3649 = vld [vmem:[%s1 + $0x188] sm:$0xff]
  %v3650 = vld [vmem:[%s1 + $0x190] sm:$0xff]
  %v3651 = vld [vmem:[%s1 + $0x198] sm:$0xff]
  %v3652 = vld [vmem:[%s1 + $0x1a0] sm:$0xff]
  %v3653 = vld [vmem:[%s1 + $0x1a8] sm:$0xff]
  %v3654 = vld [vmem:[%s1 + $0x1b0] sm:$0xff]
  %v3655 = vld [vmem:[%s1 + $0x1b8] sm:$0xff]
  %v3656 = vld [vmem:[%s1 + $0x1c0] sm:$0xff]
  %v3657 = vld [vmem:[%s1 + $0x1c8] sm:$0xff]
  %v3658 = vld [vmem:[%s1 + $0x1d0] sm:$0xff]
  %v3659 = vld [vmem:[%s1 + $0x1d8] sm:$0xff]
  %v3660 = vld [vmem:[%s1 + $0x1e0] sm:$0xff]
  %v3661 = vld [vmem:[%s1 + $0x1e8] sm:$0xff]
  %v3662 = vld [vmem:[%s1 + $0x1f0] sm:$0xff]
  %v3663 = vld [vmem:[%s1 + $0x1f8] sm:$0xff]
  %3664 = vmatpush.msra.mxu0 %v3660
  %3665 = vmatpush.msra.mxu0 %v3656
  %3666 = vmatpush.msra.mxu0 %v3652
  %3667 = vmatpush.msra.mxu0 %v3648
  %3668 = vmatpush.msra.mxu0 %v3644
  %3669 = vmatpush.msra.mxu0 %v3640
  %3670 = vmatpush.msra.mxu0 %v3636
  %3671 = vmatpush.msra.mxu0 %v3632
  %3672 = vmatpush.msra.mxu0 %v3628
  %3673 = vmatpush.msra.mxu0 %v3624
  %3674 = vmatpush.msra.mxu0 %v3620
  %3675 = vmatpush.msra.mxu0 %v3616
  %3676 = vmatpush.msra.mxu0 %v3612
  %3677 = vmatpush.msra.mxu0 %v3608
  %3678 = vmatpush.msra.mxu0 %v3604
  %3679 = vmatpush.msra.mxu0 %v3600
  %3680 = vmatmul.f32.gmra.mxu0 %v3315
  %v3681 = vpop.f32.mrf.mxu0
  %v3682 = vadd.f32 0.0, %v3681
  %3683 = vdwg.mxu0
  %3684 = vmatpush.msra.mxu0 %v3661
  %3685 = vmatpush.msra.mxu0 %v3657
  %3686 = vmatpush.msra.mxu0 %v3653
  %3687 = vmatpush.msra.mxu0 %v3649
  %3688 = vmatpush.msra.mxu0 %v3645
  %3689 = vmatpush.msra.mxu0 %v3641
  %3690 = vmatpush.msra.mxu0 %v3637
  %3691 = vmatpush.msra.mxu0 %v3633
  %3692 = vmatpush.msra.mxu0 %v3629
  %3693 = vmatpush.msra.mxu0 %v3625
  %3694 = vmatpush.msra.mxu0 %v3621
  %3695 = vmatpush.msra.mxu0 %v3617
  %3696 = vmatpush.msra.mxu0 %v3613
  %3697 = vmatpush.msra.mxu0 %v3609
  %3698 = vmatpush.msra.mxu0 %v3605
  %3699 = vmatpush.msra.mxu0 %v3601
  %3700 = vmatmul.f32.gmra.mxu0 %v3315
  %v3701 = vpop.f32.mrf.mxu0
  %v3702 = vadd.f32 0.0, %v3701
  %3703 = vdwg.mxu0
  %3704 = vmatpush.msra.mxu0 %v3662
  %3705 = vmatpush.msra.mxu0 %v3658
  %3706 = vmatpush.msra.mxu0 %v3654
  %3707 = vmatpush.msra.mxu0 %v3650
  %3708 = vmatpush.msra.mxu0 %v3646
  %3709 = vmatpush.msra.mxu0 %v3642
  %3710 = vmatpush.msra.mxu0 %v3638
  %3711 = vmatpush.msra.mxu0 %v3634
  %3712 = vmatpush.msra.mxu0 %v3630
  %3713 = vmatpush.msra.mxu0 %v3626
  %3714 = vmatpush.msra.mxu0 %v3622
  %3715 = vmatpush.msra.mxu0 %v3618
  %3716 = vmatpush.msra.mxu0 %v3614
  %3717 = vmatpush.msra.mxu0 %v3610
  %3718 = vmatpush.msra.mxu0 %v3606
  %3719 = vmatpush.msra.mxu0 %v3602
  %3720 = vmatmul.f32.gmra.mxu0 %v3315
  %v3721 = vpop.f32.mrf.mxu0
  %v3722 = vadd.f32 0.0, %v3721
  %3723 = vdwg.mxu0
  %3724 = vmatpush.msra.mxu0 %v3663
  %3725 = vmatpush.msra.mxu0 %v3659
  %3726 = vmatpush.msra.mxu0 %v3655
  %3727 = vmatpush.msra.mxu0 %v3651
  %3728 = vmatpush.msra.mxu0 %v3647
  %3729 = vmatpush.msra.mxu0 %v3643
  %3730 = vmatpush.msra.mxu0 %v3639
  %3731 = vmatpush.msra.mxu0 %v3635
  %3732 = vmatpush.msra.mxu0 %v3631
  %3733 = vmatpush.msra.mxu0 %v3627
  %3734 = vmatpush.msra.mxu0 %v3623
  %3735 = vmatpush.msra.mxu0 %v3619
  %3736 = vmatpush.msra.mxu0 %v3615
  %3737 = vmatpush.msra.mxu0 %v3611
  %3738 = vmatpush.msra.mxu0 %v3607
  %3739 = vmatpush.msra.mxu0 %v3603
  %3740 = vmatmul.f32.gmra.mxu0 %v3315
  %v3741 = vpop.f32.mrf.mxu0
  %v3742 = vadd.f32 0.0, %v3741
  %3743 = vdwg.mxu0
  %v3748 = vrot.slane %v3702, 6
  %v3749 = vrot.slane %v3722, 4
  %v3750 = vrot.slane %v3742, 2
  %v3751 = vsel %vm178, %v3682, %v3748
  %v3752 = vsel %vm180, %v3749, %v3750
  %v3753 = vsel %vm182, %v3751, %v3752
  %v3755 = vadd.f32 %v3599, %v3753
  %v3756 = vxor.u32 %v3755, 2147483648
  %v3757 = vmul.f32 %v3756, 1.442695
  %v3758 = vpow.pop %v3757
  %v3759 = vadd.f32 %v3758, 1.0
  %v3760 = vrcp.pop %v3759
  %v3761 = vmul.f32 %v3759, %v3760
  %v3762 = vsub.f32 1.0, %v3761
  %v3763 = vmul.f32 %v3760, %v3762
  %v3764 = vadd.f32 %v3760, %v3763
  %vm3765 = vweird.f32 %v3759
  %vm3766 = vweird.f32 %v3760
  %vm3767 = vmor %vm3765, %vm3766
  %v3768 = vsel %vm3767, %v3760, %v3764
  %v3769 = vand.u32 2147483647, %v3759
  %vm3770 = vcmp.eq.f32.partialorder %v3769, 8.507059e+37
  %v3771 = vand.u32 %v3759, 2147483648
  %v3772 = vor.u32 1.1754944e-38, %v3771
  %v3773 = vsel %vm3770, %v3772, %v3768
  %v3774 = vmul.f32 1.0, %v3773
  %v3776 = vrot.slane %v3755, 2
  %v3778 = vxor.u32 %v3776, 2147483648
  %v3779 = vmul.f32 %v3778, 1.442695
  %v3780 = vpow.pop %v3779
  %v3781 = vadd.f32 %v3780, 1.0
  %v3782 = vrcp.pop %v3781
  %v3783 = vmul.f32 %v3781, %v3782
  %v3784 = vsub.f32 1.0, %v3783
  %v3785 = vmul.f32 %v3782, %v3784
  %v3786 = vadd.f32 %v3782, %v3785
  %vm3787 = vweird.f32 %v3781
  %vm3788 = vweird.f32 %v3782
  %vm3789 = vmor %vm3787, %vm3788
  %v3790 = vsel %vm3789, %v3782, %v3786
  %v3791 = vand.u32 2147483647, %v3781
  %vm3792 = vcmp.eq.f32.partialorder %v3791, 8.507059e+37
  %v3793 = vand.u32 %v3781, 2147483648
  %v3794 = vor.u32 1.1754944e-38, %v3793
  %v3795 = vsel %vm3792, %v3794, %v3790
  %v3796 = vmul.f32 1.0, %v3795
  %v3797 = vrot.slane %v3755, 4
  %v3799 = vtanh.pop %v3797
  %v3800 = vrot.slane %v3755, 6
  %v3802 = vxor.u32 %v3800, 2147483648
  %v3803 = vmul.f32 %v3802, 1.442695
  %v3804 = vpow.pop %v3803
  %v3805 = vadd.f32 %v3804, 1.0
  %v3806 = vrcp.pop %v3805
  %v3807 = vmul.f32 %v3805, %v3806
  %v3808 = vsub.f32 1.0, %v3807
  %v3809 = vmul.f32 %v3806, %v3808
  %v3810 = vadd.f32 %v3806, %v3809
  %vm3811 = vweird.f32 %v3805
  %vm3812 = vweird.f32 %v3806
  %vm3813 = vmor %vm3811, %vm3812
  %v3814 = vsel %vm3813, %v3806, %v3810
  %v3815 = vand.u32 2147483647, %v3805
  %vm3816 = vcmp.eq.f32.partialorder %v3815, 8.507059e+37
  %v3817 = vand.u32 %v3805, 2147483648
  %v3818 = vor.u32 1.1754944e-38, %v3817
  %v3819 = vsel %vm3816, %v3818, %v3814
  %v3820 = vmul.f32 1.0, %v3819
  %v3821 = vmul.f32 %v3796, %v3313
  %v3822 = vmul.f32 %v3774, %v3799
  %v3823 = vadd.f32 %v3821, %v3822
  %v3824 = vtanh.pop %v3823
  %v3825 = vmul.f32 %v3820, %v3824
  %s3826 = scalar_lea.vmem %s0, 64
  %v3827 = vld [vmem:[%s3826] sm:$0xff]
  %v3828 = vld [vmem:[%s258] sm:$0xff]
  %v3829 = vld [vmem:[%s258 + $0x8] sm:$0xff]
  %v3830 = vld [vmem:[%s258 + $0x10] sm:$0xff]
  %v3831 = vld [vmem:[%s258 + $0x18] sm:$0xff]
  %v3832 = vld [vmem:[%s258 + $0x20] sm:$0xff]
  %v3833 = vld [vmem:[%s258 + $0x28] sm:$0xff]
  %v3834 = vld [vmem:[%s258 + $0x30] sm:$0xff]
  %v3835 = vld [vmem:[%s258 + $0x38] sm:$0xff]
  %v3836 = vld [vmem:[%s258 + $0x40] sm:$0xff]
  %v3837 = vld [vmem:[%s258 + $0x48] sm:$0xff]
  %v3838 = vld [vmem:[%s258 + $0x50] sm:$0xff]
  %v3839 = vld [vmem:[%s258 + $0x58] sm:$0xff]
  %v3840 = vld [vmem:[%s258 + $0x60] sm:$0xff]
  %v3841 = vld [vmem:[%s258 + $0x68] sm:$0xff]
  %v3842 = vld [vmem:[%s258 + $0x70] sm:$0xff]
  %v3843 = vld [vmem:[%s258 + $0x78] sm:$0xff]
  %v3844 = vld [vmem:[%s258 + $0x80] sm:$0xff]
  %v3845 = vld [vmem:[%s258 + $0x88] sm:$0xff]
  %v3846 = vld [vmem:[%s258 + $0x90] sm:$0xff]
  %v3847 = vld [vmem:[%s258 + $0x98] sm:$0xff]
  %v3848 = vld [vmem:[%s258 + $0xa0] sm:$0xff]
  %v3849 = vld [vmem:[%s258 + $0xa8] sm:$0xff]
  %v3850 = vld [vmem:[%s258 + $0xb0] sm:$0xff]
  %v3851 = vld [vmem:[%s258 + $0xb8] sm:$0xff]
  %v3852 = vld [vmem:[%s258 + $0xc0] sm:$0xff]
  %v3853 = vld [vmem:[%s258 + $0xc8] sm:$0xff]
  %v3854 = vld [vmem:[%s258 + $0xd0] sm:$0xff]
  %v3855 = vld [vmem:[%s258 + $0xd8] sm:$0xff]
  %v3856 = vld [vmem:[%s258 + $0xe0] sm:$0xff]
  %v3857 = vld [vmem:[%s258 + $0xe8] sm:$0xff]
  %v3858 = vld [vmem:[%s258 + $0xf0] sm:$0xff]
  %v3859 = vld [vmem:[%s258 + $0xf8] sm:$0xff]
  %v3860 = vld [vmem:[%s258 + $0x100] sm:$0xff]
  %v3861 = vld [vmem:[%s258 + $0x108] sm:$0xff]
  %v3862 = vld [vmem:[%s258 + $0x110] sm:$0xff]
  %v3863 = vld [vmem:[%s258 + $0x118] sm:$0xff]
  %v3864 = vld [vmem:[%s258 + $0x120] sm:$0xff]
  %v3865 = vld [vmem:[%s258 + $0x128] sm:$0xff]
  %v3866 = vld [vmem:[%s258 + $0x130] sm:$0xff]
  %v3867 = vld [vmem:[%s258 + $0x138] sm:$0xff]
  %v3868 = vld [vmem:[%s258 + $0x140] sm:$0xff]
  %v3869 = vld [vmem:[%s258 + $0x148] sm:$0xff]
  %v3870 = vld [vmem:[%s258 + $0x150] sm:$0xff]
  %v3871 = vld [vmem:[%s258 + $0x158] sm:$0xff]
  %v3872 = vld [vmem:[%s258 + $0x160] sm:$0xff]
  %v3873 = vld [vmem:[%s258 + $0x168] sm:$0xff]
  %v3874 = vld [vmem:[%s258 + $0x170] sm:$0xff]
  %v3875 = vld [vmem:[%s258 + $0x178] sm:$0xff]
  %v3876 = vld [vmem:[%s258 + $0x180] sm:$0xff]
  %v3877 = vld [vmem:[%s258 + $0x188] sm:$0xff]
  %v3878 = vld [vmem:[%s258 + $0x190] sm:$0xff]
  %v3879 = vld [vmem:[%s258 + $0x198] sm:$0xff]
  %v3880 = vld [vmem:[%s258 + $0x1a0] sm:$0xff]
  %v3881 = vld [vmem:[%s258 + $0x1a8] sm:$0xff]
  %v3882 = vld [vmem:[%s258 + $0x1b0] sm:$0xff]
  %v3883 = vld [vmem:[%s258 + $0x1b8] sm:$0xff]
  %v3884 = vld [vmem:[%s258 + $0x1c0] sm:$0xff]
  %v3885 = vld [vmem:[%s258 + $0x1c8] sm:$0xff]
  %v3886 = vld [vmem:[%s258 + $0x1d0] sm:$0xff]
  %v3887 = vld [vmem:[%s258 + $0x1d8] sm:$0xff]
  %v3888 = vld [vmem:[%s258 + $0x1e0] sm:$0xff]
  %v3889 = vld [vmem:[%s258 + $0x1e8] sm:$0xff]
  %v3890 = vld [vmem:[%s258 + $0x1f0] sm:$0xff]
  %v3891 = vld [vmem:[%s258 + $0x1f8] sm:$0xff]
  %3892 = vmatpush.msra.mxu0 %v3888
  %3893 = vmatpush.msra.mxu0 %v3884
  %3894 = vmatpush.msra.mxu0 %v3880
  %3895 = vmatpush.msra.mxu0 %v3876
  %3896 = vmatpush.msra.mxu0 %v3872
  %3897 = vmatpush.msra.mxu0 %v3868
  %3898 = vmatpush.msra.mxu0 %v3864
  %3899 = vmatpush.msra.mxu0 %v3860
  %3900 = vmatpush.msra.mxu0 %v3856
  %3901 = vmatpush.msra.mxu0 %v3852
  %3902 = vmatpush.msra.mxu0 %v3848
  %3903 = vmatpush.msra.mxu0 %v3844
  %3904 = vmatpush.msra.mxu0 %v3840
  %3905 = vmatpush.msra.mxu0 %v3836
  %3906 = vmatpush.msra.mxu0 %v3832
  %3907 = vmatpush.msra.mxu0 %v3828
  %3908 = vmatmul.f32.gmra.mxu0 %v3543
  %v3909 = vpop.f32.mrf.mxu0
  %v3910 = vadd.f32 0.0, %v3909
  %3911 = vdwg.mxu0
  %3912 = vmatpush.msra.mxu0 %v3889
  %3913 = vmatpush.msra.mxu0 %v3885
  %3914 = vmatpush.msra.mxu0 %v3881
  %3915 = vmatpush.msra.mxu0 %v3877
  %3916 = vmatpush.msra.mxu0 %v3873
  %3917 = vmatpush.msra.mxu0 %v3869
  %3918 = vmatpush.msra.mxu0 %v3865
  %3919 = vmatpush.msra.mxu0 %v3861
  %3920 = vmatpush.msra.mxu0 %v3857
  %3921 = vmatpush.msra.mxu0 %v3853
  %3922 = vmatpush.msra.mxu0 %v3849
  %3923 = vmatpush.msra.mxu0 %v3845
  %3924 = vmatpush.msra.mxu0 %v3841
  %3925 = vmatpush.msra.mxu0 %v3837
  %3926 = vmatpush.msra.mxu0 %v3833
  %3927 = vmatpush.msra.mxu0 %v3829
  %3928 = vmatmul.f32.gmra.mxu0 %v3543
  %v3929 = vpop.f32.mrf.mxu0
  %v3930 = vadd.f32 0.0, %v3929
  %3931 = vdwg.mxu0
  %3932 = vmatpush.msra.mxu0 %v3890
  %3933 = vmatpush.msra.mxu0 %v3886
  %3934 = vmatpush.msra.mxu0 %v3882
  %3935 = vmatpush.msra.mxu0 %v3878
  %3936 = vmatpush.msra.mxu0 %v3874
  %3937 = vmatpush.msra.mxu0 %v3870
  %3938 = vmatpush.msra.mxu0 %v3866
  %3939 = vmatpush.msra.mxu0 %v3862
  %3940 = vmatpush.msra.mxu0 %v3858
  %3941 = vmatpush.msra.mxu0 %v3854
  %3942 = vmatpush.msra.mxu0 %v3850
  %3943 = vmatpush.msra.mxu0 %v3846
  %3944 = vmatpush.msra.mxu0 %v3842
  %3945 = vmatpush.msra.mxu0 %v3838
  %3946 = vmatpush.msra.mxu0 %v3834
  %3947 = vmatpush.msra.mxu0 %v3830
  %3948 = vmatmul.f32.gmra.mxu0 %v3543
  %v3949 = vpop.f32.mrf.mxu0
  %v3950 = vadd.f32 0.0, %v3949
  %3951 = vdwg.mxu0
  %3952 = vmatpush.msra.mxu0 %v3891
  %3953 = vmatpush.msra.mxu0 %v3887
  %3954 = vmatpush.msra.mxu0 %v3883
  %3955 = vmatpush.msra.mxu0 %v3879
  %3956 = vmatpush.msra.mxu0 %v3875
  %3957 = vmatpush.msra.mxu0 %v3871
  %3958 = vmatpush.msra.mxu0 %v3867
  %3959 = vmatpush.msra.mxu0 %v3863
  %3960 = vmatpush.msra.mxu0 %v3859
  %3961 = vmatpush.msra.mxu0 %v3855
  %3962 = vmatpush.msra.mxu0 %v3851
  %3963 = vmatpush.msra.mxu0 %v3847
  %3964 = vmatpush.msra.mxu0 %v3843
  %3965 = vmatpush.msra.mxu0 %v3839
  %3966 = vmatpush.msra.mxu0 %v3835
  %3967 = vmatpush.msra.mxu0 %v3831
  %3968 = vmatmul.f32.gmra.mxu0 %v3543
  %v3969 = vpop.f32.mrf.mxu0
  %v3970 = vadd.f32 0.0, %v3969
  %3971 = vdwg.mxu0
  %v3976 = vrot.slane %v3930, 6
  %v3977 = vrot.slane %v3950, 4
  %v3978 = vrot.slane %v3970, 2
  %v3979 = vsel %vm178, %v3910, %v3976
  %v3980 = vsel %vm180, %v3977, %v3978
  %v3981 = vsel %vm182, %v3979, %v3980
  %v3983 = vadd.f32 %v3827, %v3981
  %v3984 = vxor.u32 %v3983, 2147483648
  %v3985 = vmul.f32 %v3984, 1.442695
  %v3986 = vpow.pop %v3985
  %v3987 = vadd.f32 %v3986, 1.0
  %v3988 = vrcp.pop %v3987
  %v3989 = vmul.f32 %v3987, %v3988
  %v3990 = vsub.f32 1.0, %v3989
  %v3991 = vmul.f32 %v3988, %v3990
  %v3992 = vadd.f32 %v3988, %v3991
  %vm3993 = vweird.f32 %v3987
  %vm3994 = vweird.f32 %v3988
  %vm3995 = vmor %vm3993, %vm3994
  %v3996 = vsel %vm3995, %v3988, %v3992
  %v3997 = vand.u32 2147483647, %v3987
  %vm3998 = vcmp.eq.f32.partialorder %v3997, 8.507059e+37
  %v3999 = vand.u32 %v3987, 2147483648
  %v4000 = vor.u32 1.1754944e-38, %v3999
  %v4001 = vsel %vm3998, %v4000, %v3996
  %v4002 = vmul.f32 1.0, %v4001
  %v4004 = vrot.slane %v3983, 2
  %v4006 = vxor.u32 %v4004, 2147483648
  %v4007 = vmul.f32 %v4006, 1.442695
  %v4008 = vpow.pop %v4007
  %v4009 = vadd.f32 %v4008, 1.0
  %v4010 = vrcp.pop %v4009
  %v4011 = vmul.f32 %v4009, %v4010
  %v4012 = vsub.f32 1.0, %v4011
  %v4013 = vmul.f32 %v4010, %v4012
  %v4014 = vadd.f32 %v4010, %v4013
  %vm4015 = vweird.f32 %v4009
  %vm4016 = vweird.f32 %v4010
  %vm4017 = vmor %vm4015, %vm4016
  %v4018 = vsel %vm4017, %v4010, %v4014
  %v4019 = vand.u32 2147483647, %v4009
  %vm4020 = vcmp.eq.f32.partialorder %v4019, 8.507059e+37
  %v4021 = vand.u32 %v4009, 2147483648
  %v4022 = vor.u32 1.1754944e-38, %v4021
  %v4023 = vsel %vm4020, %v4022, %v4018
  %v4024 = vmul.f32 1.0, %v4023
  %v4025 = vrot.slane %v3983, 4
  %v4027 = vtanh.pop %v4025
  %v4028 = vrot.slane %v3983, 6
  %v4030 = vxor.u32 %v4028, 2147483648
  %v4031 = vmul.f32 %v4030, 1.442695
  %v4032 = vpow.pop %v4031
  %v4033 = vadd.f32 %v4032, 1.0
  %v4034 = vrcp.pop %v4033
  %v4035 = vmul.f32 %v4033, %v4034
  %v4036 = vsub.f32 1.0, %v4035
  %v4037 = vmul.f32 %v4034, %v4036
  %v4038 = vadd.f32 %v4034, %v4037
  %vm4039 = vweird.f32 %v4033
  %vm4040 = vweird.f32 %v4034
  %vm4041 = vmor %vm4039, %vm4040
  %v4042 = vsel %vm4041, %v4034, %v4038
  %v4043 = vand.u32 2147483647, %v4033
  %vm4044 = vcmp.eq.f32.partialorder %v4043, 8.507059e+37
  %v4045 = vand.u32 %v4033, 2147483648
  %v4046 = vor.u32 1.1754944e-38, %v4045
  %v4047 = vsel %vm4044, %v4046, %v4042
  %v4048 = vmul.f32 1.0, %v4047
  %v4049 = vmul.f32 %v4024, %v3541
  %v4050 = vmul.f32 %v4002, %v4027
  %v4051 = vadd.f32 %v4049, %v4050
  %v4052 = vtanh.pop %v4051
  %v4053 = vmul.f32 %v4048, %v4052
  %4054 = vrot.lane.b32.xlu0 %v3825, 127
  %v4055 = vpop.permute.xlu0 %4054
  %4056 = vrot.lane.b32.xlu0 %v3825, 1
  %v4057 = vpop.permute.xlu0 %4056
  %v4058 = vsel %vm25, %v4055, %v4057
  %v4059 = vsub.f32 %v3825, %v4058
  %v4060 = vxor.u32 %v4059, 2147483648
  %v4061 = vmul.f32 %v4060, 1.442695
  %v4062 = vpow.pop %v4061
  %v4063 = vadd.f32 %v4062, 1.0
  %v4064 = vrcp.pop %v4063
  %v4065 = vmul.f32 %v4063, %v4064
  %v4066 = vsub.f32 1.0, %v4065
  %v4067 = vmul.f32 %v4064, %v4066
  %v4068 = vadd.f32 %v4064, %v4067
  %vm4069 = vweird.f32 %v4063
  %vm4070 = vweird.f32 %v4064
  %vm4071 = vmor %vm4069, %vm4070
  %v4072 = vsel %vm4071, %v4064, %v4068
  %v4073 = vand.u32 2147483647, %v4063
  %vm4074 = vcmp.eq.f32.partialorder %v4073, 8.507059e+37
  %v4075 = vand.u32 %v4063, 2147483648
  %v4076 = vor.u32 1.1754944e-38, %v4075
  %v4077 = vsel %vm4074, %v4076, %v4072
  %v4078 = vmul.f32 1.0, %v4077
  %s4079 = scalar_lea.vmem %s2, 14
  %4080 = vst [vmem:[%s4079] sm:$0x3] %v4078
  %4081 = vrot.lane.b32.xlu0 %v4053, 127
  %v4082 = vpop.permute.xlu0 %4081
  %4083 = vrot.lane.b32.xlu0 %v4053, 1
  %v4084 = vpop.permute.xlu0 %4083
  %v4085 = vsel %vm25, %v4082, %v4084
  %v4086 = vsub.f32 %v4053, %v4085
  %v4087 = vxor.u32 %v4086, 2147483648
  %v4088 = vmul.f32 %v4087, 1.442695
  %v4089 = vpow.pop %v4088
  %v4090 = vadd.f32 %v4089, 1.0
  %v4091 = vrcp.pop %v4090
  %v4092 = vmul.f32 %v4090, %v4091
  %v4093 = vsub.f32 1.0, %v4092
  %v4094 = vmul.f32 %v4091, %v4093
  %v4095 = vadd.f32 %v4091, %v4094
  %vm4096 = vweird.f32 %v4090
  %vm4097 = vweird.f32 %v4091
  %vm4098 = vmor %vm4096, %vm4097
  %v4099 = vsel %vm4098, %v4091, %v4095
  %v4100 = vand.u32 2147483647, %v4090
  %vm4101 = vcmp.eq.f32.partialorder %v4100, 8.507059e+37
  %v4102 = vand.u32 %v4090, 2147483648
  %v4103 = vor.u32 1.1754944e-38, %v4102
  %v4104 = vsel %vm4101, %v4103, %v4099
  %v4105 = vmul.f32 1.0, %v4104
  %s4106 = scalar_lea.vmem %s2, 16
  %4107 = vst [vmem:[%s4106] sm:$0x3] %v4105
  // Predicated region
  $region10: #{mask_rnn_forward.1} parent=0 // pred_check
    _
  $region11: #{mask_rnn_forward.1} parent=0 // pred_check_branch
    %4109 = sbr.rel (0) target = $region13
  $region12: #{mask_rnn_forward.1} parent=0 // pred_region
    _
  $region13: #{mask_rnn_forward.1} parent=0 // pred_fallthru
    _
  // Predicated region
  $region14: #{mask_rnn_forward.1} parent=0 // pred_check
    _
  $region15: #{mask_rnn_forward.1} parent=0 // pred_check_branch
    %4111 = sbr.rel (0) target = $region17
  $region16: #{mask_rnn_forward.1} parent=0 // pred_region
    _
  $region17: #{mask_rnn_forward.1} parent=0 // pred_fallthru
    _

</llo_original>
